<compile_context>
chip_gen: v5e
topology: v5e:2x2
jax: 0.10.0
libtpu: 0.0.40
codegen_flags: <defaults>
</compile_context>

<pallas_src>
import math

import jax
import jax.numpy as jnp
from jax import lax
from jax.experimental import pallas as pl
from jax.experimental.pallas import tpu as pltpu

DT = 0.01  # kinetics integration step


# ----------------------------------------------------------------------------
# Fused Pallas kernel
# ----------------------------------------------------------------------------
def make_fused_kernel(*, row_w, n_stack1, n_stack2, dt, batch, hw, lg):
    """Build the fused forward kernel.

    Flat layout: activations are (channels, L0) with lane index
    q = b*H*W + r*row_w + c (constant across layers).  A 3x3 valid conv output
    at (b, r, c) reads taps at q + dy*row_w + dx.
    """
    n_conv = n_stack1 + n_stack2

    def kernel(*refs):
        x_ref, hs_ref = refs[0], refs[1]
        conv_refs = refs[2:2 + 2 * n_conv]            # (weight, bias) pairs
        kp_ref = refs[2 + 2 * n_conv]                 # (7, C0, 1) kinetics params
        wg_ref = refs[3 + 2 * n_conv]                 # (C1, lg, n_units)
        out_ref = refs[4 + 2 * n_conv]                # (B, n_units)
        hs_out_ref = refs[5 + 2 * n_conv]             # (4, C0, L0)
        act_ref = refs[6 + 2 * n_conv]                # VMEM scratch (c_max, L0+margin)

        l0 = x_ref.shape[1]                           # B*H*W

        # Stage the (channel-padded) input in the VMEM activation scratch.
        # The margin tail [l0:] stays zero for the whole kernel.
        act_ref[...] = jnp.zeros_like(act_ref)
        act_ref[0:x_ref.shape[0], 0:l0] = x_ref[...]

        def conv3x3(layer):
            """One 3x3 valid conv: a single (Cout,9*Cin)@(9*Cin,L0) MXU matmul."""
            w_ref, b_ref = conv_refs[2 * layer], conv_refs[2 * layer + 1]
            cin = w_ref.shape[1] // 9
            taps = [
                act_ref[0:cin, dy * row_w + dx: dy * row_w + dx + l0]
                for dy in range(3) for dx in range(3)
            ]
            rhs = jnp.concatenate(taps, axis=0)       # (9*cin, L0), sublane-aligned
            return jnp.dot(w_ref[...], rhs,
                           preferred_element_type=jnp.float32) + b_ref[...]

        # ---- bipolar: LinearStackedConv2d (stack of 3x3 valid convs) --------
        a = None
        for j in range(n_stack1):
            a = conv3x3(j)
            if j < n_stack1 - 1:
                act_ref[0:a.shape[0], 0:l0] = a

        # ---- Sigmoid + 4-state kinetics + per-channel scale/shift + ReLU ----
        u = 1.0 / (1.0 + jnp.exp(-a))                 # bipolar Sigmoid (fused)
        R, A, I1, I2 = hs_ref[0], hs_ref[1], hs_ref[2], hs_ref[3]
        ka = kp_ref[0]
        kfi = kp_ref[1]
        kfr = kp_ref[2]
        ksi = kp_ref[3]
        ksr = kp_ref[4]
        kw = kp_ref[5]
        kb = kp_ref[6]
        ka_u = ka * u
        R_n = R + dt * (kfr * I1 - ka_u * R)
        A_n = A + dt * (ka_u * R - kfi * A)
        I1_n = I1 + dt * (kfi * A + ksr * I2 - (kfr + ksi) * I1)
        I2_n = I2 + dt * (ksi * I1 - ksr * I2)
        hs_out_ref[0] = R_n
        hs_out_ref[1] = A_n
        hs_out_ref[2] = I1_n
        hs_out_ref[3] = I2_n
        spk = jnp.maximum(kw * A_n + kb, 0.0)         # scale/shift + spiking ReLU
        act_ref[0:spk.shape[0], 0:l0] = spk

        # ---- amacrine: stacked 3x3 valid convs + (Flatten) + ReLU -----------
        for j in range(n_stack1, n_conv):
            a = conv3x3(j)
            if j < n_conv - 1:
                act_ref[0:a.shape[0], 0:l0] = a
        c1 = a.shape[0]
        act_ref[0:c1, 0:l0] = jnp.maximum(a, 0.0)     # amacrine ReLU

        # ---- ganglion: Linear(no bias) + Softplus ----------------------------
        # Per input channel: gather the B batch rows into the matmul M dim,
        # accumulate dot((B, lg), (lg, n_units)).  Invalid lanes inside [0, lg)
        # hit zero weight columns; garbage lanes are finite, so they contribute 0.
        acc = jnp.zeros((batch, wg_ref.shape[2]), jnp.float32)
        for c in range(c1):
            lhs = jnp.concatenate(
                [act_ref[c:c + 1, b * hw: b * hw + lg] for b in range(batch)],
                axis=0)                               # (B, lg)
            acc = acc + jnp.dot(lhs, wg_ref[c],
                                preferred_element_type=jnp.float32)
        # Softplus (numerically stable form).
        out_ref[...] = jnp.maximum(acc, 0.0) + jnp.log(1.0 + jnp.exp(-jnp.abs(acc)))

    return kernel


# ----------------------------------------------------------------------------
# Parameter preparation (one-time, outside the per-call path)
# ----------------------------------------------------------------------------
def prepare_kernel_params(params, batch, height, width):
    """Convert PyTorch-layout parameters into the fused-kernel layout."""

    def flat_conv(w):
        cout, cin = w.shape[0], w.shape[1]
        cin_pad = ((cin + 7) // 8) * 8      # pad Cin so im2col taps are 8-aligned
        wt = jnp.transpose(w, (0, 2, 3, 1))             # (cout, 3, 3, cin)
        wt = jnp.pad(wt, ((0, 0), (0, 0), (0, 0), (0, cin_pad - cin)))
        return wt.reshape(cout, 9 * cin_pad)

    conv_w = [flat_conv(w) for w in params["conv1_w"] + params["conv2_w"]]
    conv_b = [b.reshape(-1, 1) for b in params["conv1_b"] + params["conv2_b"]]
    n1, n2 = len(params["conv1_w"]), len(params["conv2_w"])
    n_conv = n1 + n2
    c1 = params["conv2_w"][-1].shape[0]
    n_units = params["ganglion_w"].shape[0]
    h2, w2 = height - 2 * n_conv, width - 2 * n_conv
    lg = (h2 - 1) * width + w2          # valid flat window length per batch slot

    # Ganglion weight, scattered once into the per-batch flat spatial layout
    # (zeros at invalid columns), shape (C1, lg, n_units).  No batch replication.
    gw = params["ganglion_w"].reshape(n_units, c1, h2, w2)
    gw = jnp.pad(gw, ((0, 0), (0, 0), (0, 0), (0, width - w2)))   # (u, c1, h2, W)
    gw = gw.reshape(n_units, c1, h2 * width)[:, :, :lg]
    wg = jnp.transpose(gw, (1, 2, 0))                             # (c1, lg, u)

    c_max = max([w.shape[0] for w in conv_w] + [w.shape[1] // 9 for w in conv_w])
    return dict(conv_w=conv_w, conv_b=conv_b, kinetics=params["kinetics"],
                ganglion=wg, n_stack1=n1, n_stack2=n2, c_max=c_max)


# ----------------------------------------------------------------------------
# Forward wrapper (single fused pallas_call; only tiny layout glue outside)
# ----------------------------------------------------------------------------
def kinetics_model_forward(kp, x, hs):
    """x: (B, Cin, H, W) f32, hs: (B, 4, C0, N1) f32 -> ((B, n_units), hs_new)."""
    B, Cin, H, W = x.shape
    n1, n2 = kp["n_stack1"], kp["n_stack2"]
    margin = 2 * W + 2
    l0 = B * H * W
    c0 = kp["conv_w"][n1 - 1].shape[0]
    lg = kp["ganglion"].shape[1]
    n_units = kp["ganglion"].shape[2]
    n_states = hs.shape[1]
    hv, wv = H - 2 * n1, W - 2 * n1             # valid spatial size after bipolar

    # ---- boundary layout glue (tiny XLA ops) --------------------------------
    x_flat = jnp.transpose(x, (1, 0, 2, 3)).reshape(Cin, l0)
    hs5 = hs.reshape(B, n_states, c0, hv, wv)
    hs_pad = jnp.pad(hs5, ((0, 0), (0, 0), (0, 0), (0, H - hv), (0, W - wv)))
    hs_flat = jnp.transpose(hs_pad, (1, 2, 0, 3, 4)).reshape(n_states, c0, l0)

    conv_args = []
    for w_, b_ in zip(kp["conv_w"], kp["conv_b"]):
        conv_args += [w_, b_]

    # Scratch lane width: full flat width + largest tap offset, 128-rounded.
    l_scr = ((l0 + margin + 127) // 128) * 128

    out, hs_new_flat = pl.pallas_call(
        make_fused_kernel(row_w=W, n_stack1=n1, n_stack2=n2, dt=DT,
                          batch=B, hw=H * W, lg=lg),
        out_shape=(
            jax.ShapeDtypeStruct((B, n_units), jnp.float32),
            jax.ShapeDtypeStruct((n_states, c0, l0), jnp.float32),
        ),
        scratch_shapes=[pltpu.VMEM((kp["c_max"], l_scr), jnp.float32)],
        compiler_params=pltpu.CompilerParams(vmem_limit_bytes=32 * 1024 * 1024),
    )(x_flat, hs_flat, *conv_args, kp["kinetics"], kp["ganglion"])

    hs_new = hs_new_flat.reshape(n_states, c0, B, H, W)[:, :, :, :hv, :wv]
    hs_new = jnp.transpose(hs_new, (2, 0, 1, 3, 4)).reshape(B, n_states, c0, hv * wv)
    return out, hs_new


# ----------------------------------------------------------------------------
# Plain-JAX reference of the same forward pass (validation only)
# ----------------------------------------------------------------------------
def reference_forward(params, x, hs, dt):
    hp = lax.Precision.HIGHEST

    def conv_stack(a, ws, bs):
        for w, b in zip(ws, bs):
            a = lax.conv_general_dilated(
                a, w, (1, 1), "VALID",
                dimension_numbers=("NCHW", "OIHW", "NCHW"), precision=hp)
            a = a + b.reshape(1, -1, 1, 1)
        return a

    fx = conv_stack(x, params["conv1_w"], params["conv1_b"])
    B, C0, H1, W1 = fx.shape
    fx = fx.reshape(B, C0, H1 * W1)
    u = 1.0 / (1.0 + jnp.exp(-fx))
    kp = params["kinetics"]
    ka, kfi, kfr, ksi, ksr, kw, kb = [kp[i][None] for i in range(7)]
    R, A, I1, I2 = hs[:, 0], hs[:, 1], hs[:, 2], hs[:, 3]
    ka_u = ka * u
    R_n = R + dt * (kfr * I1 - ka_u * R)
    A_n = A + dt * (ka_u * R - kfi * A)
    I1_n = I1 + dt * (kfi * A + ksr * I2 - (kfr + ksi) * I1)
    I2_n = I2 + dt * (ksi * I1 - ksr * I2)
    hs_new = jnp.stack([R_n, A_n, I1_n, I2_n], axis=1)
    fx = jnp.maximum(kw * A_n + kb, 0.0)
    fx = fx.reshape(B, C0, H1, W1)
    fx = conv_stack(fx, params["conv2_w"], params["conv2_b"])
    feat = jnp.maximum(fx.reshape(B, -1), 0.0)
    z = jnp.dot(feat, params["ganglion_w"].T, precision=hp)
    out = jnp.maximum(z, 0.0) + jnp.log(1.0 + jnp.exp(-jnp.abs(z)))
    return out, hs_new


# ----------------------------------------------------------------------------
# Deterministic parameter init (synthetic; shapes follow the module __init__)
# ----------------------------------------------------------------------------
def init_params(key, in_chan, chans, n_units, h2, w2):
    keys = jax.random.split(key, 12)
    c0, c1 = chans

    def conv_w(k, cout, cin):
        return (1.0 / math.sqrt(cin * 9)) * jax.random.normal(
            k, (cout, cin, 3, 3), jnp.float32)

    # LinearStackedConv2d(ksize=7) -> 3 stacked 3x3 convs (bias only on last)
    conv1_w = [conv_w(keys[0], c0, in_chan), conv_w(keys[1], c0, c0),
               conv_w(keys[2], c0, c0)]
    conv1_b = [jnp.zeros((c0,), jnp.float32), jnp.zeros((c0,), jnp.float32),
               0.1 * jax.random.normal(keys[3], (c0,), jnp.float32)]
    # LinearStackedConv2d(ksize=5) -> 2 stacked 3x3 convs
    conv2_w = [conv_w(keys[4], c1, c0), conv_w(keys[5], c1, c1)]
    conv2_b = [jnp.zeros((c1,), jnp.float32),
               0.1 * jax.random.normal(keys[6], (c1,), jnp.float32)]

    # Kinetics rate constants, per-channel (k_chan=True -> shape (C0, 1))
    base = jnp.array([20.0, 16.0, 10.0, 4.0, 2.0], jnp.float32).reshape(5, 1, 1)
    jitter = jax.random.uniform(keys[7], (5, c0, 1), jnp.float32, 0.8, 1.2)
    krates = base * jitter                                     # ka, kfi, kfr, ksi, ksr
    kw = jax.random.uniform(keys[8], (1, c0, 1), jnp.float32)  # kinetics_w ~ torch.rand
    kb = jax.random.uniform(keys[9], (1, c0, 1), jnp.float32)  # kinetics_b ~ torch.rand
    kparams = jnp.concatenate([krates, kw, kb], axis=0)        # (7, C0, 1)

    gw = (1.0 / math.sqrt(c1 * h2 * w2)) * jax.random.normal(
        keys[10], (n_units, c1 * h2 * w2), jnp.float32)
    return dict(conv1_w=conv1_w, conv1_b=conv1_b,
                conv2_w=conv2_w, conv2_b=conv2_b,
                kinetics=kparams, ganglion_w=gw)


# ----------------------------------------------------------------------------
if __name__ == "__main__":
    # Small shapes consistent with the module:
    #   img_shape=(4, 20, 20), chans=[8, 8], ksizes=(7, 5), n_units=5, batch=2
    B, Cin, H, W = 2, 4, 20, 20
    chans = (8, 8)
    n_units = 5
    ks1, ks2 = 7, 5
    H1, W1 = H - (ks1 - 1), W - (ks1 - 1)      # 14 x 14
    H2, W2 = H1 - (ks2 - 1), W1 - (ks2 - 1)    # 10 x 10
    N1 = H1 * W1

    key = jax.random.PRNGKey(0)
    kx, kparam = jax.random.split(key)
    x = jax.random.normal(kx, (B, Cin, H, W), jnp.float32)
    # hs: (B, S=4, C, N); start with the full population in the resting state.
    hs = jnp.zeros((B, 4, chans[0], N1), jnp.float32).at[:, 0].set(1.0)

    params = init_params(kparam, Cin, chans, n_units, H2, W2)
    kernel_params = prepare_kernel_params(params, B, H, W)

    fwd = jax.jit(lambda x_, hs_: kinetics_model_forward(kernel_params, x_, hs_))
    out, hs_new = fwd(x, hs)
    jax.block_until_ready((out, hs_new))

    assert out.shape == (B, n_units)
    assert hs_new.shape == (B, 4, chans[0], N1)
    assert bool(jnp.all(jnp.isfinite(out))) and bool(jnp.all(jnp.isfinite(hs_new)))

    # Cross-check the fused kernel against a plain-JAX reference.
    ref_out, ref_hs = jax.jit(
        lambda x_, hs_: reference_forward(params, x_, hs_, DT))(x, hs)
    jax.block_until_ready((ref_out, ref_hs))
    err_o = float(jnp.max(jnp.abs(out - ref_out)))
    err_h = float(jnp.max(jnp.abs(hs_new - ref_hs)))
    assert err_o < 1e-3 and err_h < 1e-3, (err_o, err_h)

    print("KERNEL_OK")
</pallas_src>

<mosaic_0001>
module attributes {stable_mosaic.version = 11 : i64} {
  func.func @kernel(%arg0: memref<4x800xf32, #tpu.memory_space<vmem>>, %arg1: memref<4x8x800xf32, #tpu.memory_space<vmem>>, %arg2: memref<8x72xf32, #tpu.memory_space<vmem>>, %arg3: memref<8x1xf32, #tpu.memory_space<vmem>>, %arg4: memref<8x72xf32, #tpu.memory_space<vmem>>, %arg5: memref<8x1xf32, #tpu.memory_space<vmem>>, %arg6: memref<8x72xf32, #tpu.memory_space<vmem>>, %arg7: memref<8x1xf32, #tpu.memory_space<vmem>>, %arg8: memref<8x72xf32, #tpu.memory_space<vmem>>, %arg9: memref<8x1xf32, #tpu.memory_space<vmem>>, %arg10: memref<8x72xf32, #tpu.memory_space<vmem>>, %arg11: memref<8x1xf32, #tpu.memory_space<vmem>>, %arg12: memref<7x8x1xf32, #tpu.memory_space<vmem>>, %arg13: memref<8x190x5xf32, #tpu.memory_space<vmem>>, %arg14: memref<2x5xf32, #tpu.memory_space<vmem>>, %arg15: memref<4x8x800xf32, #tpu.memory_space<vmem>>, %arg16: memref<8x896xf32, #tpu.memory_space<vmem>>) attributes {dimension_semantics = [], scalar_prefetch = 0 : i64, scratch_operands = 1 : i64, tpu.core_type = #tpu.core_type<tc>} {
    %cst = arith.constant 0.000000e+00 : f32
    %0 = vector.broadcast %cst : f32 to vector<8x896xf32>
    %c0 = arith.constant 0 : index
    %c0_0 = arith.constant 0 : index
    %1 = vector.load %arg16[%c0, %c0_0] : memref<8x896xf32, #tpu.memory_space<vmem>>, vector<8x896xf32>
    tpu.vector_store %arg16[%c0, %c0_0], %0 {strides = array<i32>} : memref<8x896xf32, #tpu.memory_space<vmem>>, vector<8x896xf32>,
    %c0_1 = arith.constant 0 : index
    %c0_2 = arith.constant 0 : index
    %2 = vector.load %arg0[%c0_1, %c0_2] : memref<4x800xf32, #tpu.memory_space<vmem>>, vector<4x800xf32>
    %c0_3 = arith.constant 0 : index
    %c0_4 = arith.constant 0 : index
    %3 = vector.load %arg16[%c0_3, %c0_4] : memref<8x896xf32, #tpu.memory_space<vmem>>, vector<4x800xf32>
    tpu.vector_store %arg16[%c0_3, %c0_4], %2 {strides = array<i32>} : memref<8x896xf32, #tpu.memory_space<vmem>>, vector<4x800xf32>,
    %c0_5 = arith.constant 0 : index
    %c0_6 = arith.constant 0 : index
    %4 = vector.load %arg16[%c0_5, %c0_6] : memref<8x896xf32, #tpu.memory_space<vmem>>, vector<8x800xf32>
    %c0_7 = arith.constant 0 : index
    %c1 = arith.constant 1 : index
    %5 = vector.load %arg16[%c0_7, %c1] : memref<8x896xf32, #tpu.memory_space<vmem>>, vector<8x800xf32>
    %c0_8 = arith.constant 0 : index
    %c2 = arith.constant 2 : index
    %6 = vector.load %arg16[%c0_8, %c2] : memref<8x896xf32, #tpu.memory_space<vmem>>, vector<8x800xf32>
    %c0_9 = arith.constant 0 : index
    %c20 = arith.constant 20 : index
    %7 = vector.load %arg16[%c0_9, %c20] : memref<8x896xf32, #tpu.memory_space<vmem>>, vector<8x800xf32>
    %c0_10 = arith.constant 0 : index
    %c21 = arith.constant 21 : index
    %8 = vector.load %arg16[%c0_10, %c21] : memref<8x896xf32, #tpu.memory_space<vmem>>, vector<8x800xf32>
    %c0_11 = arith.constant 0 : index
    %c22 = arith.constant 22 : index
    %9 = vector.load %arg16[%c0_11, %c22] : memref<8x896xf32, #tpu.memory_space<vmem>>, vector<8x800xf32>
    %c0_12 = arith.constant 0 : index
    %c40 = arith.constant 40 : index
    %10 = vector.load %arg16[%c0_12, %c40] : memref<8x896xf32, #tpu.memory_space<vmem>>, vector<8x800xf32>
    %c0_13 = arith.constant 0 : index
    %c41 = arith.constant 41 : index
    %11 = vector.load %arg16[%c0_13, %c41] : memref<8x896xf32, #tpu.memory_space<vmem>>, vector<8x800xf32>
    %c0_14 = arith.constant 0 : index
    %c42 = arith.constant 42 : index
    %12 = vector.load %arg16[%c0_14, %c42] : memref<8x896xf32, #tpu.memory_space<vmem>>, vector<8x800xf32>
    %13 = tpu.concatenate %4, %5, %6, %7, %8, %9, %10, %11, %12 in 0 : vector<8x800xf32>, vector<8x800xf32>, vector<8x800xf32>, vector<8x800xf32>, vector<8x800xf32>, vector<8x800xf32>, vector<8x800xf32>, vector<8x800xf32>, vector<8x800xf32> -> vector<72x800xf32>
    %c0_15 = arith.constant 0 : index
    %c0_16 = arith.constant 0 : index
    %14 = vector.load %arg2[%c0_15, %c0_16] : memref<8x72xf32, #tpu.memory_space<vmem>>, vector<8x72xf32>
    %cst_17 = arith.constant dense<0.000000e+00> : vector<8x800xf32>
    %15 = tpu.matmul %14, %13, %cst_17 {dimension_numbers = #tpu.dot_dimension_numbers<[1], [0], [0], [1], [0, 0, 1, 1], [], []>} : vector<8x72xf32>, vector<72x800xf32>, vector<8x800xf32> -> vector<8x800xf32>
    %c0_18 = arith.constant 0 : index
    %c0_19 = arith.constant 0 : index
    %16 = vector.load %arg3[%c0_18, %c0_19] : memref<8x1xf32, #tpu.memory_space<vmem>>, vector<8x1xf32>
    %17 = vector.broadcast %16 : vector<8x1xf32> to vector<8x800xf32>
    %18 = arith.addf %15, %17 : vector<8x800xf32>
    %c0_20 = arith.constant 0 : index
    %c0_21 = arith.constant 0 : index
    %19 = vector.load %arg16[%c0_20, %c0_21] : memref<8x896xf32, #tpu.memory_space<vmem>>, vector<8x800xf32>
    tpu.vector_store %arg16[%c0_20, %c0_21], %18 {strides = array<i32>} : memref<8x896xf32, #tpu.memory_space<vmem>>, vector<8x800xf32>,
    %c0_22 = arith.constant 0 : index
    %c0_23 = arith.constant 0 : index
    %20 = vector.load %arg16[%c0_22, %c0_23] : memref<8x896xf32, #tpu.memory_space<vmem>>, vector<8x800xf32>
    %c0_24 = arith.constant 0 : index
    %c1_25 = arith.constant 1 : index
    %21 = vector.load %arg16[%c0_24, %c1_25] : memref<8x896xf32, #tpu.memory_space<vmem>>, vector<8x800xf32>
    %c0_26 = arith.constant 0 : index
    %c2_27 = arith.constant 2 : index
    %22 = vector.load %arg16[%c0_26, %c2_27] : memref<8x896xf32, #tpu.memory_space<vmem>>, vector<8x800xf32>
    %c0_28 = arith.constant 0 : index
    %c20_29 = arith.constant 20 : index
    %23 = vector.load %arg16[%c0_28, %c20_29] : memref<8x896xf32, #tpu.memory_space<vmem>>, vector<8x800xf32>
    %c0_30 = arith.constant 0 : index
    %c21_31 = arith.constant 21 : index
    %24 = vector.load %arg16[%c0_30, %c21_31] : memref<8x896xf32, #tpu.memory_space<vmem>>, vector<8x800xf32>
    %c0_32 = arith.constant 0 : index
    %c22_33 = arith.constant 22 : index
    %25 = vector.load %arg16[%c0_32, %c22_33] : memref<8x896xf32, #tpu.memory_space<vmem>>, vector<8x800xf32>
    %c0_34 = arith.constant 0 : index
    %c40_35 = arith.constant 40 : index
    %26 = vector.load %arg16[%c0_34, %c40_35] : memref<8x896xf32, #tpu.memory_space<vmem>>, vector<8x800xf32>
    %c0_36 = arith.constant 0 : index
    %c41_37 = arith.constant 41 : index
    %27 = vector.load %arg16[%c0_36, %c41_37] : memref<8x896xf32, #tpu.memory_space<vmem>>, vector<8x800xf32>
    %c0_38 = arith.constant 0 : index
    %c42_39 = arith.constant 42 : index
    %28 = vector.load %arg16[%c0_38, %c42_39] : memref<8x896xf32, #tpu.memory_space<vmem>>, vector<8x800xf32>
    %29 = tpu.concatenate %20, %21, %22, %23, %24, %25, %26, %27, %28 in 0 : vector<8x800xf32>, vector<8x800xf32>, vector<8x800xf32>, vector<8x800xf32>, vector<8x800xf32>, vector<8x800xf32>, vector<8x800xf32>, vector<8x800xf32>, vector<8x800xf32> -> vector<72x800xf32>
    %c0_40 = arith.constant 0 : index
    %c0_41 = arith.constant 0 : index
    %30 = vector.load %arg4[%c0_40, %c0_41] : memref<8x72xf32, #tpu.memory_space<vmem>>, vector<8x72xf32>
    %cst_42 = arith.constant dense<0.000000e+00> : vector<8x800xf32>
    %31 = tpu.matmul %30, %29, %cst_42 {dimension_numbers = #tpu.dot_dimension_numbers<[1], [0], [0], [1], [0, 0, 1, 1], [], []>} : vector<8x72xf32>, vector<72x800xf32>, vector<8x800xf32> -> vector<8x800xf32>
    %c0_43 = arith.constant 0 : index
    %c0_44 = arith.constant 0 : index
    %32 = vector.load %arg5[%c0_43, %c0_44] : memref<8x1xf32, #tpu.memory_space<vmem>>, vector<8x1xf32>
    %33 = vector.broadcast %32 : vector<8x1xf32> to vector<8x800xf32>
    %34 = arith.addf %31, %33 : vector<8x800xf32>
    %c0_45 = arith.constant 0 : index
    %c0_46 = arith.constant 0 : index
    %35 = vector.load %arg16[%c0_45, %c0_46] : memref<8x896xf32, #tpu.memory_space<vmem>>, vector<8x800xf32>
    tpu.vector_store %arg16[%c0_45, %c0_46], %34 {strides = array<i32>} : memref<8x896xf32, #tpu.memory_space<vmem>>, vector<8x800xf32>,
    %c0_47 = arith.constant 0 : index
    %c0_48 = arith.constant 0 : index
    %36 = vector.load %arg16[%c0_47, %c0_48] : memref<8x896xf32, #tpu.memory_space<vmem>>, vector<8x800xf32>
    %c0_49 = arith.constant 0 : index
    %c1_50 = arith.constant 1 : index
    %37 = vector.load %arg16[%c0_49, %c1_50] : memref<8x896xf32, #tpu.memory_space<vmem>>, vector<8x800xf32>
    %c0_51 = arith.constant 0 : index
    %c2_52 = arith.constant 2 : index
    %38 = vector.load %arg16[%c0_51, %c2_52] : memref<8x896xf32, #tpu.memory_space<vmem>>, vector<8x800xf32>
    %c0_53 = arith.constant 0 : index
    %c20_54 = arith.constant 20 : index
    %39 = vector.load %arg16[%c0_53, %c20_54] : memref<8x896xf32, #tpu.memory_space<vmem>>, vector<8x800xf32>
    %c0_55 = arith.constant 0 : index
    %c21_56 = arith.constant 21 : index
    %40 = vector.load %arg16[%c0_55, %c21_56] : memref<8x896xf32, #tpu.memory_space<vmem>>, vector<8x800xf32>
    %c0_57 = arith.constant 0 : index
    %c22_58 = arith.constant 22 : index
    %41 = vector.load %arg16[%c0_57, %c22_58] : memref<8x896xf32, #tpu.memory_space<vmem>>, vector<8x800xf32>
    %c0_59 = arith.constant 0 : index
    %c40_60 = arith.constant 40 : index
    %42 = vector.load %arg16[%c0_59, %c40_60] : memref<8x896xf32, #tpu.memory_space<vmem>>, vector<8x800xf32>
    %c0_61 = arith.constant 0 : index
    %c41_62 = arith.constant 41 : index
    %43 = vector.load %arg16[%c0_61, %c41_62] : memref<8x896xf32, #tpu.memory_space<vmem>>, vector<8x800xf32>
    %c0_63 = arith.constant 0 : index
    %c42_64 = arith.constant 42 : index
    %44 = vector.load %arg16[%c0_63, %c42_64] : memref<8x896xf32, #tpu.memory_space<vmem>>, vector<8x800xf32>
    %45 = tpu.concatenate %36, %37, %38, %39, %40, %41, %42, %43, %44 in 0 : vector<8x800xf32>, vector<8x800xf32>, vector<8x800xf32>, vector<8x800xf32>, vector<8x800xf32>, vector<8x800xf32>, vector<8x800xf32>, vector<8x800xf32>, vector<8x800xf32> -> vector<72x800xf32>
    %c0_65 = arith.constant 0 : index
    %c0_66 = arith.constant 0 : index
    %46 = vector.load %arg6[%c0_65, %c0_66] : memref<8x72xf32, #tpu.memory_space<vmem>>, vector<8x72xf32>
    %cst_67 = arith.constant dense<0.000000e+00> : vector<8x800xf32>
    %47 = tpu.matmul %46, %45, %cst_67 {dimension_numbers = #tpu.dot_dimension_numbers<[1], [0], [0], [1], [0, 0, 1, 1], [], []>} : vector<8x72xf32>, vector<72x800xf32>, vector<8x800xf32> -> vector<8x800xf32>
    %c0_68 = arith.constant 0 : index
    %c0_69 = arith.constant 0 : index
    %48 = vector.load %arg7[%c0_68, %c0_69] : memref<8x1xf32, #tpu.memory_space<vmem>>, vector<8x1xf32>
    %49 = vector.broadcast %48 : vector<8x1xf32> to vector<8x800xf32>
    %50 = arith.addf %47, %49 : vector<8x800xf32>
    %cst_70 = arith.constant 0.000000e+00 : f32
    %51 = vector.broadcast %cst_70 : f32 to vector<8x800xf32>
    %52 = arith.subf %51, %50 : vector<8x800xf32>
    %53 = math.exp %52 : vector<8x800xf32>
    %cst_71 = arith.constant 1.000000e+00 : f32
    %54 = vector.broadcast %cst_71 : f32 to vector<8x800xf32>
    %55 = arith.addf %54, %53 : vector<8x800xf32>
    %cst_72 = arith.constant 1.000000e+00 : f32
    %56 = vector.broadcast %cst_72 : f32 to vector<8x800xf32>
    %57 = arith.divf %56, %55 : vector<8x800xf32>
    %c0_73 = arith.constant 0 : index
    %c0_74 = arith.constant 0 : index
    %c0_75 = arith.constant 0 : index
    %58 = vector.load %arg1[%c0_73, %c0_74, %c0_75] : memref<4x8x800xf32, #tpu.memory_space<vmem>>, vector<1x8x800xf32>
    %59 = vector.shape_cast %58 : vector<1x8x800xf32> to vector<8x800xf32>
    %c1_76 = arith.constant 1 : index
    %c0_77 = arith.constant 0 : index
    %c0_78 = arith.constant 0 : index
    %60 = vector.load %arg1[%c1_76, %c0_77, %c0_78] : memref<4x8x800xf32, #tpu.memory_space<vmem>>, vector<1x8x800xf32>
    %61 = vector.shape_cast %60 : vector<1x8x800xf32> to vector<8x800xf32>
    %c2_79 = arith.constant 2 : index
    %c0_80 = arith.constant 0 : index
    %c0_81 = arith.constant 0 : index
    %62 = vector.load %arg1[%c2_79, %c0_80, %c0_81] : memref<4x8x800xf32, #tpu.memory_space<vmem>>, vector<1x8x800xf32>
    %63 = vector.shape_cast %62 : vector<1x8x800xf32> to vector<8x800xf32>
    %c3 = arith.constant 3 : index
    %c0_82 = arith.constant 0 : index
    %c0_83 = arith.constant 0 : index
    %64 = vector.load %arg1[%c3, %c0_82, %c0_83] : memref<4x8x800xf32, #tpu.memory_space<vmem>>, vector<1x8x800xf32>
    %65 = vector.shape_cast %64 : vector<1x8x800xf32> to vector<8x800xf32>
    %c0_84 = arith.constant 0 : index
    %c0_85 = arith.constant 0 : index
    %c0_86 = arith.constant 0 : index
    %66 = vector.load %arg12[%c0_84, %c0_85, %c0_86] : memref<7x8x1xf32, #tpu.memory_space<vmem>>, vector<1x8x1xf32>
    %67 = vector.shape_cast %66 : vector<1x8x1xf32> to vector<8x1xf32>
    %c1_87 = arith.constant 1 : index
    %c0_88 = arith.constant 0 : index
    %c0_89 = arith.constant 0 : index
    %68 = vector.load %arg12[%c1_87, %c0_88, %c0_89] : memref<7x8x1xf32, #tpu.memory_space<vmem>>, vector<1x8x1xf32>
    %69 = vector.shape_cast %68 : vector<1x8x1xf32> to vector<8x1xf32>
    %c2_90 = arith.constant 2 : index
    %c0_91 = arith.constant 0 : index
    %c0_92 = arith.constant 0 : index
    %70 = vector.load %arg12[%c2_90, %c0_91, %c0_92] : memref<7x8x1xf32, #tpu.memory_space<vmem>>, vector<1x8x1xf32>
    %71 = vector.shape_cast %70 : vector<1x8x1xf32> to vector<8x1xf32>
    %c3_93 = arith.constant 3 : index
    %c0_94 = arith.constant 0 : index
    %c0_95 = arith.constant 0 : index
    %72 = vector.load %arg12[%c3_93, %c0_94, %c0_95] : memref<7x8x1xf32, #tpu.memory_space<vmem>>, vector<1x8x1xf32>
    %73 = vector.shape_cast %72 : vector<1x8x1xf32> to vector<8x1xf32>
    %c4 = arith.constant 4 : index
    %c0_96 = arith.constant 0 : index
    %c0_97 = arith.constant 0 : index
    %74 = vector.load %arg12[%c4, %c0_96, %c0_97] : memref<7x8x1xf32, #tpu.memory_space<vmem>>, vector<1x8x1xf32>
    %75 = vector.shape_cast %74 : vector<1x8x1xf32> to vector<8x1xf32>
    %c5 = arith.constant 5 : index
    %c0_98 = arith.constant 0 : index
    %c0_99 = arith.constant 0 : index
    %76 = vector.load %arg12[%c5, %c0_98, %c0_99] : memref<7x8x1xf32, #tpu.memory_space<vmem>>, vector<1x8x1xf32>
    %77 = vector.shape_cast %76 : vector<1x8x1xf32> to vector<8x1xf32>
    %c6 = arith.constant 6 : index
    %c0_100 = arith.constant 0 : index
    %c0_101 = arith.constant 0 : index
    %78 = vector.load %arg12[%c6, %c0_100, %c0_101] : memref<7x8x1xf32, #tpu.memory_space<vmem>>, vector<1x8x1xf32>
    %79 = vector.shape_cast %78 : vector<1x8x1xf32> to vector<8x1xf32>
    %80 = vector.broadcast %67 : vector<8x1xf32> to vector<8x800xf32>
    %81 = arith.mulf %80, %57 : vector<8x800xf32>
    %82 = vector.broadcast %71 : vector<8x1xf32> to vector<8x800xf32>
    %83 = arith.mulf %82, %63 : vector<8x800xf32>
    %84 = arith.mulf %81, %59 : vector<8x800xf32>
    %85 = arith.subf %83, %84 : vector<8x800xf32>
    %cst_102 = arith.constant 0.00999999977 : f32
    %86 = vector.broadcast %cst_102 : f32 to vector<8x800xf32>
    %87 = arith.mulf %86, %85 : vector<8x800xf32>
    %88 = arith.addf %59, %87 : vector<8x800xf32>
    %89 = arith.mulf %81, %59 : vector<8x800xf32>
    %90 = vector.broadcast %69 : vector<8x1xf32> to vector<8x800xf32>
    %91 = arith.mulf %90, %61 : vector<8x800xf32>
    %92 = arith.subf %89, %91 : vector<8x800xf32>
    %cst_103 = arith.constant 0.00999999977 : f32
    %93 = vector.broadcast %cst_103 : f32 to vector<8x800xf32>
    %94 = arith.mulf %93, %92 : vector<8x800xf32>
    %95 = arith.addf %61, %94 : vector<8x800xf32>
    %96 = vector.broadcast %69 : vector<8x1xf32> to vector<8x800xf32>
    %97 = arith.mulf %96, %61 : vector<8x800xf32>
    %98 = vector.broadcast %75 : vector<8x1xf32> to vector<8x800xf32>
    %99 = arith.mulf %98, %65 : vector<8x800xf32>
    %100 = arith.addf %97, %99 : vector<8x800xf32>
    %101 = arith.addf %71, %73 : vector<8x1xf32>
    %102 = vector.broadcast %101 : vector<8x1xf32> to vector<8x800xf32>
    %103 = arith.mulf %102, %63 : vector<8x800xf32>
    %104 = arith.subf %100, %103 : vector<8x800xf32>
    %cst_104 = arith.constant 0.00999999977 : f32
    %105 = vector.broadcast %cst_104 : f32 to vector<8x800xf32>
    %106 = arith.mulf %105, %104 : vector<8x800xf32>
    %107 = arith.addf %63, %106 : vector<8x800xf32>
    %108 = vector.broadcast %73 : vector<8x1xf32> to vector<8x800xf32>
    %109 = arith.mulf %108, %63 : vector<8x800xf32>
    %110 = vector.broadcast %75 : vector<8x1xf32> to vector<8x800xf32>
    %111 = arith.mulf %110, %65 : vector<8x800xf32>
    %112 = arith.subf %109, %111 : vector<8x800xf32>
    %cst_105 = arith.constant 0.00999999977 : f32
    %113 = vector.broadcast %cst_105 : f32 to vector<8x800xf32>
    %114 = arith.mulf %113, %112 : vector<8x800xf32>
    %115 = arith.addf %65, %114 : vector<8x800xf32>
    %c0_106 = arith.constant 0 : index
    %c0_107 = arith.constant 0 : index
    %c0_108 = arith.constant 0 : index
    %116 = vector.load %arg15[%c0_106, %c0_107, %c0_108] : memref<4x8x800xf32, #tpu.memory_space<vmem>>, vector<1x8x800xf32>
    %117 = vector.shape_cast %116 : vector<1x8x800xf32> to vector<8x800xf32>
    %118 = vector.shape_cast %88 : vector<8x800xf32> to vector<1x8x800xf32>
    tpu.vector_store %arg15[%c0_106, %c0_107, %c0_108], %118 {strides = array<i32>} : memref<4x8x800xf32, #tpu.memory_space<vmem>>, vector<1x8x800xf32>,
    %c1_109 = arith.constant 1 : index
    %c0_110 = arith.constant 0 : index
    %c0_111 = arith.constant 0 : index
    %119 = vector.load %arg15[%c1_109, %c0_110, %c0_111] : memref<4x8x800xf32, #tpu.memory_space<vmem>>, vector<1x8x800xf32>
    %120 = vector.shape_cast %119 : vector<1x8x800xf32> to vector<8x800xf32>
    %121 = vector.shape_cast %95 : vector<8x800xf32> to vector<1x8x800xf32>
    tpu.vector_store %arg15[%c1_109, %c0_110, %c0_111], %121 {strides = array<i32>} : memref<4x8x800xf32, #tpu.memory_space<vmem>>, vector<1x8x800xf32>,
    %c2_112 = arith.constant 2 : index
    %c0_113 = arith.constant 0 : index
    %c0_114 = arith.constant 0 : index
    %122 = vector.load %arg15[%c2_112, %c0_113, %c0_114] : memref<4x8x800xf32, #tpu.memory_space<vmem>>, vector<1x8x800xf32>
    %123 = vector.shape_cast %122 : vector<1x8x800xf32> to vector<8x800xf32>
    %124 = vector.shape_cast %107 : vector<8x800xf32> to vector<1x8x800xf32>
    tpu.vector_store %arg15[%c2_112, %c0_113, %c0_114], %124 {strides = array<i32>} : memref<4x8x800xf32, #tpu.memory_space<vmem>>, vector<1x8x800xf32>,
    %c3_115 = arith.constant 3 : index
    %c0_116 = arith.constant 0 : index
    %c0_117 = arith.constant 0 : index
    %125 = vector.load %arg15[%c3_115, %c0_116, %c0_117] : memref<4x8x800xf32, #tpu.memory_space<vmem>>, vector<1x8x800xf32>
    %126 = vector.shape_cast %125 : vector<1x8x800xf32> to vector<8x800xf32>
    %127 = vector.shape_cast %115 : vector<8x800xf32> to vector<1x8x800xf32>
    tpu.vector_store %arg15[%c3_115, %c0_116, %c0_117], %127 {strides = array<i32>} : memref<4x8x800xf32, #tpu.memory_space<vmem>>, vector<1x8x800xf32>,
    %128 = vector.broadcast %77 : vector<8x1xf32> to vector<8x800xf32>
    %129 = arith.mulf %128, %95 : vector<8x800xf32>
    %130 = vector.broadcast %79 : vector<8x1xf32> to vector<8x800xf32>
    %131 = arith.addf %129, %130 : vector<8x800xf32>
    %cst_118 = arith.constant 0.000000e+00 : f32
    %132 = vector.broadcast %cst_118 : f32 to vector<8x800xf32>
    %133 = arith.maximumf %131, %132 : vector<8x800xf32>
    %c0_119 = arith.constant 0 : index
    %c0_120 = arith.constant 0 : index
    %134 = vector.load %arg16[%c0_119, %c0_120] : memref<8x896xf32, #tpu.memory_space<vmem>>, vector<8x800xf32>
    tpu.vector_store %arg16[%c0_119, %c0_120], %133 {strides = array<i32>} : memref<8x896xf32, #tpu.memory_space<vmem>>, vector<8x800xf32>,
    %c0_121 = arith.constant 0 : index
    %c0_122 = arith.constant 0 : index
    %135 = vector.load %arg16[%c0_121, %c0_122] : memref<8x896xf32, #tpu.memory_space<vmem>>, vector<8x800xf32>
    %c0_123 = arith.constant 0 : index
    %c1_124 = arith.constant 1 : index
    %136 = vector.load %arg16[%c0_123, %c1_124] : memref<8x896xf32, #tpu.memory_space<vmem>>, vector<8x800xf32>
    %c0_125 = arith.constant 0 : index
    %c2_126 = arith.constant 2 : index
    %137 = vector.load %arg16[%c0_125, %c2_126] : memref<8x896xf32, #tpu.memory_space<vmem>>, vector<8x800xf32>
    %c0_127 = arith.constant 0 : index
    %c20_128 = arith.constant 20 : index
    %138 = vector.load %arg16[%c0_127, %c20_128] : memref<8x896xf32, #tpu.memory_space<vmem>>, vector<8x800xf32>
    %c0_129 = arith.constant 0 : index
    %c21_130 = arith.constant 21 : index
    %139 = vector.load %arg16[%c0_129, %c21_130] : memref<8x896xf32, #tpu.memory_space<vmem>>, vector<8x800xf32>
    %c0_131 = arith.constant 0 : index
    %c22_132 = arith.constant 22 : index
    %140 = vector.load %arg16[%c0_131, %c22_132] : memref<8x896xf32, #tpu.memory_space<vmem>>, vector<8x800xf32>
    %c0_133 = arith.constant 0 : index
    %c40_134 = arith.constant 40 : index
    %141 = vector.load %arg16[%c0_133, %c40_134] : memref<8x896xf32, #tpu.memory_space<vmem>>, vector<8x800xf32>
    %c0_135 = arith.constant 0 : index
    %c41_136 = arith.constant 41 : index
    %142 = vector.load %arg16[%c0_135, %c41_136] : memref<8x896xf32, #tpu.memory_space<vmem>>, vector<8x800xf32>
    %c0_137 = arith.constant 0 : index
    %c42_138 = arith.constant 42 : index
    %143 = vector.load %arg16[%c0_137, %c42_138] : memref<8x896xf32, #tpu.memory_space<vmem>>, vector<8x800xf32>
    %144 = tpu.concatenate %135, %136, %137, %138, %139, %140, %141, %142, %143 in 0 : vector<8x800xf32>, vector<8x800xf32>, vector<8x800xf32>, vector<8x800xf32>, vector<8x800xf32>, vector<8x800xf32>, vector<8x800xf32>, vector<8x800xf32>, vector<8x800xf32> -> vector<72x800xf32>
    %c0_139 = arith.constant 0 : index
    %c0_140 = arith.constant 0 : index
    %145 = vector.load %arg8[%c0_139, %c0_140] : memref<8x72xf32, #tpu.memory_space<vmem>>, vector<8x72xf32>
    %cst_141 = arith.constant dense<0.000000e+00> : vector<8x800xf32>
    %146 = tpu.matmul %145, %144, %cst_141 {dimension_numbers = #tpu.dot_dimension_numbers<[1], [0], [0], [1], [0, 0, 1, 1], [], []>} : vector<8x72xf32>, vector<72x800xf32>, vector<8x800xf32> -> vector<8x800xf32>
    %c0_142 = arith.constant 0 : index
    %c0_143 = arith.constant 0 : index
    %147 = vector.load %arg9[%c0_142, %c0_143] : memref<8x1xf32, #tpu.memory_space<vmem>>, vector<8x1xf32>
    %148 = vector.broadcast %147 : vector<8x1xf32> to vector<8x800xf32>
    %149 = arith.addf %146, %148 : vector<8x800xf32>
    %c0_144 = arith.constant 0 : index
    %c0_145 = arith.constant 0 : index
    %150 = vector.load %arg16[%c0_144, %c0_145] : memref<8x896xf32, #tpu.memory_space<vmem>>, vector<8x800xf32>
    tpu.vector_store %arg16[%c0_144, %c0_145], %149 {strides = array<i32>} : memref<8x896xf32, #tpu.memory_space<vmem>>, vector<8x800xf32>,
    %c0_146 = arith.constant 0 : index
    %c0_147 = arith.constant 0 : index
    %151 = vector.load %arg16[%c0_146, %c0_147] : memref<8x896xf32, #tpu.memory_space<vmem>>, vector<8x800xf32>
    %c0_148 = arith.constant 0 : index
    %c1_149 = arith.constant 1 : index
    %152 = vector.load %arg16[%c0_148, %c1_149] : memref<8x896xf32, #tpu.memory_space<vmem>>, vector<8x800xf32>
    %c0_150 = arith.constant 0 : index
    %c2_151 = arith.constant 2 : index
    %153 = vector.load %arg16[%c0_150, %c2_151] : memref<8x896xf32, #tpu.memory_space<vmem>>, vector<8x800xf32>
    %c0_152 = arith.constant 0 : index
    %c20_153 = arith.constant 20 : index
    %154 = vector.load %arg16[%c0_152, %c20_153] : memref<8x896xf32, #tpu.memory_space<vmem>>, vector<8x800xf32>
    %c0_154 = arith.constant 0 : index
    %c21_155 = arith.constant 21 : index
    %155 = vector.load %arg16[%c0_154, %c21_155] : memref<8x896xf32, #tpu.memory_space<vmem>>, vector<8x800xf32>
    %c0_156 = arith.constant 0 : index
    %c22_157 = arith.constant 22 : index
    %156 = vector.load %arg16[%c0_156, %c22_157] : memref<8x896xf32, #tpu.memory_space<vmem>>, vector<8x800xf32>
    %c0_158 = arith.constant 0 : index
    %c40_159 = arith.constant 40 : index
    %157 = vector.load %arg16[%c0_158, %c40_159] : memref<8x896xf32, #tpu.memory_space<vmem>>, vector<8x800xf32>
    %c0_160 = arith.constant 0 : index
    %c41_161 = arith.constant 41 : index
    %158 = vector.load %arg16[%c0_160, %c41_161] : memref<8x896xf32, #tpu.memory_space<vmem>>, vector<8x800xf32>
    %c0_162 = arith.constant 0 : index
    %c42_163 = arith.constant 42 : index
    %159 = vector.load %arg16[%c0_162, %c42_163] : memref<8x896xf32, #tpu.memory_space<vmem>>, vector<8x800xf32>
    %160 = tpu.concatenate %151, %152, %153, %154, %155, %156, %157, %158, %159 in 0 : vector<8x800xf32>, vector<8x800xf32>, vector<8x800xf32>, vector<8x800xf32>, vector<8x800xf32>, vector<8x800xf32>, vector<8x800xf32>, vector<8x800xf32>, vector<8x800xf32> -> vector<72x800xf32>
    %c0_164 = arith.constant 0 : index
    %c0_165 = arith.constant 0 : index
    %161 = vector.load %arg10[%c0_164, %c0_165] : memref<8x72xf32, #tpu.memory_space<vmem>>, vector<8x72xf32>
    %cst_166 = arith.constant dense<0.000000e+00> : vector<8x800xf32>
    %162 = tpu.matmul %161, %160, %cst_166 {dimension_numbers = #tpu.dot_dimension_numbers<[1], [0], [0], [1], [0, 0, 1, 1], [], []>} : vector<8x72xf32>, vector<72x800xf32>, vector<8x800xf32> -> vector<8x800xf32>
    %c0_167 = arith.constant 0 : index
    %c0_168 = arith.constant 0 : index
    %163 = vector.load %arg11[%c0_167, %c0_168] : memref<8x1xf32, #tpu.memory_space<vmem>>, vector<8x1xf32>
    %164 = vector.broadcast %163 : vector<8x1xf32> to vector<8x800xf32>
    %165 = arith.addf %162, %164 : vector<8x800xf32>
    %cst_169 = arith.constant 0.000000e+00 : f32
    %166 = vector.broadcast %cst_169 : f32 to vector<8x800xf32>
    %167 = arith.maximumf %165, %166 : vector<8x800xf32>
    %c0_170 = arith.constant 0 : index
    %c0_171 = arith.constant 0 : index
    %168 = vector.load %arg16[%c0_170, %c0_171] : memref<8x896xf32, #tpu.memory_space<vmem>>, vector<8x800xf32>
    tpu.vector_store %arg16[%c0_170, %c0_171], %167 {strides = array<i32>} : memref<8x896xf32, #tpu.memory_space<vmem>>, vector<8x800xf32>,
    %cst_172 = arith.constant 0.000000e+00 : f32
    %169 = vector.broadcast %cst_172 : f32 to vector<2x5xf32>
    %c0_173 = arith.constant 0 : index
    %c0_174 = arith.constant 0 : index
    %170 = vector.load %arg16[%c0_173, %c0_174] : memref<8x896xf32, #tpu.memory_space<vmem>>, vector<1x190xf32>
    %c0_175 = arith.constant 0 : index
    %c400 = arith.constant 400 : index
    %171 = vector.load %arg16[%c0_175, %c400] : memref<8x896xf32, #tpu.memory_space<vmem>>, vector<1x190xf32>
    %172 = tpu.concatenate %170, %171 in 0 : vector<1x190xf32>, vector<1x190xf32> -> vector<2x190xf32>
    %c0_176 = arith.constant 0 : index
    %c0_177 = arith.constant 0 : index
    %c0_178 = arith.constant 0 : index
    %173 = vector.load %arg13[%c0_176, %c0_177, %c0_178] : memref<8x190x5xf32, #tpu.memory_space<vmem>>, vector<1x190x5xf32>
    %174 = vector.shape_cast %173 : vector<1x190x5xf32> to vector<190x5xf32>
    %cst_179 = arith.constant dense<0.000000e+00> : vector<2x5xf32>
    %175 = tpu.matmul %172, %174, %cst_179 {dimension_numbers = #tpu.dot_dimension_numbers<[1], [0], [0], [1], [0, 0, 1, 1], [], []>} : vector<2x190xf32>, vector<190x5xf32>, vector<2x5xf32> -> vector<2x5xf32>
    %176 = arith.addf %169, %175 : vector<2x5xf32>
    %c1_180 = arith.constant 1 : index
    %c0_181 = arith.constant 0 : index
    %177 = vector.load %arg16[%c1_180, %c0_181] : memref<8x896xf32, #tpu.memory_space<vmem>>, vector<1x190xf32>
    %c1_182 = arith.constant 1 : index
    %c400_183 = arith.constant 400 : index
    %178 = vector.load %arg16[%c1_182, %c400_183] : memref<8x896xf32, #tpu.memory_space<vmem>>, vector<1x190xf32>
    %179 = tpu.concatenate %177, %178 in 0 : vector<1x190xf32>, vector<1x190xf32> -> vector<2x190xf32>
    %c1_184 = arith.constant 1 : index
    %c0_185 = arith.constant 0 : index
    %c0_186 = arith.constant 0 : index
    %180 = vector.load %arg13[%c1_184, %c0_185, %c0_186] : memref<8x190x5xf32, #tpu.memory_space<vmem>>, vector<1x190x5xf32>
    %181 = vector.shape_cast %180 : vector<1x190x5xf32> to vector<190x5xf32>
    %cst_187 = arith.constant dense<0.000000e+00> : vector<2x5xf32>
    %182 = tpu.matmul %179, %181, %cst_187 {dimension_numbers = #tpu.dot_dimension_numbers<[1], [0], [0], [1], [0, 0, 1, 1], [], []>} : vector<2x190xf32>, vector<190x5xf32>, vector<2x5xf32> -> vector<2x5xf32>
    %183 = arith.addf %176, %182 : vector<2x5xf32>
    %c2_188 = arith.constant 2 : index
    %c0_189 = arith.constant 0 : index
    %184 = vector.load %arg16[%c2_188, %c0_189] : memref<8x896xf32, #tpu.memory_space<vmem>>, vector<1x190xf32>
    %c2_190 = arith.constant 2 : index
    %c400_191 = arith.constant 400 : index
    %185 = vector.load %arg16[%c2_190, %c400_191] : memref<8x896xf32, #tpu.memory_space<vmem>>, vector<1x190xf32>
    %186 = tpu.concatenate %184, %185 in 0 : vector<1x190xf32>, vector<1x190xf32> -> vector<2x190xf32>
    %c2_192 = arith.constant 2 : index
    %c0_193 = arith.constant 0 : index
    %c0_194 = arith.constant 0 : index
    %187 = vector.load %arg13[%c2_192, %c0_193, %c0_194] : memref<8x190x5xf32, #tpu.memory_space<vmem>>, vector<1x190x5xf32>
    %188 = vector.shape_cast %187 : vector<1x190x5xf32> to vector<190x5xf32>
    %cst_195 = arith.constant dense<0.000000e+00> : vector<2x5xf32>
    %189 = tpu.matmul %186, %188, %cst_195 {dimension_numbers = #tpu.dot_dimension_numbers<[1], [0], [0], [1], [0, 0, 1, 1], [], []>} : vector<2x190xf32>, vector<190x5xf32>, vector<2x5xf32> -> vector<2x5xf32>
    %190 = arith.addf %183, %189 : vector<2x5xf32>
    %c3_196 = arith.constant 3 : index
    %c0_197 = arith.constant 0 : index
    %191 = vector.load %arg16[%c3_196, %c0_197] : memref<8x896xf32, #tpu.memory_space<vmem>>, vector<1x190xf32>
    %c3_198 = arith.constant 3 : index
    %c400_199 = arith.constant 400 : index
    %192 = vector.load %arg16[%c3_198, %c400_199] : memref<8x896xf32, #tpu.memory_space<vmem>>, vector<1x190xf32>
    %193 = tpu.concatenate %191, %192 in 0 : vector<1x190xf32>, vector<1x190xf32> -> vector<2x190xf32>
    %c3_200 = arith.constant 3 : index
    %c0_201 = arith.constant 0 : index
    %c0_202 = arith.constant 0 : index
    %194 = vector.load %arg13[%c3_200, %c0_201, %c0_202] : memref<8x190x5xf32, #tpu.memory_space<vmem>>, vector<1x190x5xf32>
    %195 = vector.shape_cast %194 : vector<1x190x5xf32> to vector<190x5xf32>
    %cst_203 = arith.constant dense<0.000000e+00> : vector<2x5xf32>
    %196 = tpu.matmul %193, %195, %cst_203 {dimension_numbers = #tpu.dot_dimension_numbers<[1], [0], [0], [1], [0, 0, 1, 1], [], []>} : vector<2x190xf32>, vector<190x5xf32>, vector<2x5xf32> -> vector<2x5xf32>
    %197 = arith.addf %190, %196 : vector<2x5xf32>
    %c4_204 = arith.constant 4 : index
    %c0_205 = arith.constant 0 : index
    %198 = vector.load %arg16[%c4_204, %c0_205] : memref<8x896xf32, #tpu.memory_space<vmem>>, vector<1x190xf32>
    %c4_206 = arith.constant 4 : index
    %c400_207 = arith.constant 400 : index
    %199 = vector.load %arg16[%c4_206, %c400_207] : memref<8x896xf32, #tpu.memory_space<vmem>>, vector<1x190xf32>
    %200 = tpu.concatenate %198, %199 in 0 : vector<1x190xf32>, vector<1x190xf32> -> vector<2x190xf32>
    %c4_208 = arith.constant 4 : index
    %c0_209 = arith.constant 0 : index
    %c0_210 = arith.constant 0 : index
    %201 = vector.load %arg13[%c4_208, %c0_209, %c0_210] : memref<8x190x5xf32, #tpu.memory_space<vmem>>, vector<1x190x5xf32>
    %202 = vector.shape_cast %201 : vector<1x190x5xf32> to vector<190x5xf32>
    %cst_211 = arith.constant dense<0.000000e+00> : vector<2x5xf32>
    %203 = tpu.matmul %200, %202, %cst_211 {dimension_numbers = #tpu.dot_dimension_numbers<[1], [0], [0], [1], [0, 0, 1, 1], [], []>} : vector<2x190xf32>, vector<190x5xf32>, vector<2x5xf32> -> vector<2x5xf32>
    %204 = arith.addf %197, %203 : vector<2x5xf32>
    %c5_212 = arith.constant 5 : index
    %c0_213 = arith.constant 0 : index
    %205 = vector.load %arg16[%c5_212, %c0_213] : memref<8x896xf32, #tpu.memory_space<vmem>>, vector<1x190xf32>
    %c5_214 = arith.constant 5 : index
    %c400_215 = arith.constant 400 : index
    %206 = vector.load %arg16[%c5_214, %c400_215] : memref<8x896xf32, #tpu.memory_space<vmem>>, vector<1x190xf32>
    %207 = tpu.concatenate %205, %206 in 0 : vector<1x190xf32>, vector<1x190xf32> -> vector<2x190xf32>
    %c5_216 = arith.constant 5 : index
    %c0_217 = arith.constant 0 : index
    %c0_218 = arith.constant 0 : index
    %208 = vector.load %arg13[%c5_216, %c0_217, %c0_218] : memref<8x190x5xf32, #tpu.memory_space<vmem>>, vector<1x190x5xf32>
    %209 = vector.shape_cast %208 : vector<1x190x5xf32> to vector<190x5xf32>
    %cst_219 = arith.constant dense<0.000000e+00> : vector<2x5xf32>
    %210 = tpu.matmul %207, %209, %cst_219 {dimension_numbers = #tpu.dot_dimension_numbers<[1], [0], [0], [1], [0, 0, 1, 1], [], []>} : vector<2x190xf32>, vector<190x5xf32>, vector<2x5xf32> -> vector<2x5xf32>
    %211 = arith.addf %204, %210 : vector<2x5xf32>
    %c6_220 = arith.constant 6 : index
    %c0_221 = arith.constant 0 : index
    %212 = vector.load %arg16[%c6_220, %c0_221] : memref<8x896xf32, #tpu.memory_space<vmem>>, vector<1x190xf32>
    %c6_222 = arith.constant 6 : index
    %c400_223 = arith.constant 400 : index
    %213 = vector.load %arg16[%c6_222, %c400_223] : memref<8x896xf32, #tpu.memory_space<vmem>>, vector<1x190xf32>
    %214 = tpu.concatenate %212, %213 in 0 : vector<1x190xf32>, vector<1x190xf32> -> vector<2x190xf32>
    %c6_224 = arith.constant 6 : index
    %c0_225 = arith.constant 0 : index
    %c0_226 = arith.constant 0 : index
    %215 = vector.load %arg13[%c6_224, %c0_225, %c0_226] : memref<8x190x5xf32, #tpu.memory_space<vmem>>, vector<1x190x5xf32>
    %216 = vector.shape_cast %215 : vector<1x190x5xf32> to vector<190x5xf32>
    %cst_227 = arith.constant dense<0.000000e+00> : vector<2x5xf32>
    %217 = tpu.matmul %214, %216, %cst_227 {dimension_numbers = #tpu.dot_dimension_numbers<[1], [0], [0], [1], [0, 0, 1, 1], [], []>} : vector<2x190xf32>, vector<190x5xf32>, vector<2x5xf32> -> vector<2x5xf32>
    %218 = arith.addf %211, %217 : vector<2x5xf32>
    %c7 = arith.constant 7 : index
    %c0_228 = arith.constant 0 : index
    %219 = vector.load %arg16[%c7, %c0_228] : memref<8x896xf32, #tpu.memory_space<vmem>>, vector<1x190xf32>
    %c7_229 = arith.constant 7 : index
    %c400_230 = arith.constant 400 : index
    %220 = vector.load %arg16[%c7_229, %c400_230] : memref<8x896xf32, #tpu.memory_space<vmem>>, vector<1x190xf32>
    %221 = tpu.concatenate %219, %220 in 0 : vector<1x190xf32>, vector<1x190xf32> -> vector<2x190xf32>
    %c7_231 = arith.constant 7 : index
    %c0_232 = arith.constant 0 : index
    %c0_233 = arith.constant 0 : index
    %222 = vector.load %arg13[%c7_231, %c0_232, %c0_233] : memref<8x190x5xf32, #tpu.memory_space<vmem>>, vector<1x190x5xf32>
    %223 = vector.shape_cast %222 : vector<1x190x5xf32> to vector<190x5xf32>
    %cst_234 = arith.constant dense<0.000000e+00> : vector<2x5xf32>
    %224 = tpu.matmul %221, %223, %cst_234 {dimension_numbers = #tpu.dot_dimension_numbers<[1], [0], [0], [1], [0, 0, 1, 1], [], []>} : vector<2x190xf32>, vector<190x5xf32>, vector<2x5xf32> -> vector<2x5xf32>
    %225 = arith.addf %218, %224 : vector<2x5xf32>
    %cst_235 = arith.constant 0.000000e+00 : f32
    %226 = vector.broadcast %cst_235 : f32 to vector<2x5xf32>
    %227 = arith.maximumf %225, %226 : vector<2x5xf32>
    %228 = math.absf %225 : vector<2x5xf32>
    %cst_236 = arith.constant 0.000000e+00 : f32
    %229 = vector.broadcast %cst_236 : f32 to vector<2x5xf32>
    %230 = arith.subf %229, %228 : vector<2x5xf32>
    %231 = math.exp %230 : vector<2x5xf32>
    %cst_237 = arith.constant 1.000000e+00 : f32
    %232 = vector.broadcast %cst_237 : f32 to vector<2x5xf32>
    %233 = arith.addf %232, %231 : vector<2x5xf32>
    %234 = math.log %233 : vector<2x5xf32>
    %235 = arith.addf %227, %234 : vector<2x5xf32>
    %c0_238 = arith.constant 0 : index
    %c0_239 = arith.constant 0 : index
    %236 = vector.load %arg14[%c0_238, %c0_239] : memref<2x5xf32, #tpu.memory_space<vmem>>, vector<2x5xf32>
    tpu.vector_store %arg14[%c0_238, %c0_239], %235 {strides = array<i32>} : memref<2x5xf32, #tpu.memory_space<vmem>>, vector<2x5xf32>,
    return
  }
}

</mosaic_0001>

<llo_original>
// kernel: _lambda_.1
$region0: #{_lambda_.1}
  #allocation0 [shape = 'u32[]', space=smem, size = 0x4, offset = 0x4, fixed_abs, tag = 'smem constant byte address 0x4 - core index']
  #allocation1 [shape = 'u32[72,128]{1,0:T(1,128)}', space=vmem, size = 0x9000, scoped, tag = 'internal scratch']
  #allocation2 [shape = 'f32[8,896]{1,0:T(8,128)}', space=vmem, size = 0x7000, scoped, tag = 'scratch operand']
  %s0 = inlined_call_operand.vmem [shape: f32[4,800], index: 0, kind: input, shape index: {}]
  %s1 = inlined_call_operand.vmem [shape: f32[4,8,800], index: 1, kind: input, shape index: {}]
  %s2 = inlined_call_operand.vmem [shape: f32[8,72], index: 2, kind: input, shape index: {}]
  %s3 = inlined_call_operand.vmem [shape: f32[8,1], index: 3, kind: input, shape index: {}, may-alias: {3,5,9}]
  %s4 = inlined_call_operand.vmem [shape: f32[8,72], index: 4, kind: input, shape index: {}]
  %s5 = inlined_call_operand.vmem [shape: f32[8,1], index: 5, kind: input, shape index: {}, may-alias: {3,5,9}]
  %s6 = inlined_call_operand.vmem [shape: f32[8,72], index: 6, kind: input, shape index: {}]
  %s7 = inlined_call_operand.vmem [shape: f32[8,1], index: 7, kind: input, shape index: {}]
  %s8 = inlined_call_operand.vmem [shape: f32[8,72], index: 8, kind: input, shape index: {}]
  %s9 = inlined_call_operand.vmem [shape: f32[8,1], index: 9, kind: input, shape index: {}, may-alias: {3,5,9}]
  %s10 = inlined_call_operand.vmem [shape: f32[8,72], index: 10, kind: input, shape index: {}]
  %s11 = inlined_call_operand.vmem [shape: f32[8,1], index: 11, kind: input, shape index: {}]
  %s12 = inlined_call_operand.vmem [shape: f32[7,8,1], index: 12, kind: input, shape index: {}]
  %s13 = inlined_call_operand.vmem [shape: f32[8,190,5], index: 13, kind: input, shape index: {}]
  %s14 = inlined_call_operand.hbm [shape: f32[2,5], index: 14, kind: output, shape index: {0}]
  %s15 = inlined_call_operand.vmem [shape: f32[4,8,800], index: 15, kind: output, shape index: {1}]
  %16 = xla_tuple %s14, %s15
  %s17 = sld [smem:[#allocation0]]
  $region74: #{_lambda_.1} parent=0
    _
  %s19 = ssub.s32 1, %s17
  %s20 = scalar_select 0, %s19, %s17
  $region1: #{_lambda_.1} parent=0
    #allocation3 [shape = 'u8[1024]{0}', space=vmem, size = 0x400, scoped, tag = 'output window, operand 0, single buffered']
    #allocation4 [shape = 's32[1]{0}', space=sflag, size = 0x4, scoped, tag = 'scoped memory for _lambda_.1']
    %21 = vsyncpa [#allocation4], 0
    // Predicated region
    $region2: #{_lambda_.1} parent=1 // pred_check
      _
    $region3: #{_lambda_.1} parent=1 // pred_check_branch
      %23 = sbr.rel (0) target = $region5
    $region4: #{_lambda_.1} parent=1 // pred_region
      _
    $region5: #{_lambda_.1} parent=1 // pred_fallthru
      _
    // Predicated region
    $region6: #{_lambda_.1} parent=1 // pred_check
      _
    $region7: #{_lambda_.1} parent=1 // pred_check_branch
      %25 = sbr.rel (0) target = $region9
    $region8: #{_lambda_.1} parent=1 // pred_region
      _
    $region9: #{_lambda_.1} parent=1 // pred_fallthru
      _
    // Predicated region
    $region10: #{_lambda_.1} parent=1 // pred_check
      _
    $region11: #{_lambda_.1} parent=1 // pred_check_branch
      %27 = sbr.rel (0) target = $region13
    $region12: #{_lambda_.1} parent=1 // pred_region
      _
    $region13: #{_lambda_.1} parent=1 // pred_fallthru
      _
    // Predicated region
    $region14: #{_lambda_.1} parent=1 // pred_check
      _
    $region15: #{_lambda_.1} parent=1 // pred_check_branch
      %29 = sbr.rel (0) target = $region17
    $region16: #{_lambda_.1} parent=1 // pred_region
      _
    $region17: #{_lambda_.1} parent=1 // pred_fallthru
      _
    // Predicated region
    $region18: #{_lambda_.1} parent=1 // pred_check
      _
    $region19: #{_lambda_.1} parent=1 // pred_check_branch
      %31 = sbr.rel (0) target = $region21
    $region20: #{_lambda_.1} parent=1 // pred_region
      _
    $region21: #{_lambda_.1} parent=1 // pred_fallthru
      _
    // Predicated region
    $region22: #{_lambda_.1} parent=1 // pred_check
      _
    $region23: #{_lambda_.1} parent=1 // pred_check_branch
      %33 = sbr.rel (0) target = $region25
    $region24: #{_lambda_.1} parent=1 // pred_region
      _
    $region25: #{_lambda_.1} parent=1 // pred_fallthru
      _
    // Predicated region
    $region26: #{_lambda_.1} parent=1 // pred_check
      _
    $region27: #{_lambda_.1} parent=1 // pred_check_branch
      %35 = sbr.rel (0) target = $region29
    $region28: #{_lambda_.1} parent=1 // pred_region
      _
    $region29: #{_lambda_.1} parent=1 // pred_fallthru
      _
    // Predicated region
    $region30: #{_lambda_.1} parent=1 // pred_check
      _
    $region31: #{_lambda_.1} parent=1 // pred_check_branch
      %37 = sbr.rel (0) target = $region33
    $region32: #{_lambda_.1} parent=1 // pred_region
      _
    $region33: #{_lambda_.1} parent=1 // pred_fallthru
      _
    // Predicated region
    $region34: #{_lambda_.1} parent=1 // pred_check
      _
    $region35: #{_lambda_.1} parent=1 // pred_check_branch
      %39 = sbr.rel (0) target = $region37
    $region36: #{_lambda_.1} parent=1 // pred_region
      _
    $region37: #{_lambda_.1} parent=1 // pred_fallthru
      _
    // Predicated region
    $region38: #{_lambda_.1} parent=1 // pred_check
      _
    $region39: #{_lambda_.1} parent=1 // pred_check_branch
      %41 = sbr.rel (0) target = $region41
    $region40: #{_lambda_.1} parent=1 // pred_region
      _
    $region41: #{_lambda_.1} parent=1 // pred_fallthru
      _
    // Predicated region
    $region42: #{_lambda_.1} parent=1 // pred_check
      _
    $region43: #{_lambda_.1} parent=1 // pred_check_branch
      %43 = sbr.rel (0) target = $region45
    $region44: #{_lambda_.1} parent=1 // pred_region
      _
    $region45: #{_lambda_.1} parent=1 // pred_fallthru
      _
    // Predicated region
    $region46: #{_lambda_.1} parent=1 // pred_check
      _
    $region47: #{_lambda_.1} parent=1 // pred_check_branch
      %45 = sbr.rel (0) target = $region49
    $region48: #{_lambda_.1} parent=1 // pred_region
      _
    $region49: #{_lambda_.1} parent=1 // pred_fallthru
      _
    // Predicated region
    $region50: #{_lambda_.1} parent=1 // pred_check
      _
    $region51: #{_lambda_.1} parent=1 // pred_check_branch
      %47 = sbr.rel (0) target = $region53
    $region52: #{_lambda_.1} parent=1 // pred_region
      _
    $region53: #{_lambda_.1} parent=1 // pred_fallthru
      _
    // Predicated region
    $region54: #{_lambda_.1} parent=1 // pred_check
      _
    $region55: #{_lambda_.1} parent=1 // pred_check_branch
      %49 = sbr.rel (0) target = $region57
    $region56: #{_lambda_.1} parent=1 // pred_region
      _
    $region57: #{_lambda_.1} parent=1 // pred_fallthru
      _
    %50 = vst [vmem:[#allocation2] sm:$0xff] 0.0
    %51 = vst [vmem:[#allocation2 + $0x8] sm:$0xff] 0.0
    %52 = vst [vmem:[#allocation2 + $0x10] sm:$0xff] 0.0
    %53 = vst [vmem:[#allocation2 + $0x18] sm:$0xff] 0.0
    %54 = vst [vmem:[#allocation2 + $0x20] sm:$0xff] 0.0
    %55 = vst [vmem:[#allocation2 + $0x28] sm:$0xff] 0.0
    %56 = vst [vmem:[#allocation2 + $0x30] sm:$0xff] 0.0
    %v57 = vld [vmem:[%s0] sm:$0xff]
    %v58 = vld [vmem:[%s0 + $0x8] sm:$0xff]
    %v59 = vld [vmem:[%s0 + $0x10] sm:$0xff]
    %v60 = vld [vmem:[%s0 + $0x18] sm:$0xf]
    %65 = vst [vmem:[#allocation1] ss:$2 sm:$0xff] %v57
    %s66 = scalar_lea.vmem [#allocation1], 16
    %67 = vst [vmem:[%s66] ss:$2 sm:$0xff] %v58
    %s68 = scalar_lea.vmem [#allocation1], 32
    %69 = vst [vmem:[%s68] ss:$2 sm:$0xff] %v59
    %s70 = scalar_lea.vmem [#allocation1], 48
    %71 = vst [vmem:[%s70] ss:$2 sm:$0xff] %v60
    %v72 = vld.sshfl [vmem:[#allocation1] sm:$0xff pattern:$0x75316420]
    %v73 = vld.sshfl [vmem:[#allocation1 + $0x8] sm:$0xff pattern:$0x75316420]
    %v74 = vld.sshfl [vmem:[#allocation1 + $0x10] sm:$0xff pattern:$0x75316420]
    %v75 = vld.sshfl [vmem:[#allocation1 + $0x18] sm:$0xff pattern:$0x75316420]
    %v76 = vld.sshfl [vmem:[#allocation1 + $0x20] sm:$0xff pattern:$0x75316420]
    %v77 = vld.sshfl [vmem:[#allocation1 + $0x28] sm:$0xff pattern:$0x75316420]
    %v78 = vld.sshfl [vmem:[#allocation1 + $0x30] sm:$0xff pattern:$0x75316420]
    %86 = vst [vmem:[#allocation2] sm:$0xf] %v72
    %87 = vst [vmem:[#allocation2 + $0x8] sm:$0xf] %v73
    %88 = vst [vmem:[#allocation2 + $0x10] sm:$0xf] %v74
    %89 = vst [vmem:[#allocation2 + $0x18] sm:$0xf] %v75
    %90 = vst [vmem:[#allocation2 + $0x20] sm:$0xf] %v76
    %91 = vst [vmem:[#allocation2 + $0x28] sm:$0xf] %v77
    %vm92 = vcmask 257024
    %93 = vst.msk [vmem:[#allocation2 + $0x30] sm:$0xf] %vm92, %v78
    %v94 = vld [vmem:[#allocation2] sm:$0xff]
    %v95 = vld [vmem:[#allocation2 + $0x8] sm:$0xff]
    %v96 = vld [vmem:[#allocation2 + $0x10] sm:$0xff]
    %v97 = vld [vmem:[#allocation2 + $0x18] sm:$0xff]
    %v98 = vld [vmem:[#allocation2 + $0x20] sm:$0xff]
    %v99 = vld [vmem:[#allocation2 + $0x28] sm:$0xff]
    %v100 = vld [vmem:[#allocation2 + $0x30] sm:$0xff]
    %108 = vrot.lane.b32.xlu0 %v94, 127
    %v109 = vpop.permute.xlu0 %108
    %110 = vrot.lane.b32.xlu0 %v95, 127
    %v111 = vpop.permute.xlu0 %110
    %112 = vrot.lane.b32.xlu0 %v96, 127
    %v113 = vpop.permute.xlu0 %112
    %114 = vrot.lane.b32.xlu0 %v97, 127
    %v115 = vpop.permute.xlu0 %114
    %116 = vrot.lane.b32.xlu0 %v98, 127
    %v117 = vpop.permute.xlu0 %116
    %118 = vrot.lane.b32.xlu0 %v99, 127
    %v119 = vpop.permute.xlu0 %118
    %120 = vrot.lane.b32.xlu0 %v100, 127
    %v121 = vpop.permute.xlu0 %120
    %vm122 = vcmask 1039360
    %v123 = vsel %vm122, %v109, %v111
    %v124 = vsel %vm122, %v111, %v113
    %v125 = vsel %vm122, %v113, %v115
    %v126 = vsel %vm122, %v115, %v117
    %v127 = vsel %vm122, %v117, %v119
    %v128 = vsel %vm122, %v119, %v121
    %136 = vrot.lane.b32.xlu0 %v94, 126
    %v137 = vpop.permute.xlu0 %136
    %138 = vrot.lane.b32.xlu0 %v95, 126
    %v139 = vpop.permute.xlu0 %138
    %140 = vrot.lane.b32.xlu0 %v96, 126
    %v141 = vpop.permute.xlu0 %140
    %142 = vrot.lane.b32.xlu0 %v97, 126
    %v143 = vpop.permute.xlu0 %142
    %144 = vrot.lane.b32.xlu0 %v98, 126
    %v145 = vpop.permute.xlu0 %144
    %146 = vrot.lane.b32.xlu0 %v99, 126
    %v147 = vpop.permute.xlu0 %146
    %148 = vrot.lane.b32.xlu0 %v100, 126
    %v149 = vpop.permute.xlu0 %148
    %vm150 = vcmask 1031168
    %v151 = vsel %vm150, %v137, %v139
    %v152 = vsel %vm150, %v139, %v141
    %v153 = vsel %vm150, %v141, %v143
    %v154 = vsel %vm150, %v143, %v145
    %v155 = vsel %vm150, %v145, %v147
    %v156 = vsel %vm150, %v147, %v149
    %164 = vrot.lane.b32.xlu0 %v94, 108
    %v165 = vpop.permute.xlu0 %164
    %166 = vrot.lane.b32.xlu0 %v95, 108
    %v167 = vpop.permute.xlu0 %166
    %168 = vrot.lane.b32.xlu0 %v96, 108
    %v169 = vpop.permute.xlu0 %168
    %170 = vrot.lane.b32.xlu0 %v97, 108
    %v171 = vpop.permute.xlu0 %170
    %172 = vrot.lane.b32.xlu0 %v98, 108
    %v173 = vpop.permute.xlu0 %172
    %174 = vrot.lane.b32.xlu0 %v99, 108
    %v175 = vpop.permute.xlu0 %174
    %176 = vrot.lane.b32.xlu0 %v100, 108
    %v177 = vpop.permute.xlu0 %176
    %vm178 = vcmask 883712
    %v179 = vsel %vm178, %v165, %v167
    %v180 = vsel %vm178, %v167, %v169
    %v181 = vsel %vm178, %v169, %v171
    %v182 = vsel %vm178, %v171, %v173
    %v183 = vsel %vm178, %v173, %v175
    %v184 = vsel %vm178, %v175, %v177
    %192 = vrot.lane.b32.xlu0 %v94, 107
    %v193 = vpop.permute.xlu0 %192
    %194 = vrot.lane.b32.xlu0 %v95, 107
    %v195 = vpop.permute.xlu0 %194
    %196 = vrot.lane.b32.xlu0 %v96, 107
    %v197 = vpop.permute.xlu0 %196
    %198 = vrot.lane.b32.xlu0 %v97, 107
    %v199 = vpop.permute.xlu0 %198
    %200 = vrot.lane.b32.xlu0 %v98, 107
    %v201 = vpop.permute.xlu0 %200
    %202 = vrot.lane.b32.xlu0 %v99, 107
    %v203 = vpop.permute.xlu0 %202
    %204 = vrot.lane.b32.xlu0 %v100, 107
    %v205 = vpop.permute.xlu0 %204
    %vm206 = vcmask 875520
    %v207 = vsel %vm206, %v193, %v195
    %v208 = vsel %vm206, %v195, %v197
    %v209 = vsel %vm206, %v197, %v199
    %v210 = vsel %vm206, %v199, %v201
    %v211 = vsel %vm206, %v201, %v203
    %v212 = vsel %vm206, %v203, %v205
    %220 = vrot.lane.b32.xlu0 %v94, 106
    %v221 = vpop.permute.xlu0 %220
    %222 = vrot.lane.b32.xlu0 %v95, 106
    %v223 = vpop.permute.xlu0 %222
    %224 = vrot.lane.b32.xlu0 %v96, 106
    %v225 = vpop.permute.xlu0 %224
    %226 = vrot.lane.b32.xlu0 %v97, 106
    %v227 = vpop.permute.xlu0 %226
    %228 = vrot.lane.b32.xlu0 %v98, 106
    %v229 = vpop.permute.xlu0 %228
    %230 = vrot.lane.b32.xlu0 %v99, 106
    %v231 = vpop.permute.xlu0 %230
    %232 = vrot.lane.b32.xlu0 %v100, 106
    %v233 = vpop.permute.xlu0 %232
    %vm234 = vcmask 867328
    %v235 = vsel %vm234, %v221, %v223
    %v236 = vsel %vm234, %v223, %v225
    %v237 = vsel %vm234, %v225, %v227
    %v238 = vsel %vm234, %v227, %v229
    %v239 = vsel %vm234, %v229, %v231
    %v240 = vsel %vm234, %v231, %v233
    %248 = vrot.lane.b32.xlu0 %v94, 88
    %v249 = vpop.permute.xlu0 %248
    %250 = vrot.lane.b32.xlu0 %v95, 88
    %v251 = vpop.permute.xlu0 %250
    %252 = vrot.lane.b32.xlu0 %v96, 88
    %v253 = vpop.permute.xlu0 %252
    %254 = vrot.lane.b32.xlu0 %v97, 88
    %v255 = vpop.permute.xlu0 %254
    %256 = vrot.lane.b32.xlu0 %v98, 88
    %v257 = vpop.permute.xlu0 %256
    %258 = vrot.lane.b32.xlu0 %v99, 88
    %v259 = vpop.permute.xlu0 %258
    %260 = vrot.lane.b32.xlu0 %v100, 88
    %v261 = vpop.permute.xlu0 %260
    %vm262 = vcmask 719872
    %v263 = vsel %vm262, %v249, %v251
    %v264 = vsel %vm262, %v251, %v253
    %v265 = vsel %vm262, %v253, %v255
    %v266 = vsel %vm262, %v255, %v257
    %v267 = vsel %vm262, %v257, %v259
    %v268 = vsel %vm262, %v259, %v261
    %276 = vrot.lane.b32.xlu0 %v94, 87
    %v277 = vpop.permute.xlu0 %276
    %278 = vrot.lane.b32.xlu0 %v95, 87
    %v279 = vpop.permute.xlu0 %278
    %280 = vrot.lane.b32.xlu0 %v96, 87
    %v281 = vpop.permute.xlu0 %280
    %282 = vrot.lane.b32.xlu0 %v97, 87
    %v283 = vpop.permute.xlu0 %282
    %284 = vrot.lane.b32.xlu0 %v98, 87
    %v285 = vpop.permute.xlu0 %284
    %286 = vrot.lane.b32.xlu0 %v99, 87
    %v287 = vpop.permute.xlu0 %286
    %288 = vrot.lane.b32.xlu0 %v100, 87
    %v289 = vpop.permute.xlu0 %288
    %vm290 = vcmask 711680
    %v291 = vsel %vm290, %v277, %v279
    %v292 = vsel %vm290, %v279, %v281
    %v293 = vsel %vm290, %v281, %v283
    %v294 = vsel %vm290, %v283, %v285
    %v295 = vsel %vm290, %v285, %v287
    %v296 = vsel %vm290, %v287, %v289
    %304 = vrot.lane.b32.xlu0 %v94, 86
    %v305 = vpop.permute.xlu0 %304
    %306 = vrot.lane.b32.xlu0 %v95, 86
    %v307 = vpop.permute.xlu0 %306
    %308 = vrot.lane.b32.xlu0 %v96, 86
    %v309 = vpop.permute.xlu0 %308
    %310 = vrot.lane.b32.xlu0 %v97, 86
    %v311 = vpop.permute.xlu0 %310
    %312 = vrot.lane.b32.xlu0 %v98, 86
    %v313 = vpop.permute.xlu0 %312
    %314 = vrot.lane.b32.xlu0 %v99, 86
    %v315 = vpop.permute.xlu0 %314
    %316 = vrot.lane.b32.xlu0 %v100, 86
    %v317 = vpop.permute.xlu0 %316
    %vm318 = vcmask 703488
    %v319 = vsel %vm318, %v305, %v307
    %v320 = vsel %vm318, %v307, %v309
    %v321 = vsel %vm318, %v309, %v311
    %v322 = vsel %vm318, %v311, %v313
    %v323 = vsel %vm318, %v313, %v315
    %v324 = vsel %vm318, %v315, %v317
    %v332 = vld [vmem:[%s2] sm:$0xff]
    %v333 = vld [vmem:[%s3] sm:$0xff]
    %335 = vset.pattern.permute.xlu0 0
    %336 = vperm.xlu0 %335, %v333
    %v337 = vpop.permute.xlu0 %336
    %vm339 = vcmask 588800
    %v341 = vsel %vm339, %v332, 0
    %343 = vmatpush.msra.mxu0 0.0
    %344 = vmatpush.msra.mxu0 0.0
    %345 = vmatpush.msra.mxu0 0.0
    %346 = vmatpush.msra.mxu0 0.0
    %347 = vmatpush.msra.mxu0 0.0
    %348 = vmatpush.msra.mxu0 0.0
    %349 = vmatpush.msra.mxu0 0.0
    %350 = vmatpush.msra.mxu0 %v319
    %351 = vmatpush.msra.mxu0 %v291
    %352 = vmatpush.msra.mxu0 %v263
    %353 = vmatpush.msra.mxu0 %v235
    %354 = vmatpush.msra.mxu0 %v207
    %355 = vmatpush.msra.mxu0 %v179
    %356 = vmatpush.msra.mxu0 %v151
    %357 = vmatpush.msra.mxu0 %v123
    %358 = vmatpush.msra.mxu0 %v94
    %359 = vmatmul.f32.gmra.mxu0 %v341
    %v360 = vpop.f32.mrf.mxu0
    %v361 = vadd.f32 %v337, %v360
    %362 = vdwg.mxu0
    %363 = vmatpush.msra.mxu0 0.0
    %364 = vmatpush.msra.mxu0 0.0
    %365 = vmatpush.msra.mxu0 0.0
    %366 = vmatpush.msra.mxu0 0.0
    %367 = vmatpush.msra.mxu0 0.0
    %368 = vmatpush.msra.mxu0 0.0
    %369 = vmatpush.msra.mxu0 0.0
    %370 = vmatpush.msra.mxu0 %v320
    %371 = vmatpush.msra.mxu0 %v292
    %372 = vmatpush.msra.mxu0 %v264
    %373 = vmatpush.msra.mxu0 %v236
    %374 = vmatpush.msra.mxu0 %v208
    %375 = vmatpush.msra.mxu0 %v180
    %376 = vmatpush.msra.mxu0 %v152
    %377 = vmatpush.msra.mxu0 %v124
    %378 = vmatpush.msra.mxu0 %v95
    %379 = vmatmul.f32.gmra.mxu0 %v341
    %v380 = vpop.f32.mrf.mxu0
    %v381 = vadd.f32 %v337, %v380
    %382 = vdwg.mxu0
    %383 = vmatpush.msra.mxu0 0.0
    %384 = vmatpush.msra.mxu0 0.0
    %385 = vmatpush.msra.mxu0 0.0
    %386 = vmatpush.msra.mxu0 0.0
    %387 = vmatpush.msra.mxu0 0.0
    %388 = vmatpush.msra.mxu0 0.0
    %389 = vmatpush.msra.mxu0 0.0
    %390 = vmatpush.msra.mxu0 %v321
    %391 = vmatpush.msra.mxu0 %v293
    %392 = vmatpush.msra.mxu0 %v265
    %393 = vmatpush.msra.mxu0 %v237
    %394 = vmatpush.msra.mxu0 %v209
    %395 = vmatpush.msra.mxu0 %v181
    %396 = vmatpush.msra.mxu0 %v153
    %397 = vmatpush.msra.mxu0 %v125
    %398 = vmatpush.msra.mxu0 %v96
    %399 = vmatmul.f32.gmra.mxu0 %v341
    %v400 = vpop.f32.mrf.mxu0
    %v401 = vadd.f32 %v337, %v400
    %402 = vdwg.mxu0
    %403 = vmatpush.msra.mxu0 0.0
    %404 = vmatpush.msra.mxu0 0.0
    %405 = vmatpush.msra.mxu0 0.0
    %406 = vmatpush.msra.mxu0 0.0
    %407 = vmatpush.msra.mxu0 0.0
    %408 = vmatpush.msra.mxu0 0.0
    %409 = vmatpush.msra.mxu0 0.0
    %410 = vmatpush.msra.mxu0 %v322
    %411 = vmatpush.msra.mxu0 %v294
    %412 = vmatpush.msra.mxu0 %v266
    %413 = vmatpush.msra.mxu0 %v238
    %414 = vmatpush.msra.mxu0 %v210
    %415 = vmatpush.msra.mxu0 %v182
    %416 = vmatpush.msra.mxu0 %v154
    %417 = vmatpush.msra.mxu0 %v126
    %418 = vmatpush.msra.mxu0 %v97
    %419 = vmatmul.f32.gmra.mxu0 %v341
    %v420 = vpop.f32.mrf.mxu0
    %v421 = vadd.f32 %v337, %v420
    %422 = vdwg.mxu0
    %423 = vmatpush.msra.mxu0 0.0
    %424 = vmatpush.msra.mxu0 0.0
    %425 = vmatpush.msra.mxu0 0.0
    %426 = vmatpush.msra.mxu0 0.0
    %427 = vmatpush.msra.mxu0 0.0
    %428 = vmatpush.msra.mxu0 0.0
    %429 = vmatpush.msra.mxu0 0.0
    %430 = vmatpush.msra.mxu0 %v323
    %431 = vmatpush.msra.mxu0 %v295
    %432 = vmatpush.msra.mxu0 %v267
    %433 = vmatpush.msra.mxu0 %v239
    %434 = vmatpush.msra.mxu0 %v211
    %435 = vmatpush.msra.mxu0 %v183
    %436 = vmatpush.msra.mxu0 %v155
    %437 = vmatpush.msra.mxu0 %v127
    %438 = vmatpush.msra.mxu0 %v98
    %439 = vmatmul.f32.gmra.mxu0 %v341
    %v440 = vpop.f32.mrf.mxu0
    %v441 = vadd.f32 %v337, %v440
    %442 = vdwg.mxu0
    %443 = vmatpush.msra.mxu0 0.0
    %444 = vmatpush.msra.mxu0 0.0
    %445 = vmatpush.msra.mxu0 0.0
    %446 = vmatpush.msra.mxu0 0.0
    %447 = vmatpush.msra.mxu0 0.0
    %448 = vmatpush.msra.mxu0 0.0
    %449 = vmatpush.msra.mxu0 0.0
    %450 = vmatpush.msra.mxu0 %v324
    %451 = vmatpush.msra.mxu0 %v296
    %452 = vmatpush.msra.mxu0 %v268
    %453 = vmatpush.msra.mxu0 %v240
    %454 = vmatpush.msra.mxu0 %v212
    %455 = vmatpush.msra.mxu0 %v184
    %456 = vmatpush.msra.mxu0 %v156
    %457 = vmatpush.msra.mxu0 %v128
    %458 = vmatpush.msra.mxu0 %v99
    %459 = vmatmul.f32.gmra.mxu0 %v341
    %v460 = vpop.f32.mrf.mxu0
    %v461 = vadd.f32 %v337, %v460
    %462 = vdwg.mxu0
    %463 = vmatpush.msra.mxu0 0.0
    %464 = vmatpush.msra.mxu0 0.0
    %465 = vmatpush.msra.mxu0 0.0
    %466 = vmatpush.msra.mxu0 0.0
    %467 = vmatpush.msra.mxu0 0.0
    %468 = vmatpush.msra.mxu0 0.0
    %469 = vmatpush.msra.mxu0 0.0
    %470 = vmatpush.msra.mxu0 %v317
    %471 = vmatpush.msra.mxu0 %v289
    %472 = vmatpush.msra.mxu0 %v261
    %473 = vmatpush.msra.mxu0 %v233
    %474 = vmatpush.msra.mxu0 %v205
    %475 = vmatpush.msra.mxu0 %v177
    %476 = vmatpush.msra.mxu0 %v149
    %477 = vmatpush.msra.mxu0 %v121
    %478 = vmatpush.msra.mxu0 %v100
    %479 = vmatmul.f32.gmra.mxu0 %v341
    %v480 = vpop.f32.mrf.mxu0
    %v481 = vadd.f32 %v337, %v480
    %482 = vdwg.mxu0
    %483 = vst [vmem:[#allocation2] sm:$0xff] %v361
    %484 = vst [vmem:[#allocation2 + $0x8] sm:$0xff] %v381
    %485 = vst [vmem:[#allocation2 + $0x10] sm:$0xff] %v401
    %486 = vst [vmem:[#allocation2 + $0x18] sm:$0xff] %v421
    %487 = vst [vmem:[#allocation2 + $0x20] sm:$0xff] %v441
    %488 = vst [vmem:[#allocation2 + $0x28] sm:$0xff] %v461
    %vm489 = vcmask 261120
    %490 = vst.msk [vmem:[#allocation2 + $0x30] sm:$0xff] %vm489, %v481
    %v491 = vld [vmem:[#allocation2] sm:$0xff]
    %v492 = vld [vmem:[#allocation2 + $0x8] sm:$0xff]
    %v493 = vld [vmem:[#allocation2 + $0x10] sm:$0xff]
    %v494 = vld [vmem:[#allocation2 + $0x18] sm:$0xff]
    %v495 = vld [vmem:[#allocation2 + $0x20] sm:$0xff]
    %v496 = vld [vmem:[#allocation2 + $0x28] sm:$0xff]
    %v497 = vld [vmem:[#allocation2 + $0x30] sm:$0xff]
    %505 = vrot.lane.b32.xlu0 %v491, 127
    %v506 = vpop.permute.xlu0 %505
    %507 = vrot.lane.b32.xlu0 %v492, 127
    %v508 = vpop.permute.xlu0 %507
    %509 = vrot.lane.b32.xlu0 %v493, 127
    %v510 = vpop.permute.xlu0 %509
    %511 = vrot.lane.b32.xlu0 %v494, 127
    %v512 = vpop.permute.xlu0 %511
    %513 = vrot.lane.b32.xlu0 %v495, 127
    %v514 = vpop.permute.xlu0 %513
    %515 = vrot.lane.b32.xlu0 %v496, 127
    %v516 = vpop.permute.xlu0 %515
    %517 = vrot.lane.b32.xlu0 %v497, 127
    %v518 = vpop.permute.xlu0 %517
    %v519 = vsel %vm122, %v506, %v508
    %v520 = vsel %vm122, %v508, %v510
    %v521 = vsel %vm122, %v510, %v512
    %v522 = vsel %vm122, %v512, %v514
    %v523 = vsel %vm122, %v514, %v516
    %v524 = vsel %vm122, %v516, %v518
    %532 = vrot.lane.b32.xlu0 %v491, 126
    %v533 = vpop.permute.xlu0 %532
    %534 = vrot.lane.b32.xlu0 %v492, 126
    %v535 = vpop.permute.xlu0 %534
    %536 = vrot.lane.b32.xlu0 %v493, 126
    %v537 = vpop.permute.xlu0 %536
    %538 = vrot.lane.b32.xlu0 %v494, 126
    %v539 = vpop.permute.xlu0 %538
    %540 = vrot.lane.b32.xlu0 %v495, 126
    %v541 = vpop.permute.xlu0 %540
    %542 = vrot.lane.b32.xlu0 %v496, 126
    %v543 = vpop.permute.xlu0 %542
    %544 = vrot.lane.b32.xlu0 %v497, 126
    %v545 = vpop.permute.xlu0 %544
    %v546 = vsel %vm150, %v533, %v535
    %v547 = vsel %vm150, %v535, %v537
    %v548 = vsel %vm150, %v537, %v539
    %v549 = vsel %vm150, %v539, %v541
    %v550 = vsel %vm150, %v541, %v543
    %v551 = vsel %vm150, %v543, %v545
    %559 = vrot.lane.b32.xlu0 %v491, 108
    %v560 = vpop.permute.xlu0 %559
    %561 = vrot.lane.b32.xlu0 %v492, 108
    %v562 = vpop.permute.xlu0 %561
    %563 = vrot.lane.b32.xlu0 %v493, 108
    %v564 = vpop.permute.xlu0 %563
    %565 = vrot.lane.b32.xlu0 %v494, 108
    %v566 = vpop.permute.xlu0 %565
    %567 = vrot.lane.b32.xlu0 %v495, 108
    %v568 = vpop.permute.xlu0 %567
    %569 = vrot.lane.b32.xlu0 %v496, 108
    %v570 = vpop.permute.xlu0 %569
    %571 = vrot.lane.b32.xlu0 %v497, 108
    %v572 = vpop.permute.xlu0 %571
    %v573 = vsel %vm178, %v560, %v562
    %v574 = vsel %vm178, %v562, %v564
    %v575 = vsel %vm178, %v564, %v566
    %v576 = vsel %vm178, %v566, %v568
    %v577 = vsel %vm178, %v568, %v570
    %v578 = vsel %vm178, %v570, %v572
    %586 = vrot.lane.b32.xlu0 %v491, 107
    %v587 = vpop.permute.xlu0 %586
    %588 = vrot.lane.b32.xlu0 %v492, 107
    %v589 = vpop.permute.xlu0 %588
    %590 = vrot.lane.b32.xlu0 %v493, 107
    %v591 = vpop.permute.xlu0 %590
    %592 = vrot.lane.b32.xlu0 %v494, 107
    %v593 = vpop.permute.xlu0 %592
    %594 = vrot.lane.b32.xlu0 %v495, 107
    %v595 = vpop.permute.xlu0 %594
    %596 = vrot.lane.b32.xlu0 %v496, 107
    %v597 = vpop.permute.xlu0 %596
    %598 = vrot.lane.b32.xlu0 %v497, 107
    %v599 = vpop.permute.xlu0 %598
    %v600 = vsel %vm206, %v587, %v589
    %v601 = vsel %vm206, %v589, %v591
    %v602 = vsel %vm206, %v591, %v593
    %v603 = vsel %vm206, %v593, %v595
    %v604 = vsel %vm206, %v595, %v597
    %v605 = vsel %vm206, %v597, %v599
    %613 = vrot.lane.b32.xlu0 %v491, 106
    %v614 = vpop.permute.xlu0 %613
    %615 = vrot.lane.b32.xlu0 %v492, 106
    %v616 = vpop.permute.xlu0 %615
    %617 = vrot.lane.b32.xlu0 %v493, 106
    %v618 = vpop.permute.xlu0 %617
    %619 = vrot.lane.b32.xlu0 %v494, 106
    %v620 = vpop.permute.xlu0 %619
    %621 = vrot.lane.b32.xlu0 %v495, 106
    %v622 = vpop.permute.xlu0 %621
    %623 = vrot.lane.b32.xlu0 %v496, 106
    %v624 = vpop.permute.xlu0 %623
    %625 = vrot.lane.b32.xlu0 %v497, 106
    %v626 = vpop.permute.xlu0 %625
    %v627 = vsel %vm234, %v614, %v616
    %v628 = vsel %vm234, %v616, %v618
    %v629 = vsel %vm234, %v618, %v620
    %v630 = vsel %vm234, %v620, %v622
    %v631 = vsel %vm234, %v622, %v624
    %v632 = vsel %vm234, %v624, %v626
    %640 = vrot.lane.b32.xlu0 %v491, 88
    %v641 = vpop.permute.xlu0 %640
    %642 = vrot.lane.b32.xlu0 %v492, 88
    %v643 = vpop.permute.xlu0 %642
    %644 = vrot.lane.b32.xlu0 %v493, 88
    %v645 = vpop.permute.xlu0 %644
    %646 = vrot.lane.b32.xlu0 %v494, 88
    %v647 = vpop.permute.xlu0 %646
    %648 = vrot.lane.b32.xlu0 %v495, 88
    %v649 = vpop.permute.xlu0 %648
    %650 = vrot.lane.b32.xlu0 %v496, 88
    %v651 = vpop.permute.xlu0 %650
    %652 = vrot.lane.b32.xlu0 %v497, 88
    %v653 = vpop.permute.xlu0 %652
    %v654 = vsel %vm262, %v641, %v643
    %v655 = vsel %vm262, %v643, %v645
    %v656 = vsel %vm262, %v645, %v647
    %v657 = vsel %vm262, %v647, %v649
    %v658 = vsel %vm262, %v649, %v651
    %v659 = vsel %vm262, %v651, %v653
    %667 = vrot.lane.b32.xlu0 %v491, 87
    %v668 = vpop.permute.xlu0 %667
    %669 = vrot.lane.b32.xlu0 %v492, 87
    %v670 = vpop.permute.xlu0 %669
    %671 = vrot.lane.b32.xlu0 %v493, 87
    %v672 = vpop.permute.xlu0 %671
    %673 = vrot.lane.b32.xlu0 %v494, 87
    %v674 = vpop.permute.xlu0 %673
    %675 = vrot.lane.b32.xlu0 %v495, 87
    %v676 = vpop.permute.xlu0 %675
    %677 = vrot.lane.b32.xlu0 %v496, 87
    %v678 = vpop.permute.xlu0 %677
    %679 = vrot.lane.b32.xlu0 %v497, 87
    %v680 = vpop.permute.xlu0 %679
    %v681 = vsel %vm290, %v668, %v670
    %v682 = vsel %vm290, %v670, %v672
    %v683 = vsel %vm290, %v672, %v674
    %v684 = vsel %vm290, %v674, %v676
    %v685 = vsel %vm290, %v676, %v678
    %v686 = vsel %vm290, %v678, %v680
    %694 = vrot.lane.b32.xlu0 %v491, 86
    %v695 = vpop.permute.xlu0 %694
    %696 = vrot.lane.b32.xlu0 %v492, 86
    %v697 = vpop.permute.xlu0 %696
    %698 = vrot.lane.b32.xlu0 %v493, 86
    %v699 = vpop.permute.xlu0 %698
    %700 = vrot.lane.b32.xlu0 %v494, 86
    %v701 = vpop.permute.xlu0 %700
    %702 = vrot.lane.b32.xlu0 %v495, 86
    %v703 = vpop.permute.xlu0 %702
    %704 = vrot.lane.b32.xlu0 %v496, 86
    %v705 = vpop.permute.xlu0 %704
    %706 = vrot.lane.b32.xlu0 %v497, 86
    %v707 = vpop.permute.xlu0 %706
    %v708 = vsel %vm318, %v695, %v697
    %v709 = vsel %vm318, %v697, %v699
    %v710 = vsel %vm318, %v699, %v701
    %v711 = vsel %vm318, %v701, %v703
    %v712 = vsel %vm318, %v703, %v705
    %v713 = vsel %vm318, %v705, %v707
    %v721 = vld [vmem:[%s4] sm:$0xff]
    %v722 = vld [vmem:[%s5] sm:$0xff]
    %724 = vset.pattern.permute.xlu0 0
    %725 = vperm.xlu0 %724, %v722
    %v726 = vpop.permute.xlu0 %725
    %v729 = vsel %vm339, %v721, 0
    %731 = vmatpush.msra.mxu0 0.0
    %732 = vmatpush.msra.mxu0 0.0
    %733 = vmatpush.msra.mxu0 0.0
    %734 = vmatpush.msra.mxu0 0.0
    %735 = vmatpush.msra.mxu0 0.0
    %736 = vmatpush.msra.mxu0 0.0
    %737 = vmatpush.msra.mxu0 0.0
    %738 = vmatpush.msra.mxu0 %v708
    %739 = vmatpush.msra.mxu0 %v681
    %740 = vmatpush.msra.mxu0 %v654
    %741 = vmatpush.msra.mxu0 %v627
    %742 = vmatpush.msra.mxu0 %v600
    %743 = vmatpush.msra.mxu0 %v573
    %744 = vmatpush.msra.mxu0 %v546
    %745 = vmatpush.msra.mxu0 %v519
    %746 = vmatpush.msra.mxu0 %v491
    %747 = vmatmul.f32.gmra.mxu0 %v729
    %v748 = vpop.f32.mrf.mxu0
    %v749 = vadd.f32 %v726, %v748
    %750 = vdwg.mxu0
    %751 = vmatpush.msra.mxu0 0.0
    %752 = vmatpush.msra.mxu0 0.0
    %753 = vmatpush.msra.mxu0 0.0
    %754 = vmatpush.msra.mxu0 0.0
    %755 = vmatpush.msra.mxu0 0.0
    %756 = vmatpush.msra.mxu0 0.0
    %757 = vmatpush.msra.mxu0 0.0
    %758 = vmatpush.msra.mxu0 %v709
    %759 = vmatpush.msra.mxu0 %v682
    %760 = vmatpush.msra.mxu0 %v655
    %761 = vmatpush.msra.mxu0 %v628
    %762 = vmatpush.msra.mxu0 %v601
    %763 = vmatpush.msra.mxu0 %v574
    %764 = vmatpush.msra.mxu0 %v547
    %765 = vmatpush.msra.mxu0 %v520
    %766 = vmatpush.msra.mxu0 %v492
    %767 = vmatmul.f32.gmra.mxu0 %v729
    %v768 = vpop.f32.mrf.mxu0
    %v769 = vadd.f32 %v726, %v768
    %770 = vdwg.mxu0
    %771 = vmatpush.msra.mxu0 0.0
    %772 = vmatpush.msra.mxu0 0.0
    %773 = vmatpush.msra.mxu0 0.0
    %774 = vmatpush.msra.mxu0 0.0
    %775 = vmatpush.msra.mxu0 0.0
    %776 = vmatpush.msra.mxu0 0.0
    %777 = vmatpush.msra.mxu0 0.0
    %778 = vmatpush.msra.mxu0 %v710
    %779 = vmatpush.msra.mxu0 %v683
    %780 = vmatpush.msra.mxu0 %v656
    %781 = vmatpush.msra.mxu0 %v629
    %782 = vmatpush.msra.mxu0 %v602
    %783 = vmatpush.msra.mxu0 %v575
    %784 = vmatpush.msra.mxu0 %v548
    %785 = vmatpush.msra.mxu0 %v521
    %786 = vmatpush.msra.mxu0 %v493
    %787 = vmatmul.f32.gmra.mxu0 %v729
    %v788 = vpop.f32.mrf.mxu0
    %v789 = vadd.f32 %v726, %v788
    %790 = vdwg.mxu0
    %791 = vmatpush.msra.mxu0 0.0
    %792 = vmatpush.msra.mxu0 0.0
    %793 = vmatpush.msra.mxu0 0.0
    %794 = vmatpush.msra.mxu0 0.0
    %795 = vmatpush.msra.mxu0 0.0
    %796 = vmatpush.msra.mxu0 0.0
    %797 = vmatpush.msra.mxu0 0.0
    %798 = vmatpush.msra.mxu0 %v711
    %799 = vmatpush.msra.mxu0 %v684
    %800 = vmatpush.msra.mxu0 %v657
    %801 = vmatpush.msra.mxu0 %v630
    %802 = vmatpush.msra.mxu0 %v603
    %803 = vmatpush.msra.mxu0 %v576
    %804 = vmatpush.msra.mxu0 %v549
    %805 = vmatpush.msra.mxu0 %v522
    %806 = vmatpush.msra.mxu0 %v494
    %807 = vmatmul.f32.gmra.mxu0 %v729
    %v808 = vpop.f32.mrf.mxu0
    %v809 = vadd.f32 %v726, %v808
    %810 = vdwg.mxu0
    %811 = vmatpush.msra.mxu0 0.0
    %812 = vmatpush.msra.mxu0 0.0
    %813 = vmatpush.msra.mxu0 0.0
    %814 = vmatpush.msra.mxu0 0.0
    %815 = vmatpush.msra.mxu0 0.0
    %816 = vmatpush.msra.mxu0 0.0
    %817 = vmatpush.msra.mxu0 0.0
    %818 = vmatpush.msra.mxu0 %v712
    %819 = vmatpush.msra.mxu0 %v685
    %820 = vmatpush.msra.mxu0 %v658
    %821 = vmatpush.msra.mxu0 %v631
    %822 = vmatpush.msra.mxu0 %v604
    %823 = vmatpush.msra.mxu0 %v577
    %824 = vmatpush.msra.mxu0 %v550
    %825 = vmatpush.msra.mxu0 %v523
    %826 = vmatpush.msra.mxu0 %v495
    %827 = vmatmul.f32.gmra.mxu0 %v729
    %v828 = vpop.f32.mrf.mxu0
    %v829 = vadd.f32 %v726, %v828
    %830 = vdwg.mxu0
    %831 = vmatpush.msra.mxu0 0.0
    %832 = vmatpush.msra.mxu0 0.0
    %833 = vmatpush.msra.mxu0 0.0
    %834 = vmatpush.msra.mxu0 0.0
    %835 = vmatpush.msra.mxu0 0.0
    %836 = vmatpush.msra.mxu0 0.0
    %837 = vmatpush.msra.mxu0 0.0
    %838 = vmatpush.msra.mxu0 %v713
    %839 = vmatpush.msra.mxu0 %v686
    %840 = vmatpush.msra.mxu0 %v659
    %841 = vmatpush.msra.mxu0 %v632
    %842 = vmatpush.msra.mxu0 %v605
    %843 = vmatpush.msra.mxu0 %v578
    %844 = vmatpush.msra.mxu0 %v551
    %845 = vmatpush.msra.mxu0 %v524
    %846 = vmatpush.msra.mxu0 %v496
    %847 = vmatmul.f32.gmra.mxu0 %v729
    %v848 = vpop.f32.mrf.mxu0
    %v849 = vadd.f32 %v726, %v848
    %850 = vdwg.mxu0
    %851 = vmatpush.msra.mxu0 0.0
    %852 = vmatpush.msra.mxu0 0.0
    %853 = vmatpush.msra.mxu0 0.0
    %854 = vmatpush.msra.mxu0 0.0
    %855 = vmatpush.msra.mxu0 0.0
    %856 = vmatpush.msra.mxu0 0.0
    %857 = vmatpush.msra.mxu0 0.0
    %858 = vmatpush.msra.mxu0 %v707
    %859 = vmatpush.msra.mxu0 %v680
    %860 = vmatpush.msra.mxu0 %v653
    %861 = vmatpush.msra.mxu0 %v626
    %862 = vmatpush.msra.mxu0 %v599
    %863 = vmatpush.msra.mxu0 %v572
    %864 = vmatpush.msra.mxu0 %v545
    %865 = vmatpush.msra.mxu0 %v518
    %866 = vmatpush.msra.mxu0 %v497
    %867 = vmatmul.f32.gmra.mxu0 %v729
    %v868 = vpop.f32.mrf.mxu0
    %v869 = vadd.f32 %v726, %v868
    %870 = vdwg.mxu0
    %871 = vst [vmem:[#allocation2] sm:$0xff] %v749
    %872 = vst [vmem:[#allocation2 + $0x8] sm:$0xff] %v769
    %873 = vst [vmem:[#allocation2 + $0x10] sm:$0xff] %v789
    %874 = vst [vmem:[#allocation2 + $0x18] sm:$0xff] %v809
    %875 = vst [vmem:[#allocation2 + $0x20] sm:$0xff] %v829
    %876 = vst [vmem:[#allocation2 + $0x28] sm:$0xff] %v849
    %877 = vst.msk [vmem:[#allocation2 + $0x30] sm:$0xff] %vm489, %v869
    %v878 = vld [vmem:[#allocation2] sm:$0xff]
    %v879 = vld [vmem:[#allocation2 + $0x8] sm:$0xff]
    %v880 = vld [vmem:[#allocation2 + $0x10] sm:$0xff]
    %v881 = vld [vmem:[#allocation2 + $0x18] sm:$0xff]
    %v882 = vld [vmem:[#allocation2 + $0x20] sm:$0xff]
    %v883 = vld [vmem:[#allocation2 + $0x28] sm:$0xff]
    %v884 = vld [vmem:[#allocation2 + $0x30] sm:$0xff]
    %892 = vrot.lane.b32.xlu0 %v878, 127
    %v893 = vpop.permute.xlu0 %892
    %894 = vrot.lane.b32.xlu0 %v879, 127
    %v895 = vpop.permute.xlu0 %894
    %896 = vrot.lane.b32.xlu0 %v880, 127
    %v897 = vpop.permute.xlu0 %896
    %898 = vrot.lane.b32.xlu0 %v881, 127
    %v899 = vpop.permute.xlu0 %898
    %900 = vrot.lane.b32.xlu0 %v882, 127
    %v901 = vpop.permute.xlu0 %900
    %902 = vrot.lane.b32.xlu0 %v883, 127
    %v903 = vpop.permute.xlu0 %902
    %904 = vrot.lane.b32.xlu0 %v884, 127
    %v905 = vpop.permute.xlu0 %904
    %v906 = vsel %vm122, %v893, %v895
    %v907 = vsel %vm122, %v895, %v897
    %v908 = vsel %vm122, %v897, %v899
    %v909 = vsel %vm122, %v899, %v901
    %v910 = vsel %vm122, %v901, %v903
    %v911 = vsel %vm122, %v903, %v905
    %919 = vrot.lane.b32.xlu0 %v878, 126
    %v920 = vpop.permute.xlu0 %919
    %921 = vrot.lane.b32.xlu0 %v879, 126
    %v922 = vpop.permute.xlu0 %921
    %923 = vrot.lane.b32.xlu0 %v880, 126
    %v924 = vpop.permute.xlu0 %923
    %925 = vrot.lane.b32.xlu0 %v881, 126
    %v926 = vpop.permute.xlu0 %925
    %927 = vrot.lane.b32.xlu0 %v882, 126
    %v928 = vpop.permute.xlu0 %927
    %929 = vrot.lane.b32.xlu0 %v883, 126
    %v930 = vpop.permute.xlu0 %929
    %931 = vrot.lane.b32.xlu0 %v884, 126
    %v932 = vpop.permute.xlu0 %931
    %v933 = vsel %vm150, %v920, %v922
    %v934 = vsel %vm150, %v922, %v924
    %v935 = vsel %vm150, %v924, %v926
    %v936 = vsel %vm150, %v926, %v928
    %v937 = vsel %vm150, %v928, %v930
    %v938 = vsel %vm150, %v930, %v932
    %946 = vrot.lane.b32.xlu0 %v878, 108
    %v947 = vpop.permute.xlu0 %946
    %948 = vrot.lane.b32.xlu0 %v879, 108
    %v949 = vpop.permute.xlu0 %948
    %950 = vrot.lane.b32.xlu0 %v880, 108
    %v951 = vpop.permute.xlu0 %950
    %952 = vrot.lane.b32.xlu0 %v881, 108
    %v953 = vpop.permute.xlu0 %952
    %954 = vrot.lane.b32.xlu0 %v882, 108
    %v955 = vpop.permute.xlu0 %954
    %956 = vrot.lane.b32.xlu0 %v883, 108
    %v957 = vpop.permute.xlu0 %956
    %958 = vrot.lane.b32.xlu0 %v884, 108
    %v959 = vpop.permute.xlu0 %958
    %v960 = vsel %vm178, %v947, %v949
    %v961 = vsel %vm178, %v949, %v951
    %v962 = vsel %vm178, %v951, %v953
    %v963 = vsel %vm178, %v953, %v955
    %v964 = vsel %vm178, %v955, %v957
    %v965 = vsel %vm178, %v957, %v959
    %973 = vrot.lane.b32.xlu0 %v878, 107
    %v974 = vpop.permute.xlu0 %973
    %975 = vrot.lane.b32.xlu0 %v879, 107
    %v976 = vpop.permute.xlu0 %975
    %977 = vrot.lane.b32.xlu0 %v880, 107
    %v978 = vpop.permute.xlu0 %977
    %979 = vrot.lane.b32.xlu0 %v881, 107
    %v980 = vpop.permute.xlu0 %979
    %981 = vrot.lane.b32.xlu0 %v882, 107
    %v982 = vpop.permute.xlu0 %981
    %983 = vrot.lane.b32.xlu0 %v883, 107
    %v984 = vpop.permute.xlu0 %983
    %985 = vrot.lane.b32.xlu0 %v884, 107
    %v986 = vpop.permute.xlu0 %985
    %v987 = vsel %vm206, %v974, %v976
    %v988 = vsel %vm206, %v976, %v978
    %v989 = vsel %vm206, %v978, %v980
    %v990 = vsel %vm206, %v980, %v982
    %v991 = vsel %vm206, %v982, %v984
    %v992 = vsel %vm206, %v984, %v986
    %1000 = vrot.lane.b32.xlu0 %v878, 106
    %v1001 = vpop.permute.xlu0 %1000
    %1002 = vrot.lane.b32.xlu0 %v879, 106
    %v1003 = vpop.permute.xlu0 %1002
    %1004 = vrot.lane.b32.xlu0 %v880, 106
    %v1005 = vpop.permute.xlu0 %1004
    %1006 = vrot.lane.b32.xlu0 %v881, 106
    %v1007 = vpop.permute.xlu0 %1006
    %1008 = vrot.lane.b32.xlu0 %v882, 106
    %v1009 = vpop.permute.xlu0 %1008
    %1010 = vrot.lane.b32.xlu0 %v883, 106
    %v1011 = vpop.permute.xlu0 %1010
    %1012 = vrot.lane.b32.xlu0 %v884, 106
    %v1013 = vpop.permute.xlu0 %1012
    %v1014 = vsel %vm234, %v1001, %v1003
    %v1015 = vsel %vm234, %v1003, %v1005
    %v1016 = vsel %vm234, %v1005, %v1007
    %v1017 = vsel %vm234, %v1007, %v1009
    %v1018 = vsel %vm234, %v1009, %v1011
    %v1019 = vsel %vm234, %v1011, %v1013
    %1027 = vrot.lane.b32.xlu0 %v878, 88
    %v1028 = vpop.permute.xlu0 %1027
    %1029 = vrot.lane.b32.xlu0 %v879, 88
    %v1030 = vpop.permute.xlu0 %1029
    %1031 = vrot.lane.b32.xlu0 %v880, 88
    %v1032 = vpop.permute.xlu0 %1031
    %1033 = vrot.lane.b32.xlu0 %v881, 88
    %v1034 = vpop.permute.xlu0 %1033
    %1035 = vrot.lane.b32.xlu0 %v882, 88
    %v1036 = vpop.permute.xlu0 %1035
    %1037 = vrot.lane.b32.xlu0 %v883, 88
    %v1038 = vpop.permute.xlu0 %1037
    %1039 = vrot.lane.b32.xlu0 %v884, 88
    %v1040 = vpop.permute.xlu0 %1039
    %v1041 = vsel %vm262, %v1028, %v1030
    %v1042 = vsel %vm262, %v1030, %v1032
    %v1043 = vsel %vm262, %v1032, %v1034
    %v1044 = vsel %vm262, %v1034, %v1036
    %v1045 = vsel %vm262, %v1036, %v1038
    %v1046 = vsel %vm262, %v1038, %v1040
    %1054 = vrot.lane.b32.xlu0 %v878, 87
    %v1055 = vpop.permute.xlu0 %1054
    %1056 = vrot.lane.b32.xlu0 %v879, 87
    %v1057 = vpop.permute.xlu0 %1056
    %1058 = vrot.lane.b32.xlu0 %v880, 87
    %v1059 = vpop.permute.xlu0 %1058
    %1060 = vrot.lane.b32.xlu0 %v881, 87
    %v1061 = vpop.permute.xlu0 %1060
    %1062 = vrot.lane.b32.xlu0 %v882, 87
    %v1063 = vpop.permute.xlu0 %1062
    %1064 = vrot.lane.b32.xlu0 %v883, 87
    %v1065 = vpop.permute.xlu0 %1064
    %1066 = vrot.lane.b32.xlu0 %v884, 87
    %v1067 = vpop.permute.xlu0 %1066
    %v1068 = vsel %vm290, %v1055, %v1057
    %v1069 = vsel %vm290, %v1057, %v1059
    %v1070 = vsel %vm290, %v1059, %v1061
    %v1071 = vsel %vm290, %v1061, %v1063
    %v1072 = vsel %vm290, %v1063, %v1065
    %v1073 = vsel %vm290, %v1065, %v1067
    %1081 = vrot.lane.b32.xlu0 %v878, 86
    %v1082 = vpop.permute.xlu0 %1081
    %1083 = vrot.lane.b32.xlu0 %v879, 86
    %v1084 = vpop.permute.xlu0 %1083
    %1085 = vrot.lane.b32.xlu0 %v880, 86
    %v1086 = vpop.permute.xlu0 %1085
    %1087 = vrot.lane.b32.xlu0 %v881, 86
    %v1088 = vpop.permute.xlu0 %1087
    %1089 = vrot.lane.b32.xlu0 %v882, 86
    %v1090 = vpop.permute.xlu0 %1089
    %1091 = vrot.lane.b32.xlu0 %v883, 86
    %v1092 = vpop.permute.xlu0 %1091
    %1093 = vrot.lane.b32.xlu0 %v884, 86
    %v1094 = vpop.permute.xlu0 %1093
    %v1095 = vsel %vm318, %v1082, %v1084
    %v1096 = vsel %vm318, %v1084, %v1086
    %v1097 = vsel %vm318, %v1086, %v1088
    %v1098 = vsel %vm318, %v1088, %v1090
    %v1099 = vsel %vm318, %v1090, %v1092
    %v1100 = vsel %vm318, %v1092, %v1094
    %v1108 = vld [vmem:[%s6] sm:$0xff]
    %v1109 = vld [vmem:[%s7] sm:$0xff]
    %1111 = vset.pattern.permute.xlu0 0
    %1112 = vperm.xlu0 %1111, %v1109
    %v1113 = vpop.permute.xlu0 %1112
    %v1116 = vsel %vm339, %v1108, 0
    %1118 = vmatpush.msra.mxu0 0.0
    %1119 = vmatpush.msra.mxu0 0.0
    %1120 = vmatpush.msra.mxu0 0.0
    %1121 = vmatpush.msra.mxu0 0.0
    %1122 = vmatpush.msra.mxu0 0.0
    %1123 = vmatpush.msra.mxu0 0.0
    %1124 = vmatpush.msra.mxu0 0.0
    %1125 = vmatpush.msra.mxu0 %v1095
    %1126 = vmatpush.msra.mxu0 %v1068
    %1127 = vmatpush.msra.mxu0 %v1041
    %1128 = vmatpush.msra.mxu0 %v1014
    %1129 = vmatpush.msra.mxu0 %v987
    %1130 = vmatpush.msra.mxu0 %v960
    %1131 = vmatpush.msra.mxu0 %v933
    %1132 = vmatpush.msra.mxu0 %v906
    %1133 = vmatpush.msra.mxu0 %v878
    %1134 = vmatmul.f32.gmra.mxu0 %v1116
    %v1135 = vpop.f32.mrf.mxu0
    %v1136 = vadd.f32 %v1113, %v1135
    %1137 = vdwg.mxu0
    %1138 = vmatpush.msra.mxu0 0.0
    %1139 = vmatpush.msra.mxu0 0.0
    %1140 = vmatpush.msra.mxu0 0.0
    %1141 = vmatpush.msra.mxu0 0.0
    %1142 = vmatpush.msra.mxu0 0.0
    %1143 = vmatpush.msra.mxu0 0.0
    %1144 = vmatpush.msra.mxu0 0.0
    %1145 = vmatpush.msra.mxu0 %v1096
    %1146 = vmatpush.msra.mxu0 %v1069
    %1147 = vmatpush.msra.mxu0 %v1042
    %1148 = vmatpush.msra.mxu0 %v1015
    %1149 = vmatpush.msra.mxu0 %v988
    %1150 = vmatpush.msra.mxu0 %v961
    %1151 = vmatpush.msra.mxu0 %v934
    %1152 = vmatpush.msra.mxu0 %v907
    %1153 = vmatpush.msra.mxu0 %v879
    %1154 = vmatmul.f32.gmra.mxu0 %v1116
    %v1155 = vpop.f32.mrf.mxu0
    %v1156 = vadd.f32 %v1113, %v1155
    %1157 = vdwg.mxu0
    %1158 = vmatpush.msra.mxu0 0.0
    %1159 = vmatpush.msra.mxu0 0.0
    %1160 = vmatpush.msra.mxu0 0.0
    %1161 = vmatpush.msra.mxu0 0.0
    %1162 = vmatpush.msra.mxu0 0.0
    %1163 = vmatpush.msra.mxu0 0.0
    %1164 = vmatpush.msra.mxu0 0.0
    %1165 = vmatpush.msra.mxu0 %v1097
    %1166 = vmatpush.msra.mxu0 %v1070
    %1167 = vmatpush.msra.mxu0 %v1043
    %1168 = vmatpush.msra.mxu0 %v1016
    %1169 = vmatpush.msra.mxu0 %v989
    %1170 = vmatpush.msra.mxu0 %v962
    %1171 = vmatpush.msra.mxu0 %v935
    %1172 = vmatpush.msra.mxu0 %v908
    %1173 = vmatpush.msra.mxu0 %v880
    %1174 = vmatmul.f32.gmra.mxu0 %v1116
    %v1175 = vpop.f32.mrf.mxu0
    %v1176 = vadd.f32 %v1113, %v1175
    %1177 = vdwg.mxu0
    %1178 = vmatpush.msra.mxu0 0.0
    %1179 = vmatpush.msra.mxu0 0.0
    %1180 = vmatpush.msra.mxu0 0.0
    %1181 = vmatpush.msra.mxu0 0.0
    %1182 = vmatpush.msra.mxu0 0.0
    %1183 = vmatpush.msra.mxu0 0.0
    %1184 = vmatpush.msra.mxu0 0.0
    %1185 = vmatpush.msra.mxu0 %v1098
    %1186 = vmatpush.msra.mxu0 %v1071
    %1187 = vmatpush.msra.mxu0 %v1044
    %1188 = vmatpush.msra.mxu0 %v1017
    %1189 = vmatpush.msra.mxu0 %v990
    %1190 = vmatpush.msra.mxu0 %v963
    %1191 = vmatpush.msra.mxu0 %v936
    %1192 = vmatpush.msra.mxu0 %v909
    %1193 = vmatpush.msra.mxu0 %v881
    %1194 = vmatmul.f32.gmra.mxu0 %v1116
    %v1195 = vpop.f32.mrf.mxu0
    %v1196 = vadd.f32 %v1113, %v1195
    %1197 = vdwg.mxu0
    %1198 = vmatpush.msra.mxu0 0.0
    %1199 = vmatpush.msra.mxu0 0.0
    %1200 = vmatpush.msra.mxu0 0.0
    %1201 = vmatpush.msra.mxu0 0.0
    %1202 = vmatpush.msra.mxu0 0.0
    %1203 = vmatpush.msra.mxu0 0.0
    %1204 = vmatpush.msra.mxu0 0.0
    %1205 = vmatpush.msra.mxu0 %v1099
    %1206 = vmatpush.msra.mxu0 %v1072
    %1207 = vmatpush.msra.mxu0 %v1045
    %1208 = vmatpush.msra.mxu0 %v1018
    %1209 = vmatpush.msra.mxu0 %v991
    %1210 = vmatpush.msra.mxu0 %v964
    %1211 = vmatpush.msra.mxu0 %v937
    %1212 = vmatpush.msra.mxu0 %v910
    %1213 = vmatpush.msra.mxu0 %v882
    %1214 = vmatmul.f32.gmra.mxu0 %v1116
    %v1215 = vpop.f32.mrf.mxu0
    %v1216 = vadd.f32 %v1113, %v1215
    %1217 = vdwg.mxu0
    %1218 = vmatpush.msra.mxu0 0.0
    %1219 = vmatpush.msra.mxu0 0.0
    %1220 = vmatpush.msra.mxu0 0.0
    %1221 = vmatpush.msra.mxu0 0.0
    %1222 = vmatpush.msra.mxu0 0.0
    %1223 = vmatpush.msra.mxu0 0.0
    %1224 = vmatpush.msra.mxu0 0.0
    %1225 = vmatpush.msra.mxu0 %v1100
    %1226 = vmatpush.msra.mxu0 %v1073
    %1227 = vmatpush.msra.mxu0 %v1046
    %1228 = vmatpush.msra.mxu0 %v1019
    %1229 = vmatpush.msra.mxu0 %v992
    %1230 = vmatpush.msra.mxu0 %v965
    %1231 = vmatpush.msra.mxu0 %v938
    %1232 = vmatpush.msra.mxu0 %v911
    %1233 = vmatpush.msra.mxu0 %v883
    %1234 = vmatmul.f32.gmra.mxu0 %v1116
    %v1235 = vpop.f32.mrf.mxu0
    %v1236 = vadd.f32 %v1113, %v1235
    %1237 = vdwg.mxu0
    %1238 = vmatpush.msra.mxu0 0.0
    %1239 = vmatpush.msra.mxu0 0.0
    %1240 = vmatpush.msra.mxu0 0.0
    %1241 = vmatpush.msra.mxu0 0.0
    %1242 = vmatpush.msra.mxu0 0.0
    %1243 = vmatpush.msra.mxu0 0.0
    %1244 = vmatpush.msra.mxu0 0.0
    %1245 = vmatpush.msra.mxu0 %v1094
    %1246 = vmatpush.msra.mxu0 %v1067
    %1247 = vmatpush.msra.mxu0 %v1040
    %1248 = vmatpush.msra.mxu0 %v1013
    %1249 = vmatpush.msra.mxu0 %v986
    %1250 = vmatpush.msra.mxu0 %v959
    %1251 = vmatpush.msra.mxu0 %v932
    %1252 = vmatpush.msra.mxu0 %v905
    %1253 = vmatpush.msra.mxu0 %v884
    %1254 = vmatmul.f32.gmra.mxu0 %v1116
    %v1255 = vpop.f32.mrf.mxu0
    %v1256 = vadd.f32 %v1113, %v1255
    %1257 = vdwg.mxu0
    %v1258 = vsub.f32 0.0, %v1136
    %v1259 = vsub.f32 0.0, %v1156
    %v1260 = vsub.f32 0.0, %v1176
    %v1261 = vsub.f32 0.0, %v1196
    %v1262 = vsub.f32 0.0, %v1216
    %v1263 = vsub.f32 0.0, %v1236
    %v1264 = vsub.f32 0.0, %v1256
    %v1265 = vmul.f32 %v1258, 1.442695
    %v1266 = vpow.pop %v1265
    %v1267 = vmul.f32 %v1259, 1.442695
    %v1268 = vpow.pop %v1267
    %v1269 = vmul.f32 %v1260, 1.442695
    %v1270 = vpow.pop %v1269
    %v1271 = vmul.f32 %v1261, 1.442695
    %v1272 = vpow.pop %v1271
    %v1273 = vmul.f32 %v1262, 1.442695
    %v1274 = vpow.pop %v1273
    %v1275 = vmul.f32 %v1263, 1.442695
    %v1276 = vpow.pop %v1275
    %v1277 = vmul.f32 %v1264, 1.442695
    %v1278 = vpow.pop %v1277
    %v1279 = vadd.f32 %v1266, 1.0
    %v1280 = vadd.f32 %v1268, 1.0
    %v1281 = vadd.f32 %v1270, 1.0
    %v1282 = vadd.f32 %v1272, 1.0
    %v1283 = vadd.f32 %v1274, 1.0
    %v1284 = vadd.f32 %v1276, 1.0
    %v1285 = vadd.f32 %v1278, 1.0
    %v1286 = vrcp.pop %v1279
    %v1287 = vmul.f32 %v1279, %v1286
    %v1288 = vsub.f32 1.0, %v1287
    %v1289 = vmul.f32 %v1286, %v1288
    %v1290 = vadd.f32 %v1286, %v1289
    %vm1291 = vweird.f32 %v1279
    %vm1292 = vweird.f32 %v1286
    %vm1293 = vmor %vm1291, %vm1292
    %v1294 = vsel %vm1293, %v1286, %v1290
    %v1295 = vand.u32 2147483647, %v1279
    %vm1296 = vcmp.eq.f32.partialorder %v1295, 8.507059e+37
    %v1297 = vand.u32 %v1279, 2147483648
    %v1298 = vor.u32 1.1754944e-38, %v1297
    %v1299 = vsel %vm1296, %v1298, %v1294
    %v1300 = vmul.f32 1.0, %v1299
    %v1301 = vrcp.pop %v1280
    %v1302 = vmul.f32 %v1280, %v1301
    %v1303 = vsub.f32 1.0, %v1302
    %v1304 = vmul.f32 %v1301, %v1303
    %v1305 = vadd.f32 %v1301, %v1304
    %vm1306 = vweird.f32 %v1280
    %vm1307 = vweird.f32 %v1301
    %vm1308 = vmor %vm1306, %vm1307
    %v1309 = vsel %vm1308, %v1301, %v1305
    %v1310 = vand.u32 2147483647, %v1280
    %vm1311 = vcmp.eq.f32.partialorder %v1310, 8.507059e+37
    %v1312 = vand.u32 %v1280, 2147483648
    %v1313 = vor.u32 1.1754944e-38, %v1312
    %v1314 = vsel %vm1311, %v1313, %v1309
    %v1315 = vmul.f32 1.0, %v1314
    %v1316 = vrcp.pop %v1281
    %v1317 = vmul.f32 %v1281, %v1316
    %v1318 = vsub.f32 1.0, %v1317
    %v1319 = vmul.f32 %v1316, %v1318
    %v1320 = vadd.f32 %v1316, %v1319
    %vm1321 = vweird.f32 %v1281
    %vm1322 = vweird.f32 %v1316
    %vm1323 = vmor %vm1321, %vm1322
    %v1324 = vsel %vm1323, %v1316, %v1320
    %v1325 = vand.u32 2147483647, %v1281
    %vm1326 = vcmp.eq.f32.partialorder %v1325, 8.507059e+37
    %v1327 = vand.u32 %v1281, 2147483648
    %v1328 = vor.u32 1.1754944e-38, %v1327
    %v1329 = vsel %vm1326, %v1328, %v1324
    %v1330 = vmul.f32 1.0, %v1329
    %v1331 = vrcp.pop %v1282
    %v1332 = vmul.f32 %v1282, %v1331
    %v1333 = vsub.f32 1.0, %v1332
    %v1334 = vmul.f32 %v1331, %v1333
    %v1335 = vadd.f32 %v1331, %v1334
    %vm1336 = vweird.f32 %v1282
    %vm1337 = vweird.f32 %v1331
    %vm1338 = vmor %vm1336, %vm1337
    %v1339 = vsel %vm1338, %v1331, %v1335
    %v1340 = vand.u32 2147483647, %v1282
    %vm1341 = vcmp.eq.f32.partialorder %v1340, 8.507059e+37
    %v1342 = vand.u32 %v1282, 2147483648
    %v1343 = vor.u32 1.1754944e-38, %v1342
    %v1344 = vsel %vm1341, %v1343, %v1339
    %v1345 = vmul.f32 1.0, %v1344
    %v1346 = vrcp.pop %v1283
    %v1347 = vmul.f32 %v1283, %v1346
    %v1348 = vsub.f32 1.0, %v1347
    %v1349 = vmul.f32 %v1346, %v1348
    %v1350 = vadd.f32 %v1346, %v1349
    %vm1351 = vweird.f32 %v1283
    %vm1352 = vweird.f32 %v1346
    %vm1353 = vmor %vm1351, %vm1352
    %v1354 = vsel %vm1353, %v1346, %v1350
    %v1355 = vand.u32 2147483647, %v1283
    %vm1356 = vcmp.eq.f32.partialorder %v1355, 8.507059e+37
    %v1357 = vand.u32 %v1283, 2147483648
    %v1358 = vor.u32 1.1754944e-38, %v1357
    %v1359 = vsel %vm1356, %v1358, %v1354
    %v1360 = vmul.f32 1.0, %v1359
    %v1361 = vrcp.pop %v1284
    %v1362 = vmul.f32 %v1284, %v1361
    %v1363 = vsub.f32 1.0, %v1362
    %v1364 = vmul.f32 %v1361, %v1363
    %v1365 = vadd.f32 %v1361, %v1364
    %vm1366 = vweird.f32 %v1284
    %vm1367 = vweird.f32 %v1361
    %vm1368 = vmor %vm1366, %vm1367
    %v1369 = vsel %vm1368, %v1361, %v1365
    %v1370 = vand.u32 2147483647, %v1284
    %vm1371 = vcmp.eq.f32.partialorder %v1370, 8.507059e+37
    %v1372 = vand.u32 %v1284, 2147483648
    %v1373 = vor.u32 1.1754944e-38, %v1372
    %v1374 = vsel %vm1371, %v1373, %v1369
    %v1375 = vmul.f32 1.0, %v1374
    %v1376 = vrcp.pop %v1285
    %v1377 = vmul.f32 %v1285, %v1376
    %v1378 = vsub.f32 1.0, %v1377
    %v1379 = vmul.f32 %v1376, %v1378
    %v1380 = vadd.f32 %v1376, %v1379
    %vm1381 = vweird.f32 %v1285
    %vm1382 = vweird.f32 %v1376
    %vm1383 = vmor %vm1381, %vm1382
    %v1384 = vsel %vm1383, %v1376, %v1380
    %v1385 = vand.u32 2147483647, %v1285
    %vm1386 = vcmp.eq.f32.partialorder %v1385, 8.507059e+37
    %v1387 = vand.u32 %v1285, 2147483648
    %v1388 = vor.u32 1.1754944e-38, %v1387
    %v1389 = vsel %vm1386, %v1388, %v1384
    %v1390 = vmul.f32 1.0, %v1389
    %v1391 = vld [vmem:[%s1] sm:$0xff]
    %v1392 = vld [vmem:[%s1 + $0x8] sm:$0xff]
    %v1393 = vld [vmem:[%s1 + $0x10] sm:$0xff]
    %v1394 = vld [vmem:[%s1 + $0x18] sm:$0xff]
    %v1395 = vld [vmem:[%s1 + $0x20] sm:$0xff]
    %v1396 = vld [vmem:[%s1 + $0x28] sm:$0xff]
    %v1397 = vld [vmem:[%s1 + $0x30] sm:$0xff]
    %s1398 = scalar_lea.vmem %s1, 56
    %v1399 = vld [vmem:[%s1398] sm:$0xff]
    %v1400 = vld [vmem:[%s1398 + $0x8] sm:$0xff]
    %v1401 = vld [vmem:[%s1398 + $0x10] sm:$0xff]
    %v1402 = vld [vmem:[%s1398 + $0x18] sm:$0xff]
    %v1403 = vld [vmem:[%s1398 + $0x20] sm:$0xff]
    %v1404 = vld [vmem:[%s1398 + $0x28] sm:$0xff]
    %v1405 = vld [vmem:[%s1398 + $0x30] sm:$0xff]
    %s1406 = scalar_lea.vmem %s1, 112
    %v1407 = vld [vmem:[%s1406] sm:$0xff]
    %v1408 = vld [vmem:[%s1406 + $0x8] sm:$0xff]
    %v1409 = vld [vmem:[%s1406 + $0x10] sm:$0xff]
    %v1410 = vld [vmem:[%s1406 + $0x18] sm:$0xff]
    %v1411 = vld [vmem:[%s1406 + $0x20] sm:$0xff]
    %v1412 = vld [vmem:[%s1406 + $0x28] sm:$0xff]
    %v1413 = vld [vmem:[%s1406 + $0x30] sm:$0xff]
    %s1414 = scalar_lea.vmem %s1, 168
    %v1415 = vld [vmem:[%s1414] sm:$0xff]
    %v1416 = vld [vmem:[%s1414 + $0x8] sm:$0xff]
    %v1417 = vld [vmem:[%s1414 + $0x10] sm:$0xff]
    %v1418 = vld [vmem:[%s1414 + $0x18] sm:$0xff]
    %v1419 = vld [vmem:[%s1414 + $0x20] sm:$0xff]
    %v1420 = vld [vmem:[%s1414 + $0x28] sm:$0xff]
    %v1421 = vld [vmem:[%s1414 + $0x30] sm:$0xff]
    %v1422 = vld [vmem:[%s12] sm:$0xff]
    %s1423 = scalar_lea.vmem %s12, 8
    %v1424 = vld [vmem:[%s1423] sm:$0xff]
    %s1425 = scalar_lea.vmem %s12, 16
    %v1426 = vld [vmem:[%s1425] sm:$0xff]
    %s1427 = scalar_lea.vmem %s12, 24
    %v1428 = vld [vmem:[%s1427] sm:$0xff]
    %s1429 = scalar_lea.vmem %s12, 32
    %v1430 = vld [vmem:[%s1429] sm:$0xff]
    %s1431 = scalar_lea.vmem %s12, 40
    %v1432 = vld [vmem:[%s1431] sm:$0xff]
    %s1433 = scalar_lea.vmem %s12, 48
    %v1434 = vld [vmem:[%s1433] sm:$0xff]
    %1436 = vset.pattern.permute.xlu0 0
    %1437 = vperm.xlu0 %1436, %v1422
    %v1438 = vpop.permute.xlu0 %1437
    %v1440 = vmul.f32 %v1438, %v1300
    %v1441 = vmul.f32 %v1438, %v1315
    %v1442 = vmul.f32 %v1438, %v1330
    %v1443 = vmul.f32 %v1438, %v1345
    %v1444 = vmul.f32 %v1438, %v1360
    %v1445 = vmul.f32 %v1438, %v1375
    %v1446 = vmul.f32 %v1438, %v1390
    %1448 = vset.pattern.permute.xlu0 0
    %1449 = vperm.xlu0 %1448, %v1426
    %v1450 = vpop.permute.xlu0 %1449
    %v1452 = vmul.f32 %v1450, %v1407
    %v1453 = vmul.f32 %v1450, %v1408
    %v1454 = vmul.f32 %v1450, %v1409
    %v1455 = vmul.f32 %v1450, %v1410
    %v1456 = vmul.f32 %v1450, %v1411
    %v1457 = vmul.f32 %v1450, %v1412
    %v1458 = vmul.f32 %v1450, %v1413
    %v1459 = vmul.f32 %v1440, %v1391
    %v1460 = vmul.f32 %v1441, %v1392
    %v1461 = vmul.f32 %v1442, %v1393
    %v1462 = vmul.f32 %v1443, %v1394
    %v1463 = vmul.f32 %v1444, %v1395
    %v1464 = vmul.f32 %v1445, %v1396
    %v1465 = vmul.f32 %v1446, %v1397
    %v1466 = vsub.f32 %v1452, %v1459
    %v1467 = vsub.f32 %v1453, %v1460
    %v1468 = vsub.f32 %v1454, %v1461
    %v1469 = vsub.f32 %v1455, %v1462
    %v1470 = vsub.f32 %v1456, %v1463
    %v1471 = vsub.f32 %v1457, %v1464
    %v1472 = vsub.f32 %v1458, %v1465
    %v1473 = vmul.f32 %v1466, 0.01
    %v1474 = vmul.f32 %v1467, 0.01
    %v1475 = vmul.f32 %v1468, 0.01
    %v1476 = vmul.f32 %v1469, 0.01
    %v1477 = vmul.f32 %v1470, 0.01
    %v1478 = vmul.f32 %v1471, 0.01
    %v1479 = vmul.f32 %v1472, 0.01
    %v1480 = vadd.f32 %v1391, %v1473
    %v1481 = vadd.f32 %v1392, %v1474
    %v1482 = vadd.f32 %v1393, %v1475
    %v1483 = vadd.f32 %v1394, %v1476
    %v1484 = vadd.f32 %v1395, %v1477
    %v1485 = vadd.f32 %v1396, %v1478
    %v1486 = vadd.f32 %v1397, %v1479
    %1488 = vset.pattern.permute.xlu0 0
    %1489 = vperm.xlu0 %1488, %v1424
    %v1490 = vpop.permute.xlu0 %1489
    %v1492 = vmul.f32 %v1490, %v1399
    %v1493 = vmul.f32 %v1490, %v1400
    %v1494 = vmul.f32 %v1490, %v1401
    %v1495 = vmul.f32 %v1490, %v1402
    %v1496 = vmul.f32 %v1490, %v1403
    %v1497 = vmul.f32 %v1490, %v1404
    %v1498 = vmul.f32 %v1490, %v1405
    %v1499 = vsub.f32 %v1459, %v1492
    %v1500 = vsub.f32 %v1460, %v1493
    %v1501 = vsub.f32 %v1461, %v1494
    %v1502 = vsub.f32 %v1462, %v1495
    %v1503 = vsub.f32 %v1463, %v1496
    %v1504 = vsub.f32 %v1464, %v1497
    %v1505 = vsub.f32 %v1465, %v1498
    %v1506 = vmul.f32 %v1499, 0.01
    %v1507 = vmul.f32 %v1500, 0.01
    %v1508 = vmul.f32 %v1501, 0.01
    %v1509 = vmul.f32 %v1502, 0.01
    %v1510 = vmul.f32 %v1503, 0.01
    %v1511 = vmul.f32 %v1504, 0.01
    %v1512 = vmul.f32 %v1505, 0.01
    %v1513 = vadd.f32 %v1399, %v1506
    %v1514 = vadd.f32 %v1400, %v1507
    %v1515 = vadd.f32 %v1401, %v1508
    %v1516 = vadd.f32 %v1402, %v1509
    %v1517 = vadd.f32 %v1403, %v1510
    %v1518 = vadd.f32 %v1404, %v1511
    %v1519 = vadd.f32 %v1405, %v1512
    %1521 = vset.pattern.permute.xlu0 0
    %1522 = vperm.xlu0 %1521, %v1430
    %v1523 = vpop.permute.xlu0 %1522
    %v1525 = vmul.f32 %v1523, %v1415
    %v1526 = vmul.f32 %v1523, %v1416
    %v1527 = vmul.f32 %v1523, %v1417
    %v1528 = vmul.f32 %v1523, %v1418
    %v1529 = vmul.f32 %v1523, %v1419
    %v1530 = vmul.f32 %v1523, %v1420
    %v1531 = vmul.f32 %v1523, %v1421
    %v1532 = vadd.f32 %v1492, %v1525
    %v1533 = vadd.f32 %v1493, %v1526
    %v1534 = vadd.f32 %v1494, %v1527
    %v1535 = vadd.f32 %v1495, %v1528
    %v1536 = vadd.f32 %v1496, %v1529
    %v1537 = vadd.f32 %v1497, %v1530
    %v1538 = vadd.f32 %v1498, %v1531
    %v1539 = vadd.f32 %v1426, %v1428
    %1541 = vset.pattern.permute.xlu0 0
    %1542 = vperm.xlu0 %1541, %v1539
    %v1543 = vpop.permute.xlu0 %1542
    %v1545 = vmul.f32 %v1543, %v1407
    %v1546 = vmul.f32 %v1543, %v1408
    %v1547 = vmul.f32 %v1543, %v1409
    %v1548 = vmul.f32 %v1543, %v1410
    %v1549 = vmul.f32 %v1543, %v1411
    %v1550 = vmul.f32 %v1543, %v1412
    %v1551 = vmul.f32 %v1543, %v1413
    %v1552 = vsub.f32 %v1532, %v1545
    %v1553 = vsub.f32 %v1533, %v1546
    %v1554 = vsub.f32 %v1534, %v1547
    %v1555 = vsub.f32 %v1535, %v1548
    %v1556 = vsub.f32 %v1536, %v1549
    %v1557 = vsub.f32 %v1537, %v1550
    %v1558 = vsub.f32 %v1538, %v1551
    %v1559 = vmul.f32 %v1552, 0.01
    %v1560 = vmul.f32 %v1553, 0.01
    %v1561 = vmul.f32 %v1554, 0.01
    %v1562 = vmul.f32 %v1555, 0.01
    %v1563 = vmul.f32 %v1556, 0.01
    %v1564 = vmul.f32 %v1557, 0.01
    %v1565 = vmul.f32 %v1558, 0.01
    %v1566 = vadd.f32 %v1407, %v1559
    %v1567 = vadd.f32 %v1408, %v1560
    %v1568 = vadd.f32 %v1409, %v1561
    %v1569 = vadd.f32 %v1410, %v1562
    %v1570 = vadd.f32 %v1411, %v1563
    %v1571 = vadd.f32 %v1412, %v1564
    %v1572 = vadd.f32 %v1413, %v1565
    %1574 = vset.pattern.permute.xlu0 0
    %1575 = vperm.xlu0 %1574, %v1428
    %v1576 = vpop.permute.xlu0 %1575
    %v1578 = vmul.f32 %v1576, %v1407
    %v1579 = vmul.f32 %v1576, %v1408
    %v1580 = vmul.f32 %v1576, %v1409
    %v1581 = vmul.f32 %v1576, %v1410
    %v1582 = vmul.f32 %v1576, %v1411
    %v1583 = vmul.f32 %v1576, %v1412
    %v1584 = vmul.f32 %v1576, %v1413
    %v1585 = vsub.f32 %v1578, %v1525
    %v1586 = vsub.f32 %v1579, %v1526
    %v1587 = vsub.f32 %v1580, %v1527
    %v1588 = vsub.f32 %v1581, %v1528
    %v1589 = vsub.f32 %v1582, %v1529
    %v1590 = vsub.f32 %v1583, %v1530
    %v1591 = vsub.f32 %v1584, %v1531
    %v1592 = vmul.f32 %v1585, 0.01
    %v1593 = vmul.f32 %v1586, 0.01
    %v1594 = vmul.f32 %v1587, 0.01
    %v1595 = vmul.f32 %v1588, 0.01
    %v1596 = vmul.f32 %v1589, 0.01
    %v1597 = vmul.f32 %v1590, 0.01
    %v1598 = vmul.f32 %v1591, 0.01
    %v1599 = vadd.f32 %v1415, %v1592
    %v1600 = vadd.f32 %v1416, %v1593
    %v1601 = vadd.f32 %v1417, %v1594
    %v1602 = vadd.f32 %v1418, %v1595
    %v1603 = vadd.f32 %v1419, %v1596
    %v1604 = vadd.f32 %v1420, %v1597
    %v1605 = vadd.f32 %v1421, %v1598
    %1606 = vst [vmem:[%s15] sm:$0xff] %v1480
    %1607 = vst [vmem:[%s15 + $0x8] sm:$0xff] %v1481
    %1608 = vst [vmem:[%s15 + $0x10] sm:$0xff] %v1482
    %1609 = vst [vmem:[%s15 + $0x18] sm:$0xff] %v1483
    %1610 = vst [vmem:[%s15 + $0x20] sm:$0xff] %v1484
    %1611 = vst [vmem:[%s15 + $0x28] sm:$0xff] %v1485
    %1612 = vst.msk [vmem:[%s15 + $0x30] sm:$0xff] %vm489, %v1486
    %s1613 = scalar_lea.vmem %s15, 56
    %1614 = vst [vmem:[%s1613] sm:$0xff] %v1513
    %1615 = vst [vmem:[%s1613 + $0x8] sm:$0xff] %v1514
    %1616 = vst [vmem:[%s1613 + $0x10] sm:$0xff] %v1515
    %1617 = vst [vmem:[%s1613 + $0x18] sm:$0xff] %v1516
    %1618 = vst [vmem:[%s1613 + $0x20] sm:$0xff] %v1517
    %1619 = vst [vmem:[%s1613 + $0x28] sm:$0xff] %v1518
    %1620 = vst.msk [vmem:[%s1613 + $0x30] sm:$0xff] %vm489, %v1519
    %s1621 = scalar_lea.vmem %s15, 112
    %1622 = vst [vmem:[%s1621] sm:$0xff] %v1566
    %1623 = vst [vmem:[%s1621 + $0x8] sm:$0xff] %v1567
    %1624 = vst [vmem:[%s1621 + $0x10] sm:$0xff] %v1568
    %1625 = vst [vmem:[%s1621 + $0x18] sm:$0xff] %v1569
    %1626 = vst [vmem:[%s1621 + $0x20] sm:$0xff] %v1570
    %1627 = vst [vmem:[%s1621 + $0x28] sm:$0xff] %v1571
    %1628 = vst.msk [vmem:[%s1621 + $0x30] sm:$0xff] %vm489, %v1572
    %s1629 = scalar_lea.vmem %s15, 168
    %1630 = vst [vmem:[%s1629] sm:$0xff] %v1599
    %1631 = vst [vmem:[%s1629 + $0x8] sm:$0xff] %v1600
    %1632 = vst [vmem:[%s1629 + $0x10] sm:$0xff] %v1601
    %1633 = vst [vmem:[%s1629 + $0x18] sm:$0xff] %v1602
    %1634 = vst [vmem:[%s1629 + $0x20] sm:$0xff] %v1603
    %1635 = vst [vmem:[%s1629 + $0x28] sm:$0xff] %v1604
    %1636 = vst.msk [vmem:[%s1629 + $0x30] sm:$0xff] %vm489, %v1605
    %1638 = vset.pattern.permute.xlu0 0
    %1639 = vperm.xlu0 %1638, %v1432
    %v1640 = vpop.permute.xlu0 %1639
    %v1642 = vmul.f32 %v1640, %v1513
    %v1643 = vmul.f32 %v1640, %v1514
    %v1644 = vmul.f32 %v1640, %v1515
    %v1645 = vmul.f32 %v1640, %v1516
    %v1646 = vmul.f32 %v1640, %v1517
    %v1647 = vmul.f32 %v1640, %v1518
    %v1648 = vmul.f32 %v1640, %v1519
    %1650 = vset.pattern.permute.xlu0 0
    %1651 = vperm.xlu0 %1650, %v1434
    %v1652 = vpop.permute.xlu0 %1651
    %v1654 = vadd.f32 %v1642, %v1652
    %v1655 = vadd.f32 %v1643, %v1652
    %v1656 = vadd.f32 %v1644, %v1652
    %v1657 = vadd.f32 %v1645, %v1652
    %v1658 = vadd.f32 %v1646, %v1652
    %v1659 = vadd.f32 %v1647, %v1652
    %v1660 = vadd.f32 %v1648, %v1652
    %v1661 = vmax.f32 %v1654, 0.0
    %v1662 = vmax.f32 %v1655, 0.0
    %v1663 = vmax.f32 %v1656, 0.0
    %v1664 = vmax.f32 %v1657, 0.0
    %v1665 = vmax.f32 %v1658, 0.0
    %v1666 = vmax.f32 %v1659, 0.0
    %v1667 = vmax.f32 %v1660, 0.0
    %1668 = vst [vmem:[#allocation2] sm:$0xff] %v1661
    %1669 = vst [vmem:[#allocation2 + $0x8] sm:$0xff] %v1662
    %1670 = vst [vmem:[#allocation2 + $0x10] sm:$0xff] %v1663
    %1671 = vst [vmem:[#allocation2 + $0x18] sm:$0xff] %v1664
    %1672 = vst [vmem:[#allocation2 + $0x20] sm:$0xff] %v1665
    %1673 = vst [vmem:[#allocation2 + $0x28] sm:$0xff] %v1666
    %1674 = vst.msk [vmem:[#allocation2 + $0x30] sm:$0xff] %vm489, %v1667
    %v1675 = vld [vmem:[#allocation2] sm:$0xff]
    %v1676 = vld [vmem:[#allocation2 + $0x8] sm:$0xff]
    %v1677 = vld [vmem:[#allocation2 + $0x10] sm:$0xff]
    %v1678 = vld [vmem:[#allocation2 + $0x18] sm:$0xff]
    %v1679 = vld [vmem:[#allocation2 + $0x20] sm:$0xff]
    %v1680 = vld [vmem:[#allocation2 + $0x28] sm:$0xff]
    %v1681 = vld [vmem:[#allocation2 + $0x30] sm:$0xff]
    %1689 = vrot.lane.b32.xlu0 %v1675, 127
    %v1690 = vpop.permute.xlu0 %1689
    %1691 = vrot.lane.b32.xlu0 %v1676, 127
    %v1692 = vpop.permute.xlu0 %1691
    %1693 = vrot.lane.b32.xlu0 %v1677, 127
    %v1694 = vpop.permute.xlu0 %1693
    %1695 = vrot.lane.b32.xlu0 %v1678, 127
    %v1696 = vpop.permute.xlu0 %1695
    %1697 = vrot.lane.b32.xlu0 %v1679, 127
    %v1698 = vpop.permute.xlu0 %1697
    %1699 = vrot.lane.b32.xlu0 %v1680, 127
    %v1700 = vpop.permute.xlu0 %1699
    %1701 = vrot.lane.b32.xlu0 %v1681, 127
    %v1702 = vpop.permute.xlu0 %1701
    %v1703 = vsel %vm122, %v1690, %v1692
    %v1704 = vsel %vm122, %v1692, %v1694
    %v1705 = vsel %vm122, %v1694, %v1696
    %v1706 = vsel %vm122, %v1696, %v1698
    %v1707 = vsel %vm122, %v1698, %v1700
    %v1708 = vsel %vm122, %v1700, %v1702
    %1716 = vrot.lane.b32.xlu0 %v1675, 126
    %v1717 = vpop.permute.xlu0 %1716
    %1718 = vrot.lane.b32.xlu0 %v1676, 126
    %v1719 = vpop.permute.xlu0 %1718
    %1720 = vrot.lane.b32.xlu0 %v1677, 126
    %v1721 = vpop.permute.xlu0 %1720
    %1722 = vrot.lane.b32.xlu0 %v1678, 126
    %v1723 = vpop.permute.xlu0 %1722
    %1724 = vrot.lane.b32.xlu0 %v1679, 126
    %v1725 = vpop.permute.xlu0 %1724
    %1726 = vrot.lane.b32.xlu0 %v1680, 126
    %v1727 = vpop.permute.xlu0 %1726
    %1728 = vrot.lane.b32.xlu0 %v1681, 126
    %v1729 = vpop.permute.xlu0 %1728
    %v1730 = vsel %vm150, %v1717, %v1719
    %v1731 = vsel %vm150, %v1719, %v1721
    %v1732 = vsel %vm150, %v1721, %v1723
    %v1733 = vsel %vm150, %v1723, %v1725
    %v1734 = vsel %vm150, %v1725, %v1727
    %v1735 = vsel %vm150, %v1727, %v1729
    %1743 = vrot.lane.b32.xlu0 %v1675, 108
    %v1744 = vpop.permute.xlu0 %1743
    %1745 = vrot.lane.b32.xlu0 %v1676, 108
    %v1746 = vpop.permute.xlu0 %1745
    %1747 = vrot.lane.b32.xlu0 %v1677, 108
    %v1748 = vpop.permute.xlu0 %1747
    %1749 = vrot.lane.b32.xlu0 %v1678, 108
    %v1750 = vpop.permute.xlu0 %1749
    %1751 = vrot.lane.b32.xlu0 %v1679, 108
    %v1752 = vpop.permute.xlu0 %1751
    %1753 = vrot.lane.b32.xlu0 %v1680, 108
    %v1754 = vpop.permute.xlu0 %1753
    %1755 = vrot.lane.b32.xlu0 %v1681, 108
    %v1756 = vpop.permute.xlu0 %1755
    %v1757 = vsel %vm178, %v1744, %v1746
    %v1758 = vsel %vm178, %v1746, %v1748
    %v1759 = vsel %vm178, %v1748, %v1750
    %v1760 = vsel %vm178, %v1750, %v1752
    %v1761 = vsel %vm178, %v1752, %v1754
    %v1762 = vsel %vm178, %v1754, %v1756
    %1770 = vrot.lane.b32.xlu0 %v1675, 107
    %v1771 = vpop.permute.xlu0 %1770
    %1772 = vrot.lane.b32.xlu0 %v1676, 107
    %v1773 = vpop.permute.xlu0 %1772
    %1774 = vrot.lane.b32.xlu0 %v1677, 107
    %v1775 = vpop.permute.xlu0 %1774
    %1776 = vrot.lane.b32.xlu0 %v1678, 107
    %v1777 = vpop.permute.xlu0 %1776
    %1778 = vrot.lane.b32.xlu0 %v1679, 107
    %v1779 = vpop.permute.xlu0 %1778
    %1780 = vrot.lane.b32.xlu0 %v1680, 107
    %v1781 = vpop.permute.xlu0 %1780
    %1782 = vrot.lane.b32.xlu0 %v1681, 107
    %v1783 = vpop.permute.xlu0 %1782
    %v1784 = vsel %vm206, %v1771, %v1773
    %v1785 = vsel %vm206, %v1773, %v1775
    %v1786 = vsel %vm206, %v1775, %v1777
    %v1787 = vsel %vm206, %v1777, %v1779
    %v1788 = vsel %vm206, %v1779, %v1781
    %v1789 = vsel %vm206, %v1781, %v1783
    %1797 = vrot.lane.b32.xlu0 %v1675, 106
    %v1798 = vpop.permute.xlu0 %1797
    %1799 = vrot.lane.b32.xlu0 %v1676, 106
    %v1800 = vpop.permute.xlu0 %1799
    %1801 = vrot.lane.b32.xlu0 %v1677, 106
    %v1802 = vpop.permute.xlu0 %1801
    %1803 = vrot.lane.b32.xlu0 %v1678, 106
    %v1804 = vpop.permute.xlu0 %1803
    %1805 = vrot.lane.b32.xlu0 %v1679, 106
    %v1806 = vpop.permute.xlu0 %1805
    %1807 = vrot.lane.b32.xlu0 %v1680, 106
    %v1808 = vpop.permute.xlu0 %1807
    %1809 = vrot.lane.b32.xlu0 %v1681, 106
    %v1810 = vpop.permute.xlu0 %1809
    %v1811 = vsel %vm234, %v1798, %v1800
    %v1812 = vsel %vm234, %v1800, %v1802
    %v1813 = vsel %vm234, %v1802, %v1804
    %v1814 = vsel %vm234, %v1804, %v1806
    %v1815 = vsel %vm234, %v1806, %v1808
    %v1816 = vsel %vm234, %v1808, %v1810
    %1824 = vrot.lane.b32.xlu0 %v1675, 88
    %v1825 = vpop.permute.xlu0 %1824
    %1826 = vrot.lane.b32.xlu0 %v1676, 88
    %v1827 = vpop.permute.xlu0 %1826
    %1828 = vrot.lane.b32.xlu0 %v1677, 88
    %v1829 = vpop.permute.xlu0 %1828
    %1830 = vrot.lane.b32.xlu0 %v1678, 88
    %v1831 = vpop.permute.xlu0 %1830
    %1832 = vrot.lane.b32.xlu0 %v1679, 88
    %v1833 = vpop.permute.xlu0 %1832
    %1834 = vrot.lane.b32.xlu0 %v1680, 88
    %v1835 = vpop.permute.xlu0 %1834
    %1836 = vrot.lane.b32.xlu0 %v1681, 88
    %v1837 = vpop.permute.xlu0 %1836
    %v1838 = vsel %vm262, %v1825, %v1827
    %v1839 = vsel %vm262, %v1827, %v1829
    %v1840 = vsel %vm262, %v1829, %v1831
    %v1841 = vsel %vm262, %v1831, %v1833
    %v1842 = vsel %vm262, %v1833, %v1835
    %v1843 = vsel %vm262, %v1835, %v1837
    %1851 = vrot.lane.b32.xlu0 %v1675, 87
    %v1852 = vpop.permute.xlu0 %1851
    %1853 = vrot.lane.b32.xlu0 %v1676, 87
    %v1854 = vpop.permute.xlu0 %1853
    %1855 = vrot.lane.b32.xlu0 %v1677, 87
    %v1856 = vpop.permute.xlu0 %1855
    %1857 = vrot.lane.b32.xlu0 %v1678, 87
    %v1858 = vpop.permute.xlu0 %1857
    %1859 = vrot.lane.b32.xlu0 %v1679, 87
    %v1860 = vpop.permute.xlu0 %1859
    %1861 = vrot.lane.b32.xlu0 %v1680, 87
    %v1862 = vpop.permute.xlu0 %1861
    %1863 = vrot.lane.b32.xlu0 %v1681, 87
    %v1864 = vpop.permute.xlu0 %1863
    %v1865 = vsel %vm290, %v1852, %v1854
    %v1866 = vsel %vm290, %v1854, %v1856
    %v1867 = vsel %vm290, %v1856, %v1858
    %v1868 = vsel %vm290, %v1858, %v1860
    %v1869 = vsel %vm290, %v1860, %v1862
    %v1870 = vsel %vm290, %v1862, %v1864
    %1878 = vrot.lane.b32.xlu0 %v1675, 86
    %v1879 = vpop.permute.xlu0 %1878
    %1880 = vrot.lane.b32.xlu0 %v1676, 86
    %v1881 = vpop.permute.xlu0 %1880
    %1882 = vrot.lane.b32.xlu0 %v1677, 86
    %v1883 = vpop.permute.xlu0 %1882
    %1884 = vrot.lane.b32.xlu0 %v1678, 86
    %v1885 = vpop.permute.xlu0 %1884
    %1886 = vrot.lane.b32.xlu0 %v1679, 86
    %v1887 = vpop.permute.xlu0 %1886
    %1888 = vrot.lane.b32.xlu0 %v1680, 86
    %v1889 = vpop.permute.xlu0 %1888
    %1890 = vrot.lane.b32.xlu0 %v1681, 86
    %v1891 = vpop.permute.xlu0 %1890
    %v1892 = vsel %vm318, %v1879, %v1881
    %v1893 = vsel %vm318, %v1881, %v1883
    %v1894 = vsel %vm318, %v1883, %v1885
    %v1895 = vsel %vm318, %v1885, %v1887
    %v1896 = vsel %vm318, %v1887, %v1889
    %v1897 = vsel %vm318, %v1889, %v1891
    %v1905 = vld [vmem:[%s8] sm:$0xff]
    %v1906 = vld [vmem:[%s9] sm:$0xff]
    %1908 = vset.pattern.permute.xlu0 0
    %1909 = vperm.xlu0 %1908, %v1906
    %v1910 = vpop.permute.xlu0 %1909
    %v1913 = vsel %vm339, %v1905, 0
    %1915 = vmatpush.msra.mxu0 0.0
    %1916 = vmatpush.msra.mxu0 0.0
    %1917 = vmatpush.msra.mxu0 0.0
    %1918 = vmatpush.msra.mxu0 0.0
    %1919 = vmatpush.msra.mxu0 0.0
    %1920 = vmatpush.msra.mxu0 0.0
    %1921 = vmatpush.msra.mxu0 0.0
    %1922 = vmatpush.msra.mxu0 %v1892
    %1923 = vmatpush.msra.mxu0 %v1865
    %1924 = vmatpush.msra.mxu0 %v1838
    %1925 = vmatpush.msra.mxu0 %v1811
    %1926 = vmatpush.msra.mxu0 %v1784
    %1927 = vmatpush.msra.mxu0 %v1757
    %1928 = vmatpush.msra.mxu0 %v1730
    %1929 = vmatpush.msra.mxu0 %v1703
    %1930 = vmatpush.msra.mxu0 %v1675
    %1931 = vmatmul.f32.gmra.mxu0 %v1913
    %v1932 = vpop.f32.mrf.mxu0
    %v1933 = vadd.f32 %v1910, %v1932
    %1934 = vdwg.mxu0
    %1935 = vmatpush.msra.mxu0 0.0
    %1936 = vmatpush.msra.mxu0 0.0
    %1937 = vmatpush.msra.mxu0 0.0
    %1938 = vmatpush.msra.mxu0 0.0
    %1939 = vmatpush.msra.mxu0 0.0
    %1940 = vmatpush.msra.mxu0 0.0
    %1941 = vmatpush.msra.mxu0 0.0
    %1942 = vmatpush.msra.mxu0 %v1893
    %1943 = vmatpush.msra.mxu0 %v1866
    %1944 = vmatpush.msra.mxu0 %v1839
    %1945 = vmatpush.msra.mxu0 %v1812
    %1946 = vmatpush.msra.mxu0 %v1785
    %1947 = vmatpush.msra.mxu0 %v1758
    %1948 = vmatpush.msra.mxu0 %v1731
    %1949 = vmatpush.msra.mxu0 %v1704
    %1950 = vmatpush.msra.mxu0 %v1676
    %1951 = vmatmul.f32.gmra.mxu0 %v1913
    %v1952 = vpop.f32.mrf.mxu0
    %v1953 = vadd.f32 %v1910, %v1952
    %1954 = vdwg.mxu0
    %1955 = vmatpush.msra.mxu0 0.0
    %1956 = vmatpush.msra.mxu0 0.0
    %1957 = vmatpush.msra.mxu0 0.0
    %1958 = vmatpush.msra.mxu0 0.0
    %1959 = vmatpush.msra.mxu0 0.0
    %1960 = vmatpush.msra.mxu0 0.0
    %1961 = vmatpush.msra.mxu0 0.0
    %1962 = vmatpush.msra.mxu0 %v1894
    %1963 = vmatpush.msra.mxu0 %v1867
    %1964 = vmatpush.msra.mxu0 %v1840
    %1965 = vmatpush.msra.mxu0 %v1813
    %1966 = vmatpush.msra.mxu0 %v1786
    %1967 = vmatpush.msra.mxu0 %v1759
    %1968 = vmatpush.msra.mxu0 %v1732
    %1969 = vmatpush.msra.mxu0 %v1705
    %1970 = vmatpush.msra.mxu0 %v1677
    %1971 = vmatmul.f32.gmra.mxu0 %v1913
    %v1972 = vpop.f32.mrf.mxu0
    %v1973 = vadd.f32 %v1910, %v1972
    %1974 = vdwg.mxu0
    %1975 = vmatpush.msra.mxu0 0.0
    %1976 = vmatpush.msra.mxu0 0.0
    %1977 = vmatpush.msra.mxu0 0.0
    %1978 = vmatpush.msra.mxu0 0.0
    %1979 = vmatpush.msra.mxu0 0.0
    %1980 = vmatpush.msra.mxu0 0.0
    %1981 = vmatpush.msra.mxu0 0.0
    %1982 = vmatpush.msra.mxu0 %v1895
    %1983 = vmatpush.msra.mxu0 %v1868
    %1984 = vmatpush.msra.mxu0 %v1841
    %1985 = vmatpush.msra.mxu0 %v1814
    %1986 = vmatpush.msra.mxu0 %v1787
    %1987 = vmatpush.msra.mxu0 %v1760
    %1988 = vmatpush.msra.mxu0 %v1733
    %1989 = vmatpush.msra.mxu0 %v1706
    %1990 = vmatpush.msra.mxu0 %v1678
    %1991 = vmatmul.f32.gmra.mxu0 %v1913
    %v1992 = vpop.f32.mrf.mxu0
    %v1993 = vadd.f32 %v1910, %v1992
    %1994 = vdwg.mxu0
    %1995 = vmatpush.msra.mxu0 0.0
    %1996 = vmatpush.msra.mxu0 0.0
    %1997 = vmatpush.msra.mxu0 0.0
    %1998 = vmatpush.msra.mxu0 0.0
    %1999 = vmatpush.msra.mxu0 0.0
    %2000 = vmatpush.msra.mxu0 0.0
    %2001 = vmatpush.msra.mxu0 0.0
    %2002 = vmatpush.msra.mxu0 %v1896
    %2003 = vmatpush.msra.mxu0 %v1869
    %2004 = vmatpush.msra.mxu0 %v1842
    %2005 = vmatpush.msra.mxu0 %v1815
    %2006 = vmatpush.msra.mxu0 %v1788
    %2007 = vmatpush.msra.mxu0 %v1761
    %2008 = vmatpush.msra.mxu0 %v1734
    %2009 = vmatpush.msra.mxu0 %v1707
    %2010 = vmatpush.msra.mxu0 %v1679
    %2011 = vmatmul.f32.gmra.mxu0 %v1913
    %v2012 = vpop.f32.mrf.mxu0
    %v2013 = vadd.f32 %v1910, %v2012
    %2014 = vdwg.mxu0
    %2015 = vmatpush.msra.mxu0 0.0
    %2016 = vmatpush.msra.mxu0 0.0
    %2017 = vmatpush.msra.mxu0 0.0
    %2018 = vmatpush.msra.mxu0 0.0
    %2019 = vmatpush.msra.mxu0 0.0
    %2020 = vmatpush.msra.mxu0 0.0
    %2021 = vmatpush.msra.mxu0 0.0
    %2022 = vmatpush.msra.mxu0 %v1897
    %2023 = vmatpush.msra.mxu0 %v1870
    %2024 = vmatpush.msra.mxu0 %v1843
    %2025 = vmatpush.msra.mxu0 %v1816
    %2026 = vmatpush.msra.mxu0 %v1789
    %2027 = vmatpush.msra.mxu0 %v1762
    %2028 = vmatpush.msra.mxu0 %v1735
    %2029 = vmatpush.msra.mxu0 %v1708
    %2030 = vmatpush.msra.mxu0 %v1680
    %2031 = vmatmul.f32.gmra.mxu0 %v1913
    %v2032 = vpop.f32.mrf.mxu0
    %v2033 = vadd.f32 %v1910, %v2032
    %2034 = vdwg.mxu0
    %2035 = vmatpush.msra.mxu0 0.0
    %2036 = vmatpush.msra.mxu0 0.0
    %2037 = vmatpush.msra.mxu0 0.0
    %2038 = vmatpush.msra.mxu0 0.0
    %2039 = vmatpush.msra.mxu0 0.0
    %2040 = vmatpush.msra.mxu0 0.0
    %2041 = vmatpush.msra.mxu0 0.0
    %2042 = vmatpush.msra.mxu0 %v1891
    %2043 = vmatpush.msra.mxu0 %v1864
    %2044 = vmatpush.msra.mxu0 %v1837
    %2045 = vmatpush.msra.mxu0 %v1810
    %2046 = vmatpush.msra.mxu0 %v1783
    %2047 = vmatpush.msra.mxu0 %v1756
    %2048 = vmatpush.msra.mxu0 %v1729
    %2049 = vmatpush.msra.mxu0 %v1702
    %2050 = vmatpush.msra.mxu0 %v1681
    %2051 = vmatmul.f32.gmra.mxu0 %v1913
    %v2052 = vpop.f32.mrf.mxu0
    %v2053 = vadd.f32 %v1910, %v2052
    %2054 = vdwg.mxu0
    %2055 = vst [vmem:[#allocation2] sm:$0xff] %v1933
    %2056 = vst [vmem:[#allocation2 + $0x8] sm:$0xff] %v1953
    %2057 = vst [vmem:[#allocation2 + $0x10] sm:$0xff] %v1973
    %2058 = vst [vmem:[#allocation2 + $0x18] sm:$0xff] %v1993
    %2059 = vst [vmem:[#allocation2 + $0x20] sm:$0xff] %v2013
    %2060 = vst [vmem:[#allocation2 + $0x28] sm:$0xff] %v2033
    %2061 = vst.msk [vmem:[#allocation2 + $0x30] sm:$0xff] %vm489, %v2053
    %v2062 = vld [vmem:[#allocation2] sm:$0xff]
    %v2063 = vld [vmem:[#allocation2 + $0x8] sm:$0xff]
    %v2064 = vld [vmem:[#allocation2 + $0x10] sm:$0xff]
    %v2065 = vld [vmem:[#allocation2 + $0x18] sm:$0xff]
    %v2066 = vld [vmem:[#allocation2 + $0x20] sm:$0xff]
    %v2067 = vld [vmem:[#allocation2 + $0x28] sm:$0xff]
    %v2068 = vld [vmem:[#allocation2 + $0x30] sm:$0xff]
    %2076 = vrot.lane.b32.xlu0 %v2062, 127
    %v2077 = vpop.permute.xlu0 %2076
    %2078 = vrot.lane.b32.xlu0 %v2063, 127
    %v2079 = vpop.permute.xlu0 %2078
    %2080 = vrot.lane.b32.xlu0 %v2064, 127
    %v2081 = vpop.permute.xlu0 %2080
    %2082 = vrot.lane.b32.xlu0 %v2065, 127
    %v2083 = vpop.permute.xlu0 %2082
    %2084 = vrot.lane.b32.xlu0 %v2066, 127
    %v2085 = vpop.permute.xlu0 %2084
    %2086 = vrot.lane.b32.xlu0 %v2067, 127
    %v2087 = vpop.permute.xlu0 %2086
    %2088 = vrot.lane.b32.xlu0 %v2068, 127
    %v2089 = vpop.permute.xlu0 %2088
    %v2090 = vsel %vm122, %v2077, %v2079
    %v2091 = vsel %vm122, %v2079, %v2081
    %v2092 = vsel %vm122, %v2081, %v2083
    %v2093 = vsel %vm122, %v2083, %v2085
    %v2094 = vsel %vm122, %v2085, %v2087
    %v2095 = vsel %vm122, %v2087, %v2089
    %2103 = vrot.lane.b32.xlu0 %v2062, 126
    %v2104 = vpop.permute.xlu0 %2103
    %2105 = vrot.lane.b32.xlu0 %v2063, 126
    %v2106 = vpop.permute.xlu0 %2105
    %2107 = vrot.lane.b32.xlu0 %v2064, 126
    %v2108 = vpop.permute.xlu0 %2107
    %2109 = vrot.lane.b32.xlu0 %v2065, 126
    %v2110 = vpop.permute.xlu0 %2109
    %2111 = vrot.lane.b32.xlu0 %v2066, 126
    %v2112 = vpop.permute.xlu0 %2111
    %2113 = vrot.lane.b32.xlu0 %v2067, 126
    %v2114 = vpop.permute.xlu0 %2113
    %2115 = vrot.lane.b32.xlu0 %v2068, 126
    %v2116 = vpop.permute.xlu0 %2115
    %v2117 = vsel %vm150, %v2104, %v2106
    %v2118 = vsel %vm150, %v2106, %v2108
    %v2119 = vsel %vm150, %v2108, %v2110
    %v2120 = vsel %vm150, %v2110, %v2112
    %v2121 = vsel %vm150, %v2112, %v2114
    %v2122 = vsel %vm150, %v2114, %v2116
    %2130 = vrot.lane.b32.xlu0 %v2062, 108
    %v2131 = vpop.permute.xlu0 %2130
    %2132 = vrot.lane.b32.xlu0 %v2063, 108
    %v2133 = vpop.permute.xlu0 %2132
    %2134 = vrot.lane.b32.xlu0 %v2064, 108
    %v2135 = vpop.permute.xlu0 %2134
    %2136 = vrot.lane.b32.xlu0 %v2065, 108
    %v2137 = vpop.permute.xlu0 %2136
    %2138 = vrot.lane.b32.xlu0 %v2066, 108
    %v2139 = vpop.permute.xlu0 %2138
    %2140 = vrot.lane.b32.xlu0 %v2067, 108
    %v2141 = vpop.permute.xlu0 %2140
    %2142 = vrot.lane.b32.xlu0 %v2068, 108
    %v2143 = vpop.permute.xlu0 %2142
    %v2144 = vsel %vm178, %v2131, %v2133
    %v2145 = vsel %vm178, %v2133, %v2135
    %v2146 = vsel %vm178, %v2135, %v2137
    %v2147 = vsel %vm178, %v2137, %v2139
    %v2148 = vsel %vm178, %v2139, %v2141
    %v2149 = vsel %vm178, %v2141, %v2143
    %2157 = vrot.lane.b32.xlu0 %v2062, 107
    %v2158 = vpop.permute.xlu0 %2157
    %2159 = vrot.lane.b32.xlu0 %v2063, 107
    %v2160 = vpop.permute.xlu0 %2159
    %2161 = vrot.lane.b32.xlu0 %v2064, 107
    %v2162 = vpop.permute.xlu0 %2161
    %2163 = vrot.lane.b32.xlu0 %v2065, 107
    %v2164 = vpop.permute.xlu0 %2163
    %2165 = vrot.lane.b32.xlu0 %v2066, 107
    %v2166 = vpop.permute.xlu0 %2165
    %2167 = vrot.lane.b32.xlu0 %v2067, 107
    %v2168 = vpop.permute.xlu0 %2167
    %2169 = vrot.lane.b32.xlu0 %v2068, 107
    %v2170 = vpop.permute.xlu0 %2169
    %v2171 = vsel %vm206, %v2158, %v2160
    %v2172 = vsel %vm206, %v2160, %v2162
    %v2173 = vsel %vm206, %v2162, %v2164
    %v2174 = vsel %vm206, %v2164, %v2166
    %v2175 = vsel %vm206, %v2166, %v2168
    %v2176 = vsel %vm206, %v2168, %v2170
    %2184 = vrot.lane.b32.xlu0 %v2062, 106
    %v2185 = vpop.permute.xlu0 %2184
    %2186 = vrot.lane.b32.xlu0 %v2063, 106
    %v2187 = vpop.permute.xlu0 %2186
    %2188 = vrot.lane.b32.xlu0 %v2064, 106
    %v2189 = vpop.permute.xlu0 %2188
    %2190 = vrot.lane.b32.xlu0 %v2065, 106
    %v2191 = vpop.permute.xlu0 %2190
    %2192 = vrot.lane.b32.xlu0 %v2066, 106
    %v2193 = vpop.permute.xlu0 %2192
    %2194 = vrot.lane.b32.xlu0 %v2067, 106
    %v2195 = vpop.permute.xlu0 %2194
    %2196 = vrot.lane.b32.xlu0 %v2068, 106
    %v2197 = vpop.permute.xlu0 %2196
    %v2198 = vsel %vm234, %v2185, %v2187
    %v2199 = vsel %vm234, %v2187, %v2189
    %v2200 = vsel %vm234, %v2189, %v2191
    %v2201 = vsel %vm234, %v2191, %v2193
    %v2202 = vsel %vm234, %v2193, %v2195
    %v2203 = vsel %vm234, %v2195, %v2197
    %2211 = vrot.lane.b32.xlu0 %v2062, 88
    %v2212 = vpop.permute.xlu0 %2211
    %2213 = vrot.lane.b32.xlu0 %v2063, 88
    %v2214 = vpop.permute.xlu0 %2213
    %2215 = vrot.lane.b32.xlu0 %v2064, 88
    %v2216 = vpop.permute.xlu0 %2215
    %2217 = vrot.lane.b32.xlu0 %v2065, 88
    %v2218 = vpop.permute.xlu0 %2217
    %2219 = vrot.lane.b32.xlu0 %v2066, 88
    %v2220 = vpop.permute.xlu0 %2219
    %2221 = vrot.lane.b32.xlu0 %v2067, 88
    %v2222 = vpop.permute.xlu0 %2221
    %2223 = vrot.lane.b32.xlu0 %v2068, 88
    %v2224 = vpop.permute.xlu0 %2223
    %v2225 = vsel %vm262, %v2212, %v2214
    %v2226 = vsel %vm262, %v2214, %v2216
    %v2227 = vsel %vm262, %v2216, %v2218
    %v2228 = vsel %vm262, %v2218, %v2220
    %v2229 = vsel %vm262, %v2220, %v2222
    %v2230 = vsel %vm262, %v2222, %v2224
    %2238 = vrot.lane.b32.xlu0 %v2062, 87
    %v2239 = vpop.permute.xlu0 %2238
    %2240 = vrot.lane.b32.xlu0 %v2063, 87
    %v2241 = vpop.permute.xlu0 %2240
    %2242 = vrot.lane.b32.xlu0 %v2064, 87
    %v2243 = vpop.permute.xlu0 %2242
    %2244 = vrot.lane.b32.xlu0 %v2065, 87
    %v2245 = vpop.permute.xlu0 %2244
    %2246 = vrot.lane.b32.xlu0 %v2066, 87
    %v2247 = vpop.permute.xlu0 %2246
    %2248 = vrot.lane.b32.xlu0 %v2067, 87
    %v2249 = vpop.permute.xlu0 %2248
    %2250 = vrot.lane.b32.xlu0 %v2068, 87
    %v2251 = vpop.permute.xlu0 %2250
    %v2252 = vsel %vm290, %v2239, %v2241
    %v2253 = vsel %vm290, %v2241, %v2243
    %v2254 = vsel %vm290, %v2243, %v2245
    %v2255 = vsel %vm290, %v2245, %v2247
    %v2256 = vsel %vm290, %v2247, %v2249
    %v2257 = vsel %vm290, %v2249, %v2251
    %2265 = vrot.lane.b32.xlu0 %v2062, 86
    %v2266 = vpop.permute.xlu0 %2265
    %2267 = vrot.lane.b32.xlu0 %v2063, 86
    %v2268 = vpop.permute.xlu0 %2267
    %2269 = vrot.lane.b32.xlu0 %v2064, 86
    %v2270 = vpop.permute.xlu0 %2269
    %2271 = vrot.lane.b32.xlu0 %v2065, 86
    %v2272 = vpop.permute.xlu0 %2271
    %2273 = vrot.lane.b32.xlu0 %v2066, 86
    %v2274 = vpop.permute.xlu0 %2273
    %2275 = vrot.lane.b32.xlu0 %v2067, 86
    %v2276 = vpop.permute.xlu0 %2275
    %2277 = vrot.lane.b32.xlu0 %v2068, 86
    %v2278 = vpop.permute.xlu0 %2277
    %v2279 = vsel %vm318, %v2266, %v2268
    %v2280 = vsel %vm318, %v2268, %v2270
    %v2281 = vsel %vm318, %v2270, %v2272
    %v2282 = vsel %vm318, %v2272, %v2274
    %v2283 = vsel %vm318, %v2274, %v2276
    %v2284 = vsel %vm318, %v2276, %v2278
    %v2292 = vld [vmem:[%s10] sm:$0xff]
    %v2293 = vld [vmem:[%s11] sm:$0xff]
    %2295 = vset.pattern.permute.xlu0 0
    %2296 = vperm.xlu0 %2295, %v2293
    %v2297 = vpop.permute.xlu0 %2296
    %v2300 = vsel %vm339, %v2292, 0
    %2302 = vmatpush.msra.mxu0 0.0
    %2303 = vmatpush.msra.mxu0 0.0
    %2304 = vmatpush.msra.mxu0 0.0
    %2305 = vmatpush.msra.mxu0 0.0
    %2306 = vmatpush.msra.mxu0 0.0
    %2307 = vmatpush.msra.mxu0 0.0
    %2308 = vmatpush.msra.mxu0 0.0
    %2309 = vmatpush.msra.mxu0 %v2279
    %2310 = vmatpush.msra.mxu0 %v2252
    %2311 = vmatpush.msra.mxu0 %v2225
    %2312 = vmatpush.msra.mxu0 %v2198
    %2313 = vmatpush.msra.mxu0 %v2171
    %2314 = vmatpush.msra.mxu0 %v2144
    %2315 = vmatpush.msra.mxu0 %v2117
    %2316 = vmatpush.msra.mxu0 %v2090
    %2317 = vmatpush.msra.mxu0 %v2062
    %2318 = vmatmul.f32.gmra.mxu0 %v2300
    %v2319 = vpop.f32.mrf.mxu0
    %v2320 = vadd.f32 %v2297, %v2319
    %2321 = vdwg.mxu0
    %2322 = vmatpush.msra.mxu0 0.0
    %2323 = vmatpush.msra.mxu0 0.0
    %2324 = vmatpush.msra.mxu0 0.0
    %2325 = vmatpush.msra.mxu0 0.0
    %2326 = vmatpush.msra.mxu0 0.0
    %2327 = vmatpush.msra.mxu0 0.0
    %2328 = vmatpush.msra.mxu0 0.0
    %2329 = vmatpush.msra.mxu0 %v2280
    %2330 = vmatpush.msra.mxu0 %v2253
    %2331 = vmatpush.msra.mxu0 %v2226
    %2332 = vmatpush.msra.mxu0 %v2199
    %2333 = vmatpush.msra.mxu0 %v2172
    %2334 = vmatpush.msra.mxu0 %v2145
    %2335 = vmatpush.msra.mxu0 %v2118
    %2336 = vmatpush.msra.mxu0 %v2091
    %2337 = vmatpush.msra.mxu0 %v2063
    %2338 = vmatmul.f32.gmra.mxu0 %v2300
    %v2339 = vpop.f32.mrf.mxu0
    %v2340 = vadd.f32 %v2297, %v2339
    %2341 = vdwg.mxu0
    %2342 = vmatpush.msra.mxu0 0.0
    %2343 = vmatpush.msra.mxu0 0.0
    %2344 = vmatpush.msra.mxu0 0.0
    %2345 = vmatpush.msra.mxu0 0.0
    %2346 = vmatpush.msra.mxu0 0.0
    %2347 = vmatpush.msra.mxu0 0.0
    %2348 = vmatpush.msra.mxu0 0.0
    %2349 = vmatpush.msra.mxu0 %v2281
    %2350 = vmatpush.msra.mxu0 %v2254
    %2351 = vmatpush.msra.mxu0 %v2227
    %2352 = vmatpush.msra.mxu0 %v2200
    %2353 = vmatpush.msra.mxu0 %v2173
    %2354 = vmatpush.msra.mxu0 %v2146
    %2355 = vmatpush.msra.mxu0 %v2119
    %2356 = vmatpush.msra.mxu0 %v2092
    %2357 = vmatpush.msra.mxu0 %v2064
    %2358 = vmatmul.f32.gmra.mxu0 %v2300
    %v2359 = vpop.f32.mrf.mxu0
    %v2360 = vadd.f32 %v2297, %v2359
    %2361 = vdwg.mxu0
    %2362 = vmatpush.msra.mxu0 0.0
    %2363 = vmatpush.msra.mxu0 0.0
    %2364 = vmatpush.msra.mxu0 0.0
    %2365 = vmatpush.msra.mxu0 0.0
    %2366 = vmatpush.msra.mxu0 0.0
    %2367 = vmatpush.msra.mxu0 0.0
    %2368 = vmatpush.msra.mxu0 0.0
    %2369 = vmatpush.msra.mxu0 %v2282
    %2370 = vmatpush.msra.mxu0 %v2255
    %2371 = vmatpush.msra.mxu0 %v2228
    %2372 = vmatpush.msra.mxu0 %v2201
    %2373 = vmatpush.msra.mxu0 %v2174
    %2374 = vmatpush.msra.mxu0 %v2147
    %2375 = vmatpush.msra.mxu0 %v2120
    %2376 = vmatpush.msra.mxu0 %v2093
    %2377 = vmatpush.msra.mxu0 %v2065
    %2378 = vmatmul.f32.gmra.mxu0 %v2300
    %v2379 = vpop.f32.mrf.mxu0
    %v2380 = vadd.f32 %v2297, %v2379
    %2381 = vdwg.mxu0
    %2382 = vmatpush.msra.mxu0 0.0
    %2383 = vmatpush.msra.mxu0 0.0
    %2384 = vmatpush.msra.mxu0 0.0
    %2385 = vmatpush.msra.mxu0 0.0
    %2386 = vmatpush.msra.mxu0 0.0
    %2387 = vmatpush.msra.mxu0 0.0
    %2388 = vmatpush.msra.mxu0 0.0
    %2389 = vmatpush.msra.mxu0 %v2283
    %2390 = vmatpush.msra.mxu0 %v2256
    %2391 = vmatpush.msra.mxu0 %v2229
    %2392 = vmatpush.msra.mxu0 %v2202
    %2393 = vmatpush.msra.mxu0 %v2175
    %2394 = vmatpush.msra.mxu0 %v2148
    %2395 = vmatpush.msra.mxu0 %v2121
    %2396 = vmatpush.msra.mxu0 %v2094
    %2397 = vmatpush.msra.mxu0 %v2066
    %2398 = vmatmul.f32.gmra.mxu0 %v2300
    %v2399 = vpop.f32.mrf.mxu0
    %v2400 = vadd.f32 %v2297, %v2399
    %2401 = vdwg.mxu0
    %2402 = vmatpush.msra.mxu0 0.0
    %2403 = vmatpush.msra.mxu0 0.0
    %2404 = vmatpush.msra.mxu0 0.0
    %2405 = vmatpush.msra.mxu0 0.0
    %2406 = vmatpush.msra.mxu0 0.0
    %2407 = vmatpush.msra.mxu0 0.0
    %2408 = vmatpush.msra.mxu0 0.0
    %2409 = vmatpush.msra.mxu0 %v2284
    %2410 = vmatpush.msra.mxu0 %v2257
    %2411 = vmatpush.msra.mxu0 %v2230
    %2412 = vmatpush.msra.mxu0 %v2203
    %2413 = vmatpush.msra.mxu0 %v2176
    %2414 = vmatpush.msra.mxu0 %v2149
    %2415 = vmatpush.msra.mxu0 %v2122
    %2416 = vmatpush.msra.mxu0 %v2095
    %2417 = vmatpush.msra.mxu0 %v2067
    %2418 = vmatmul.f32.gmra.mxu0 %v2300
    %v2419 = vpop.f32.mrf.mxu0
    %v2420 = vadd.f32 %v2297, %v2419
    %2421 = vdwg.mxu0
    %2422 = vmatpush.msra.mxu0 0.0
    %2423 = vmatpush.msra.mxu0 0.0
    %2424 = vmatpush.msra.mxu0 0.0
    %2425 = vmatpush.msra.mxu0 0.0
    %2426 = vmatpush.msra.mxu0 0.0
    %2427 = vmatpush.msra.mxu0 0.0
    %2428 = vmatpush.msra.mxu0 0.0
    %2429 = vmatpush.msra.mxu0 %v2278
    %2430 = vmatpush.msra.mxu0 %v2251
    %2431 = vmatpush.msra.mxu0 %v2224
    %2432 = vmatpush.msra.mxu0 %v2197
    %2433 = vmatpush.msra.mxu0 %v2170
    %2434 = vmatpush.msra.mxu0 %v2143
    %2435 = vmatpush.msra.mxu0 %v2116
    %2436 = vmatpush.msra.mxu0 %v2089
    %2437 = vmatpush.msra.mxu0 %v2068
    %2438 = vmatmul.f32.gmra.mxu0 %v2300
    %v2439 = vpop.f32.mrf.mxu0
    %v2440 = vadd.f32 %v2297, %v2439
    %2441 = vdwg.mxu0
    %v2442 = vmax.f32 %v2320, 0.0
    %v2443 = vmax.f32 %v2340, 0.0
    %v2444 = vmax.f32 %v2360, 0.0
    %v2445 = vmax.f32 %v2380, 0.0
    %v2446 = vmax.f32 %v2400, 0.0
    %v2447 = vmax.f32 %v2420, 0.0
    %v2448 = vmax.f32 %v2440, 0.0
    %2449 = vst [vmem:[#allocation2] sm:$0xff] %v2442
    %2450 = vst [vmem:[#allocation2 + $0x8] sm:$0xff] %v2443
    %2451 = vst [vmem:[#allocation2 + $0x10] sm:$0xff] %v2444
    %2452 = vst [vmem:[#allocation2 + $0x18] sm:$0xff] %v2445
    %2453 = vst [vmem:[#allocation2 + $0x20] sm:$0xff] %v2446
    %2454 = vst [vmem:[#allocation2 + $0x28] sm:$0xff] %v2447
    %2455 = vst.msk [vmem:[#allocation2 + $0x30] sm:$0xff] %vm489, %v2448
    %v2456 = vld [vmem:[#allocation2] ss:$8 sm:$0x3]
    %s2457 = scalar_lea.vmem [#allocation2], 24
    %v2458 = vld [vmem:[%s2457] ss:$8 sm:$0x3]
    %v2460 = vperm.slane %v2456, 0
    %v2461 = vperm.slane %v2456, 1
    %v2465 = vperm.slane %v2458, 0
    %v2466 = vperm.slane %v2458, 1
    %2467 = vrot.lane.b32.xlu0 %v2465, 112
    %v2468 = vpop.permute.xlu0 %2467
    %2469 = vrot.lane.b32.xlu0 %v2466, 112
    %v2470 = vpop.permute.xlu0 %2469
    %vm2471 = vcmask 916480
    %v2472 = vsel %vm2471, %v2468, %v2470
    %vm2475 = vcmask 1040384
    %v2476 = vsel %vm2475, %v2460, %v2472
    %v2477 = vsel %vm2475, %v2461, %v2470
    %v2478 = vld [vmem:[%s13] sm:$0xff]
    %v2479 = vld [vmem:[%s13 + $0x8] sm:$0xff]
    %v2480 = vld [vmem:[%s13 + $0x10] sm:$0xff]
    %v2481 = vld [vmem:[%s13 + $0x18] sm:$0xff]
    %v2482 = vld [vmem:[%s13 + $0x20] sm:$0xff]
    %v2483 = vld [vmem:[%s13 + $0x28] sm:$0xff]
    %v2484 = vld [vmem:[%s13 + $0x30] sm:$0xff]
    %v2485 = vld [vmem:[%s13 + $0x38] sm:$0xff]
    %v2486 = vld [vmem:[%s13 + $0x40] sm:$0xff]
    %v2487 = vld [vmem:[%s13 + $0x48] sm:$0xff]
    %v2488 = vld [vmem:[%s13 + $0x50] sm:$0xff]
    %v2489 = vld [vmem:[%s13 + $0x58] sm:$0xff]
    %v2490 = vld [vmem:[%s13 + $0x60] sm:$0xff]
    %v2491 = vld [vmem:[%s13 + $0x68] sm:$0xff]
    %v2492 = vld [vmem:[%s13 + $0x70] sm:$0xff]
    %v2493 = vld [vmem:[%s13 + $0x78] sm:$0xff]
    %v2494 = vld [vmem:[%s13 + $0x80] sm:$0xff]
    %v2495 = vld [vmem:[%s13 + $0x88] sm:$0xff]
    %v2496 = vld [vmem:[%s13 + $0x90] sm:$0xff]
    %v2497 = vld [vmem:[%s13 + $0x98] sm:$0xff]
    %v2498 = vld [vmem:[%s13 + $0xa0] sm:$0xff]
    %v2499 = vld [vmem:[%s13 + $0xa8] sm:$0xff]
    %v2500 = vld [vmem:[%s13 + $0xb0] sm:$0xff]
    %v2501 = vld [vmem:[%s13 + $0xb8] sm:$0x3f]
    %s2502 = scalar_lea.vmem [#allocation2], 1
    %v2503 = vld [vmem:[%s2502] ss:$8 sm:$0x3]
    %s2504 = scalar_lea.vmem [#allocation2], 25
    %v2505 = vld [vmem:[%s2504] ss:$8 sm:$0x3]
    %v2507 = vperm.slane %v2503, 0
    %v2508 = vperm.slane %v2503, 1
    %v2512 = vperm.slane %v2505, 0
    %v2513 = vperm.slane %v2505, 1
    %2514 = vrot.lane.b32.xlu0 %v2512, 112
    %v2515 = vpop.permute.xlu0 %2514
    %2516 = vrot.lane.b32.xlu0 %v2513, 112
    %v2517 = vpop.permute.xlu0 %2516
    %v2518 = vsel %vm2471, %v2515, %v2517
    %v2521 = vsel %vm2475, %v2507, %v2518
    %v2522 = vsel %vm2475, %v2508, %v2517
    %s2523 = scalar_lea.vmem %s13, 192
    %v2524 = vld [vmem:[%s2523] sm:$0xff]
    %v2525 = vld [vmem:[%s2523 + $0x8] sm:$0xff]
    %v2526 = vld [vmem:[%s2523 + $0x10] sm:$0xff]
    %v2527 = vld [vmem:[%s2523 + $0x18] sm:$0xff]
    %v2528 = vld [vmem:[%s2523 + $0x20] sm:$0xff]
    %v2529 = vld [vmem:[%s2523 + $0x28] sm:$0xff]
    %v2530 = vld [vmem:[%s2523 + $0x30] sm:$0xff]
    %v2531 = vld [vmem:[%s2523 + $0x38] sm:$0xff]
    %v2532 = vld [vmem:[%s2523 + $0x40] sm:$0xff]
    %v2533 = vld [vmem:[%s2523 + $0x48] sm:$0xff]
    %v2534 = vld [vmem:[%s2523 + $0x50] sm:$0xff]
    %v2535 = vld [vmem:[%s2523 + $0x58] sm:$0xff]
    %v2536 = vld [vmem:[%s2523 + $0x60] sm:$0xff]
    %v2537 = vld [vmem:[%s2523 + $0x68] sm:$0xff]
    %v2538 = vld [vmem:[%s2523 + $0x70] sm:$0xff]
    %v2539 = vld [vmem:[%s2523 + $0x78] sm:$0xff]
    %v2540 = vld [vmem:[%s2523 + $0x80] sm:$0xff]
    %v2541 = vld [vmem:[%s2523 + $0x88] sm:$0xff]
    %v2542 = vld [vmem:[%s2523 + $0x90] sm:$0xff]
    %v2543 = vld [vmem:[%s2523 + $0x98] sm:$0xff]
    %v2544 = vld [vmem:[%s2523 + $0xa0] sm:$0xff]
    %v2545 = vld [vmem:[%s2523 + $0xa8] sm:$0xff]
    %v2546 = vld [vmem:[%s2523 + $0xb0] sm:$0xff]
    %v2547 = vld [vmem:[%s2523 + $0xb8] sm:$0x3f]
    %vm2548 = vcmask 506880
    %v2550 = vsel %vm2548, %v2522, 0
    %vm2552 = vcmask 1045504
    %v2554 = vsel %vm2552, %v2547, 0
    %2556 = vmatpush.msra.mxu0 %v2539
    %2557 = vmatpush.msra.mxu0 %v2538
    %2558 = vmatpush.msra.mxu0 %v2537
    %2559 = vmatpush.msra.mxu0 %v2536
    %2560 = vmatpush.msra.mxu0 %v2535
    %2561 = vmatpush.msra.mxu0 %v2534
    %2562 = vmatpush.msra.mxu0 %v2533
    %2563 = vmatpush.msra.mxu0 %v2532
    %2564 = vmatpush.msra.mxu0 %v2531
    %2565 = vmatpush.msra.mxu0 %v2530
    %2566 = vmatpush.msra.mxu0 %v2529
    %2567 = vmatpush.msra.mxu0 %v2528
    %2568 = vmatpush.msra.mxu0 %v2527
    %2569 = vmatpush.msra.mxu0 %v2526
    %2570 = vmatpush.msra.mxu0 %v2525
    %2571 = vmatpush.msra.mxu0 %v2524
    %2572 = vmatmul.f32.gmra.mxu0 %v2521
    %v2573 = vpop.f32.mrf.mxu0
    %v2574 = vadd.f32 0.0, %v2573
    %2575 = vdwg.mxu0
    %2576 = vmatpush.msra.mxu0 0.0
    %2577 = vmatpush.msra.mxu0 0.0
    %2578 = vmatpush.msra.mxu0 0.0
    %2579 = vmatpush.msra.mxu0 0.0
    %2580 = vmatpush.msra.mxu0 0.0
    %2581 = vmatpush.msra.mxu0 0.0
    %2582 = vmatpush.msra.mxu0 0.0
    %2583 = vmatpush.msra.mxu0 0.0
    %2584 = vmatpush.msra.mxu0 %v2554
    %2585 = vmatpush.msra.mxu0 %v2546
    %2586 = vmatpush.msra.mxu0 %v2545
    %2587 = vmatpush.msra.mxu0 %v2544
    %2588 = vmatpush.msra.mxu0 %v2543
    %2589 = vmatpush.msra.mxu0 %v2542
    %2590 = vmatpush.msra.mxu0 %v2541
    %2591 = vmatpush.msra.mxu0 %v2540
    %2592 = vmatmul.f32.gmra.mxu0 %v2550
    %v2593 = vpop.f32.mrf.mxu0
    %v2594 = vadd.f32 %v2574, %v2593
    %2595 = vdwg.mxu0
    %v2597 = vsel %vm2548, %v2477, 0
    %v2600 = vsel %vm2552, %v2501, 0
    %2602 = vmatpush.msra.mxu0 %v2493
    %2603 = vmatpush.msra.mxu0 %v2492
    %2604 = vmatpush.msra.mxu0 %v2491
    %2605 = vmatpush.msra.mxu0 %v2490
    %2606 = vmatpush.msra.mxu0 %v2489
    %2607 = vmatpush.msra.mxu0 %v2488
    %2608 = vmatpush.msra.mxu0 %v2487
    %2609 = vmatpush.msra.mxu0 %v2486
    %2610 = vmatpush.msra.mxu0 %v2485
    %2611 = vmatpush.msra.mxu0 %v2484
    %2612 = vmatpush.msra.mxu0 %v2483
    %2613 = vmatpush.msra.mxu0 %v2482
    %2614 = vmatpush.msra.mxu0 %v2481
    %2615 = vmatpush.msra.mxu0 %v2480
    %2616 = vmatpush.msra.mxu0 %v2479
    %2617 = vmatpush.msra.mxu0 %v2478
    %2618 = vmatmul.f32.gmra.mxu0 %v2476
    %v2619 = vpop.f32.mrf.mxu0
    %v2620 = vadd.f32 %v2594, %v2619
    %2621 = vdwg.mxu0
    %2622 = vmatpush.msra.mxu0 0.0
    %2623 = vmatpush.msra.mxu0 0.0
    %2624 = vmatpush.msra.mxu0 0.0
    %2625 = vmatpush.msra.mxu0 0.0
    %2626 = vmatpush.msra.mxu0 0.0
    %2627 = vmatpush.msra.mxu0 0.0
    %2628 = vmatpush.msra.mxu0 0.0
    %2629 = vmatpush.msra.mxu0 0.0
    %2630 = vmatpush.msra.mxu0 %v2600
    %2631 = vmatpush.msra.mxu0 %v2500
    %2632 = vmatpush.msra.mxu0 %v2499
    %2633 = vmatpush.msra.mxu0 %v2498
    %2634 = vmatpush.msra.mxu0 %v2497
    %2635 = vmatpush.msra.mxu0 %v2496
    %2636 = vmatpush.msra.mxu0 %v2495
    %2637 = vmatpush.msra.mxu0 %v2494
    %2638 = vmatmul.f32.gmra.mxu0 %v2597
    %v2639 = vpop.f32.mrf.mxu0
    %v2640 = vadd.f32 %v2620, %v2639
    %2641 = vdwg.mxu0
    %s2642 = scalar_lea.vmem [#allocation2], 2
    %v2643 = vld [vmem:[%s2642] ss:$8 sm:$0x3]
    %s2644 = scalar_lea.vmem [#allocation2], 26
    %v2645 = vld [vmem:[%s2644] ss:$8 sm:$0x3]
    %v2647 = vperm.slane %v2643, 0
    %v2648 = vperm.slane %v2643, 1
    %v2652 = vperm.slane %v2645, 0
    %v2653 = vperm.slane %v2645, 1
    %2654 = vrot.lane.b32.xlu0 %v2652, 112
    %v2655 = vpop.permute.xlu0 %2654
    %2656 = vrot.lane.b32.xlu0 %v2653, 112
    %v2657 = vpop.permute.xlu0 %2656
    %v2658 = vsel %vm2471, %v2655, %v2657
    %v2661 = vsel %vm2475, %v2647, %v2658
    %v2662 = vsel %vm2475, %v2648, %v2657
    %s2663 = scalar_lea.vmem %s13, 384
    %v2664 = vld [vmem:[%s2663] sm:$0xff]
    %v2665 = vld [vmem:[%s2663 + $0x8] sm:$0xff]
    %v2666 = vld [vmem:[%s2663 + $0x10] sm:$0xff]
    %v2667 = vld [vmem:[%s2663 + $0x18] sm:$0xff]
    %v2668 = vld [vmem:[%s2663 + $0x20] sm:$0xff]
    %v2669 = vld [vmem:[%s2663 + $0x28] sm:$0xff]
    %v2670 = vld [vmem:[%s2663 + $0x30] sm:$0xff]
    %v2671 = vld [vmem:[%s2663 + $0x38] sm:$0xff]
    %v2672 = vld [vmem:[%s2663 + $0x40] sm:$0xff]
    %v2673 = vld [vmem:[%s2663 + $0x48] sm:$0xff]
    %v2674 = vld [vmem:[%s2663 + $0x50] sm:$0xff]
    %v2675 = vld [vmem:[%s2663 + $0x58] sm:$0xff]
    %v2676 = vld [vmem:[%s2663 + $0x60] sm:$0xff]
    %v2677 = vld [vmem:[%s2663 + $0x68] sm:$0xff]
    %v2678 = vld [vmem:[%s2663 + $0x70] sm:$0xff]
    %v2679 = vld [vmem:[%s2663 + $0x78] sm:$0xff]
    %v2680 = vld [vmem:[%s2663 + $0x80] sm:$0xff]
    %v2681 = vld [vmem:[%s2663 + $0x88] sm:$0xff]
    %v2682 = vld [vmem:[%s2663 + $0x90] sm:$0xff]
    %v2683 = vld [vmem:[%s2663 + $0x98] sm:$0xff]
    %v2684 = vld [vmem:[%s2663 + $0xa0] sm:$0xff]
    %v2685 = vld [vmem:[%s2663 + $0xa8] sm:$0xff]
    %v2686 = vld [vmem:[%s2663 + $0xb0] sm:$0xff]
    %v2687 = vld [vmem:[%s2663 + $0xb8] sm:$0x3f]
    %v2689 = vsel %vm2548, %v2662, 0
    %v2692 = vsel %vm2552, %v2687, 0
    %2694 = vmatpush.msra.mxu0 %v2679
    %2695 = vmatpush.msra.mxu0 %v2678
    %2696 = vmatpush.msra.mxu0 %v2677
    %2697 = vmatpush.msra.mxu0 %v2676
    %2698 = vmatpush.msra.mxu0 %v2675
    %2699 = vmatpush.msra.mxu0 %v2674
    %2700 = vmatpush.msra.mxu0 %v2673
    %2701 = vmatpush.msra.mxu0 %v2672
    %2702 = vmatpush.msra.mxu0 %v2671
    %2703 = vmatpush.msra.mxu0 %v2670
    %2704 = vmatpush.msra.mxu0 %v2669
    %2705 = vmatpush.msra.mxu0 %v2668
    %2706 = vmatpush.msra.mxu0 %v2667
    %2707 = vmatpush.msra.mxu0 %v2666
    %2708 = vmatpush.msra.mxu0 %v2665
    %2709 = vmatpush.msra.mxu0 %v2664
    %2710 = vmatmul.f32.gmra.mxu0 %v2661
    %v2711 = vpop.f32.mrf.mxu0
    %v2712 = vadd.f32 0.0, %v2711
    %2713 = vdwg.mxu0
    %2714 = vmatpush.msra.mxu0 0.0
    %2715 = vmatpush.msra.mxu0 0.0
    %2716 = vmatpush.msra.mxu0 0.0
    %2717 = vmatpush.msra.mxu0 0.0
    %2718 = vmatpush.msra.mxu0 0.0
    %2719 = vmatpush.msra.mxu0 0.0
    %2720 = vmatpush.msra.mxu0 0.0
    %2721 = vmatpush.msra.mxu0 0.0
    %2722 = vmatpush.msra.mxu0 %v2692
    %2723 = vmatpush.msra.mxu0 %v2686
    %2724 = vmatpush.msra.mxu0 %v2685
    %2725 = vmatpush.msra.mxu0 %v2684
    %2726 = vmatpush.msra.mxu0 %v2683
    %2727 = vmatpush.msra.mxu0 %v2682
    %2728 = vmatpush.msra.mxu0 %v2681
    %2729 = vmatpush.msra.mxu0 %v2680
    %2730 = vmatmul.f32.gmra.mxu0 %v2689
    %v2731 = vpop.f32.mrf.mxu0
    %v2732 = vadd.f32 %v2712, %v2731
    %2733 = vdwg.mxu0
    %v2734 = vadd.f32 %v2640, %v2732
    %s2735 = scalar_lea.vmem [#allocation2], 3
    %v2736 = vld [vmem:[%s2735] ss:$8 sm:$0x3]
    %s2737 = scalar_lea.vmem [#allocation2], 27
    %v2738 = vld [vmem:[%s2737] ss:$8 sm:$0x3]
    %v2740 = vperm.slane %v2736, 0
    %v2741 = vperm.slane %v2736, 1
    %v2745 = vperm.slane %v2738, 0
    %v2746 = vperm.slane %v2738, 1
    %2747 = vrot.lane.b32.xlu0 %v2745, 112
    %v2748 = vpop.permute.xlu0 %2747
    %2749 = vrot.lane.b32.xlu0 %v2746, 112
    %v2750 = vpop.permute.xlu0 %2749
    %v2751 = vsel %vm2471, %v2748, %v2750
    %v2754 = vsel %vm2475, %v2740, %v2751
    %v2755 = vsel %vm2475, %v2741, %v2750
    %s2756 = scalar_lea.vmem %s13, 576
    %v2757 = vld [vmem:[%s2756] sm:$0xff]
    %v2758 = vld [vmem:[%s2756 + $0x8] sm:$0xff]
    %v2759 = vld [vmem:[%s2756 + $0x10] sm:$0xff]
    %v2760 = vld [vmem:[%s2756 + $0x18] sm:$0xff]
    %v2761 = vld [vmem:[%s2756 + $0x20] sm:$0xff]
    %v2762 = vld [vmem:[%s2756 + $0x28] sm:$0xff]
    %v2763 = vld [vmem:[%s2756 + $0x30] sm:$0xff]
    %v2764 = vld [vmem:[%s2756 + $0x38] sm:$0xff]
    %v2765 = vld [vmem:[%s2756 + $0x40] sm:$0xff]
    %v2766 = vld [vmem:[%s2756 + $0x48] sm:$0xff]
    %v2767 = vld [vmem:[%s2756 + $0x50] sm:$0xff]
    %v2768 = vld [vmem:[%s2756 + $0x58] sm:$0xff]
    %v2769 = vld [vmem:[%s2756 + $0x60] sm:$0xff]
    %v2770 = vld [vmem:[%s2756 + $0x68] sm:$0xff]
    %v2771 = vld [vmem:[%s2756 + $0x70] sm:$0xff]
    %v2772 = vld [vmem:[%s2756 + $0x78] sm:$0xff]
    %v2773 = vld [vmem:[%s2756 + $0x80] sm:$0xff]
    %v2774 = vld [vmem:[%s2756 + $0x88] sm:$0xff]
    %v2775 = vld [vmem:[%s2756 + $0x90] sm:$0xff]
    %v2776 = vld [vmem:[%s2756 + $0x98] sm:$0xff]
    %v2777 = vld [vmem:[%s2756 + $0xa0] sm:$0xff]
    %v2778 = vld [vmem:[%s2756 + $0xa8] sm:$0xff]
    %v2779 = vld [vmem:[%s2756 + $0xb0] sm:$0xff]
    %v2780 = vld [vmem:[%s2756 + $0xb8] sm:$0x3f]
    %v2782 = vsel %vm2548, %v2755, 0
    %v2785 = vsel %vm2552, %v2780, 0
    %2787 = vmatpush.msra.mxu0 %v2772
    %2788 = vmatpush.msra.mxu0 %v2771
    %2789 = vmatpush.msra.mxu0 %v2770
    %2790 = vmatpush.msra.mxu0 %v2769
    %2791 = vmatpush.msra.mxu0 %v2768
    %2792 = vmatpush.msra.mxu0 %v2767
    %2793 = vmatpush.msra.mxu0 %v2766
    %2794 = vmatpush.msra.mxu0 %v2765
    %2795 = vmatpush.msra.mxu0 %v2764
    %2796 = vmatpush.msra.mxu0 %v2763
    %2797 = vmatpush.msra.mxu0 %v2762
    %2798 = vmatpush.msra.mxu0 %v2761
    %2799 = vmatpush.msra.mxu0 %v2760
    %2800 = vmatpush.msra.mxu0 %v2759
    %2801 = vmatpush.msra.mxu0 %v2758
    %2802 = vmatpush.msra.mxu0 %v2757
    %2803 = vmatmul.f32.gmra.mxu0 %v2754
    %v2804 = vpop.f32.mrf.mxu0
    %v2805 = vadd.f32 0.0, %v2804
    %2806 = vdwg.mxu0
    %2807 = vmatpush.msra.mxu0 0.0
    %2808 = vmatpush.msra.mxu0 0.0
    %2809 = vmatpush.msra.mxu0 0.0
    %2810 = vmatpush.msra.mxu0 0.0
    %2811 = vmatpush.msra.mxu0 0.0
    %2812 = vmatpush.msra.mxu0 0.0
    %2813 = vmatpush.msra.mxu0 0.0
    %2814 = vmatpush.msra.mxu0 0.0
    %2815 = vmatpush.msra.mxu0 %v2785
    %2816 = vmatpush.msra.mxu0 %v2779
    %2817 = vmatpush.msra.mxu0 %v2778
    %2818 = vmatpush.msra.mxu0 %v2777
    %2819 = vmatpush.msra.mxu0 %v2776
    %2820 = vmatpush.msra.mxu0 %v2775
    %2821 = vmatpush.msra.mxu0 %v2774
    %2822 = vmatpush.msra.mxu0 %v2773
    %2823 = vmatmul.f32.gmra.mxu0 %v2782
    %v2824 = vpop.f32.mrf.mxu0
    %v2825 = vadd.f32 %v2805, %v2824
    %2826 = vdwg.mxu0
    %v2827 = vadd.f32 %v2734, %v2825
    %s2828 = scalar_lea.vmem [#allocation2], 4
    %v2829 = vld [vmem:[%s2828] ss:$8 sm:$0x3]
    %s2830 = scalar_lea.vmem [#allocation2], 28
    %v2831 = vld [vmem:[%s2830] ss:$8 sm:$0x3]
    %v2833 = vperm.slane %v2829, 0
    %v2834 = vperm.slane %v2829, 1
    %v2838 = vperm.slane %v2831, 0
    %v2839 = vperm.slane %v2831, 1
    %2840 = vrot.lane.b32.xlu0 %v2838, 112
    %v2841 = vpop.permute.xlu0 %2840
    %2842 = vrot.lane.b32.xlu0 %v2839, 112
    %v2843 = vpop.permute.xlu0 %2842
    %v2844 = vsel %vm2471, %v2841, %v2843
    %v2847 = vsel %vm2475, %v2833, %v2844
    %v2848 = vsel %vm2475, %v2834, %v2843
    %s2849 = scalar_lea.vmem %s13, 768
    %v2850 = vld [vmem:[%s2849] sm:$0xff]
    %v2851 = vld [vmem:[%s2849 + $0x8] sm:$0xff]
    %v2852 = vld [vmem:[%s2849 + $0x10] sm:$0xff]
    %v2853 = vld [vmem:[%s2849 + $0x18] sm:$0xff]
    %v2854 = vld [vmem:[%s2849 + $0x20] sm:$0xff]
    %v2855 = vld [vmem:[%s2849 + $0x28] sm:$0xff]
    %v2856 = vld [vmem:[%s2849 + $0x30] sm:$0xff]
    %v2857 = vld [vmem:[%s2849 + $0x38] sm:$0xff]
    %v2858 = vld [vmem:[%s2849 + $0x40] sm:$0xff]
    %v2859 = vld [vmem:[%s2849 + $0x48] sm:$0xff]
    %v2860 = vld [vmem:[%s2849 + $0x50] sm:$0xff]
    %v2861 = vld [vmem:[%s2849 + $0x58] sm:$0xff]
    %v2862 = vld [vmem:[%s2849 + $0x60] sm:$0xff]
    %v2863 = vld [vmem:[%s2849 + $0x68] sm:$0xff]
    %v2864 = vld [vmem:[%s2849 + $0x70] sm:$0xff]
    %v2865 = vld [vmem:[%s2849 + $0x78] sm:$0xff]
    %v2866 = vld [vmem:[%s2849 + $0x80] sm:$0xff]
    %v2867 = vld [vmem:[%s2849 + $0x88] sm:$0xff]
    %v2868 = vld [vmem:[%s2849 + $0x90] sm:$0xff]
    %v2869 = vld [vmem:[%s2849 + $0x98] sm:$0xff]
    %v2870 = vld [vmem:[%s2849 + $0xa0] sm:$0xff]
    %v2871 = vld [vmem:[%s2849 + $0xa8] sm:$0xff]
    %v2872 = vld [vmem:[%s2849 + $0xb0] sm:$0xff]
    %v2873 = vld [vmem:[%s2849 + $0xb8] sm:$0x3f]
    %v2875 = vsel %vm2548, %v2848, 0
    %v2878 = vsel %vm2552, %v2873, 0
    %2880 = vmatpush.msra.mxu0 %v2865
    %2881 = vmatpush.msra.mxu0 %v2864
    %2882 = vmatpush.msra.mxu0 %v2863
    %2883 = vmatpush.msra.mxu0 %v2862
    %2884 = vmatpush.msra.mxu0 %v2861
    %2885 = vmatpush.msra.mxu0 %v2860
    %2886 = vmatpush.msra.mxu0 %v2859
    %2887 = vmatpush.msra.mxu0 %v2858
    %2888 = vmatpush.msra.mxu0 %v2857
    %2889 = vmatpush.msra.mxu0 %v2856
    %2890 = vmatpush.msra.mxu0 %v2855
    %2891 = vmatpush.msra.mxu0 %v2854
    %2892 = vmatpush.msra.mxu0 %v2853
    %2893 = vmatpush.msra.mxu0 %v2852
    %2894 = vmatpush.msra.mxu0 %v2851
    %2895 = vmatpush.msra.mxu0 %v2850
    %2896 = vmatmul.f32.gmra.mxu0 %v2847
    %v2897 = vpop.f32.mrf.mxu0
    %v2898 = vadd.f32 0.0, %v2897
    %2899 = vdwg.mxu0
    %2900 = vmatpush.msra.mxu0 0.0
    %2901 = vmatpush.msra.mxu0 0.0
    %2902 = vmatpush.msra.mxu0 0.0
    %2903 = vmatpush.msra.mxu0 0.0
    %2904 = vmatpush.msra.mxu0 0.0
    %2905 = vmatpush.msra.mxu0 0.0
    %2906 = vmatpush.msra.mxu0 0.0
    %2907 = vmatpush.msra.mxu0 0.0
    %2908 = vmatpush.msra.mxu0 %v2878
    %2909 = vmatpush.msra.mxu0 %v2872
    %2910 = vmatpush.msra.mxu0 %v2871
    %2911 = vmatpush.msra.mxu0 %v2870
    %2912 = vmatpush.msra.mxu0 %v2869
    %2913 = vmatpush.msra.mxu0 %v2868
    %2914 = vmatpush.msra.mxu0 %v2867
    %2915 = vmatpush.msra.mxu0 %v2866
    %2916 = vmatmul.f32.gmra.mxu0 %v2875
    %v2917 = vpop.f32.mrf.mxu0
    %v2918 = vadd.f32 %v2898, %v2917
    %2919 = vdwg.mxu0
    %v2920 = vadd.f32 %v2827, %v2918
    %s2921 = scalar_lea.vmem [#allocation2], 5
    %v2922 = vld [vmem:[%s2921] ss:$8 sm:$0x3]
    %s2923 = scalar_lea.vmem [#allocation2], 29
    %v2924 = vld [vmem:[%s2923] ss:$8 sm:$0x3]
    %v2926 = vperm.slane %v2922, 0
    %v2927 = vperm.slane %v2922, 1
    %v2931 = vperm.slane %v2924, 0
    %v2932 = vperm.slane %v2924, 1
    %2933 = vrot.lane.b32.xlu0 %v2931, 112
    %v2934 = vpop.permute.xlu0 %2933
    %2935 = vrot.lane.b32.xlu0 %v2932, 112
    %v2936 = vpop.permute.xlu0 %2935
    %v2937 = vsel %vm2471, %v2934, %v2936
    %v2940 = vsel %vm2475, %v2926, %v2937
    %v2941 = vsel %vm2475, %v2927, %v2936
    %s2942 = scalar_lea.vmem %s13, 960
    %v2943 = vld [vmem:[%s2942] sm:$0xff]
    %v2944 = vld [vmem:[%s2942 + $0x8] sm:$0xff]
    %v2945 = vld [vmem:[%s2942 + $0x10] sm:$0xff]
    %v2946 = vld [vmem:[%s2942 + $0x18] sm:$0xff]
    %v2947 = vld [vmem:[%s2942 + $0x20] sm:$0xff]
    %v2948 = vld [vmem:[%s2942 + $0x28] sm:$0xff]
    %v2949 = vld [vmem:[%s2942 + $0x30] sm:$0xff]
    %v2950 = vld [vmem:[%s2942 + $0x38] sm:$0xff]
    %v2951 = vld [vmem:[%s2942 + $0x40] sm:$0xff]
    %v2952 = vld [vmem:[%s2942 + $0x48] sm:$0xff]
    %v2953 = vld [vmem:[%s2942 + $0x50] sm:$0xff]
    %v2954 = vld [vmem:[%s2942 + $0x58] sm:$0xff]
    %v2955 = vld [vmem:[%s2942 + $0x60] sm:$0xff]
    %v2956 = vld [vmem:[%s2942 + $0x68] sm:$0xff]
    %v2957 = vld [vmem:[%s2942 + $0x70] sm:$0xff]
    %v2958 = vld [vmem:[%s2942 + $0x78] sm:$0xff]
    %v2959 = vld [vmem:[%s2942 + $0x80] sm:$0xff]
    %v2960 = vld [vmem:[%s2942 + $0x88] sm:$0xff]
    %v2961 = vld [vmem:[%s2942 + $0x90] sm:$0xff]
    %v2962 = vld [vmem:[%s2942 + $0x98] sm:$0xff]
    %v2963 = vld [vmem:[%s2942 + $0xa0] sm:$0xff]
    %v2964 = vld [vmem:[%s2942 + $0xa8] sm:$0xff]
    %v2965 = vld [vmem:[%s2942 + $0xb0] sm:$0xff]
    %v2966 = vld [vmem:[%s2942 + $0xb8] sm:$0x3f]
    %v2968 = vsel %vm2548, %v2941, 0
    %v2971 = vsel %vm2552, %v2966, 0
    %2973 = vmatpush.msra.mxu0 %v2958
    %2974 = vmatpush.msra.mxu0 %v2957
    %2975 = vmatpush.msra.mxu0 %v2956
    %2976 = vmatpush.msra.mxu0 %v2955
    %2977 = vmatpush.msra.mxu0 %v2954
    %2978 = vmatpush.msra.mxu0 %v2953
    %2979 = vmatpush.msra.mxu0 %v2952
    %2980 = vmatpush.msra.mxu0 %v2951
    %2981 = vmatpush.msra.mxu0 %v2950
    %2982 = vmatpush.msra.mxu0 %v2949
    %2983 = vmatpush.msra.mxu0 %v2948
    %2984 = vmatpush.msra.mxu0 %v2947
    %2985 = vmatpush.msra.mxu0 %v2946
    %2986 = vmatpush.msra.mxu0 %v2945
    %2987 = vmatpush.msra.mxu0 %v2944
    %2988 = vmatpush.msra.mxu0 %v2943
    %2989 = vmatmul.f32.gmra.mxu0 %v2940
    %v2990 = vpop.f32.mrf.mxu0
    %v2991 = vadd.f32 0.0, %v2990
    %2992 = vdwg.mxu0
    %2993 = vmatpush.msra.mxu0 0.0
    %2994 = vmatpush.msra.mxu0 0.0
    %2995 = vmatpush.msra.mxu0 0.0
    %2996 = vmatpush.msra.mxu0 0.0
    %2997 = vmatpush.msra.mxu0 0.0
    %2998 = vmatpush.msra.mxu0 0.0
    %2999 = vmatpush.msra.mxu0 0.0
    %3000 = vmatpush.msra.mxu0 0.0
    %3001 = vmatpush.msra.mxu0 %v2971
    %3002 = vmatpush.msra.mxu0 %v2965
    %3003 = vmatpush.msra.mxu0 %v2964
    %3004 = vmatpush.msra.mxu0 %v2963
    %3005 = vmatpush.msra.mxu0 %v2962
    %3006 = vmatpush.msra.mxu0 %v2961
    %3007 = vmatpush.msra.mxu0 %v2960
    %3008 = vmatpush.msra.mxu0 %v2959
    %3009 = vmatmul.f32.gmra.mxu0 %v2968
    %v3010 = vpop.f32.mrf.mxu0
    %v3011 = vadd.f32 %v2991, %v3010
    %3012 = vdwg.mxu0
    %v3013 = vadd.f32 %v2920, %v3011
    %s3014 = scalar_lea.vmem [#allocation2], 6
    %v3015 = vld [vmem:[%s3014] ss:$8 sm:$0x3]
    %s3016 = scalar_lea.vmem [#allocation2], 30
    %v3017 = vld [vmem:[%s3016] ss:$8 sm:$0x3]
    %v3019 = vperm.slane %v3015, 0
    %v3020 = vperm.slane %v3015, 1
    %v3024 = vperm.slane %v3017, 0
    %v3025 = vperm.slane %v3017, 1
    %3026 = vrot.lane.b32.xlu0 %v3024, 112
    %v3027 = vpop.permute.xlu0 %3026
    %3028 = vrot.lane.b32.xlu0 %v3025, 112
    %v3029 = vpop.permute.xlu0 %3028
    %v3030 = vsel %vm2471, %v3027, %v3029
    %v3033 = vsel %vm2475, %v3019, %v3030
    %v3034 = vsel %vm2475, %v3020, %v3029
    %s3035 = scalar_lea.vmem %s13, 1152
    %v3036 = vld [vmem:[%s3035] sm:$0xff]
    %v3037 = vld [vmem:[%s3035 + $0x8] sm:$0xff]
    %v3038 = vld [vmem:[%s3035 + $0x10] sm:$0xff]
    %v3039 = vld [vmem:[%s3035 + $0x18] sm:$0xff]
    %v3040 = vld [vmem:[%s3035 + $0x20] sm:$0xff]
    %v3041 = vld [vmem:[%s3035 + $0x28] sm:$0xff]
    %v3042 = vld [vmem:[%s3035 + $0x30] sm:$0xff]
    %v3043 = vld [vmem:[%s3035 + $0x38] sm:$0xff]
    %v3044 = vld [vmem:[%s3035 + $0x40] sm:$0xff]
    %v3045 = vld [vmem:[%s3035 + $0x48] sm:$0xff]
    %v3046 = vld [vmem:[%s3035 + $0x50] sm:$0xff]
    %v3047 = vld [vmem:[%s3035 + $0x58] sm:$0xff]
    %v3048 = vld [vmem:[%s3035 + $0x60] sm:$0xff]
    %v3049 = vld [vmem:[%s3035 + $0x68] sm:$0xff]
    %v3050 = vld [vmem:[%s3035 + $0x70] sm:$0xff]
    %v3051 = vld [vmem:[%s3035 + $0x78] sm:$0xff]
    %v3052 = vld [vmem:[%s3035 + $0x80] sm:$0xff]
    %v3053 = vld [vmem:[%s3035 + $0x88] sm:$0xff]
    %v3054 = vld [vmem:[%s3035 + $0x90] sm:$0xff]
    %v3055 = vld [vmem:[%s3035 + $0x98] sm:$0xff]
    %v3056 = vld [vmem:[%s3035 + $0xa0] sm:$0xff]
    %v3057 = vld [vmem:[%s3035 + $0xa8] sm:$0xff]
    %v3058 = vld [vmem:[%s3035 + $0xb0] sm:$0xff]
    %v3059 = vld [vmem:[%s3035 + $0xb8] sm:$0x3f]
    %v3061 = vsel %vm2548, %v3034, 0
    %v3064 = vsel %vm2552, %v3059, 0
    %3066 = vmatpush.msra.mxu0 %v3051
    %3067 = vmatpush.msra.mxu0 %v3050
    %3068 = vmatpush.msra.mxu0 %v3049
    %3069 = vmatpush.msra.mxu0 %v3048
    %3070 = vmatpush.msra.mxu0 %v3047
    %3071 = vmatpush.msra.mxu0 %v3046
    %3072 = vmatpush.msra.mxu0 %v3045
    %3073 = vmatpush.msra.mxu0 %v3044
    %3074 = vmatpush.msra.mxu0 %v3043
    %3075 = vmatpush.msra.mxu0 %v3042
    %3076 = vmatpush.msra.mxu0 %v3041
    %3077 = vmatpush.msra.mxu0 %v3040
    %3078 = vmatpush.msra.mxu0 %v3039
    %3079 = vmatpush.msra.mxu0 %v3038
    %3080 = vmatpush.msra.mxu0 %v3037
    %3081 = vmatpush.msra.mxu0 %v3036
    %3082 = vmatmul.f32.gmra.mxu0 %v3033
    %v3083 = vpop.f32.mrf.mxu0
    %v3084 = vadd.f32 0.0, %v3083
    %3085 = vdwg.mxu0
    %3086 = vmatpush.msra.mxu0 0.0
    %3087 = vmatpush.msra.mxu0 0.0
    %3088 = vmatpush.msra.mxu0 0.0
    %3089 = vmatpush.msra.mxu0 0.0
    %3090 = vmatpush.msra.mxu0 0.0
    %3091 = vmatpush.msra.mxu0 0.0
    %3092 = vmatpush.msra.mxu0 0.0
    %3093 = vmatpush.msra.mxu0 0.0
    %3094 = vmatpush.msra.mxu0 %v3064
    %3095 = vmatpush.msra.mxu0 %v3058
    %3096 = vmatpush.msra.mxu0 %v3057
    %3097 = vmatpush.msra.mxu0 %v3056
    %3098 = vmatpush.msra.mxu0 %v3055
    %3099 = vmatpush.msra.mxu0 %v3054
    %3100 = vmatpush.msra.mxu0 %v3053
    %3101 = vmatpush.msra.mxu0 %v3052
    %3102 = vmatmul.f32.gmra.mxu0 %v3061
    %v3103 = vpop.f32.mrf.mxu0
    %v3104 = vadd.f32 %v3084, %v3103
    %3105 = vdwg.mxu0
    %v3106 = vadd.f32 %v3013, %v3104
    %s3107 = scalar_lea.vmem [#allocation2], 7
    %v3108 = vld [vmem:[%s3107] ss:$8 sm:$0x3]
    %s3109 = scalar_lea.vmem [#allocation2], 31
    %v3110 = vld [vmem:[%s3109] ss:$8 sm:$0x3]
    %v3112 = vperm.slane %v3108, 0
    %v3113 = vperm.slane %v3108, 1
    %v3117 = vperm.slane %v3110, 0
    %v3118 = vperm.slane %v3110, 1
    %3119 = vrot.lane.b32.xlu0 %v3117, 112
    %v3120 = vpop.permute.xlu0 %3119
    %3121 = vrot.lane.b32.xlu0 %v3118, 112
    %v3122 = vpop.permute.xlu0 %3121
    %v3123 = vsel %vm2471, %v3120, %v3122
    %v3126 = vsel %vm2475, %v3112, %v3123
    %v3127 = vsel %vm2475, %v3113, %v3122
    %s3128 = scalar_lea.vmem %s13, 1344
    %v3129 = vld [vmem:[%s3128] sm:$0xff]
    %v3130 = vld [vmem:[%s3128 + $0x8] sm:$0xff]
    %v3131 = vld [vmem:[%s3128 + $0x10] sm:$0xff]
    %v3132 = vld [vmem:[%s3128 + $0x18] sm:$0xff]
    %v3133 = vld [vmem:[%s3128 + $0x20] sm:$0xff]
    %v3134 = vld [vmem:[%s3128 + $0x28] sm:$0xff]
    %v3135 = vld [vmem:[%s3128 + $0x30] sm:$0xff]
    %v3136 = vld [vmem:[%s3128 + $0x38] sm:$0xff]
    %v3137 = vld [vmem:[%s3128 + $0x40] sm:$0xff]
    %v3138 = vld [vmem:[%s3128 + $0x48] sm:$0xff]
    %v3139 = vld [vmem:[%s3128 + $0x50] sm:$0xff]
    %v3140 = vld [vmem:[%s3128 + $0x58] sm:$0xff]
    %v3141 = vld [vmem:[%s3128 + $0x60] sm:$0xff]
    %v3142 = vld [vmem:[%s3128 + $0x68] sm:$0xff]
    %v3143 = vld [vmem:[%s3128 + $0x70] sm:$0xff]
    %v3144 = vld [vmem:[%s3128 + $0x78] sm:$0xff]
    %v3145 = vld [vmem:[%s3128 + $0x80] sm:$0xff]
    %v3146 = vld [vmem:[%s3128 + $0x88] sm:$0xff]
    %v3147 = vld [vmem:[%s3128 + $0x90] sm:$0xff]
    %v3148 = vld [vmem:[%s3128 + $0x98] sm:$0xff]
    %v3149 = vld [vmem:[%s3128 + $0xa0] sm:$0xff]
    %v3150 = vld [vmem:[%s3128 + $0xa8] sm:$0xff]
    %v3151 = vld [vmem:[%s3128 + $0xb0] sm:$0xff]
    %v3152 = vld [vmem:[%s3128 + $0xb8] sm:$0x3f]
    %v3154 = vsel %vm2548, %v3127, 0
    %v3157 = vsel %vm2552, %v3152, 0
    %3159 = vmatpush.msra.mxu0 %v3144
    %3160 = vmatpush.msra.mxu0 %v3143
    %3161 = vmatpush.msra.mxu0 %v3142
    %3162 = vmatpush.msra.mxu0 %v3141
    %3163 = vmatpush.msra.mxu0 %v3140
    %3164 = vmatpush.msra.mxu0 %v3139
    %3165 = vmatpush.msra.mxu0 %v3138
    %3166 = vmatpush.msra.mxu0 %v3137
    %3167 = vmatpush.msra.mxu0 %v3136
    %3168 = vmatpush.msra.mxu0 %v3135
    %3169 = vmatpush.msra.mxu0 %v3134
    %3170 = vmatpush.msra.mxu0 %v3133
    %3171 = vmatpush.msra.mxu0 %v3132
    %3172 = vmatpush.msra.mxu0 %v3131
    %3173 = vmatpush.msra.mxu0 %v3130
    %3174 = vmatpush.msra.mxu0 %v3129
    %3175 = vmatmul.f32.gmra.mxu0 %v3126
    %v3176 = vpop.f32.mrf.mxu0
    %v3177 = vadd.f32 0.0, %v3176
    %3178 = vdwg.mxu0
    %3179 = vmatpush.msra.mxu0 0.0
    %3180 = vmatpush.msra.mxu0 0.0
    %3181 = vmatpush.msra.mxu0 0.0
    %3182 = vmatpush.msra.mxu0 0.0
    %3183 = vmatpush.msra.mxu0 0.0
    %3184 = vmatpush.msra.mxu0 0.0
    %3185 = vmatpush.msra.mxu0 0.0
    %3186 = vmatpush.msra.mxu0 0.0
    %3187 = vmatpush.msra.mxu0 %v3157
    %3188 = vmatpush.msra.mxu0 %v3151
    %3189 = vmatpush.msra.mxu0 %v3150
    %3190 = vmatpush.msra.mxu0 %v3149
    %3191 = vmatpush.msra.mxu0 %v3148
    %3192 = vmatpush.msra.mxu0 %v3147
    %3193 = vmatpush.msra.mxu0 %v3146
    %3194 = vmatpush.msra.mxu0 %v3145
    %3195 = vmatmul.f32.gmra.mxu0 %v3154
    %v3196 = vpop.f32.mrf.mxu0
    %v3197 = vadd.f32 %v3177, %v3196
    %3198 = vdwg.mxu0
    %v3199 = vadd.f32 %v3106, %v3197
    %v3200 = vmax.f32 %v3199, 0.0
    %v3201 = vand.u32 2147483647, %v3199
    %v3202 = vsub.f32 0.0, %v3201
    %v3203 = vmul.f32 %v3202, 1.442695
    %v3204 = vpow.pop %v3203
    %v3205 = vadd.f32 %v3204, 1.0
    %v3206 = vlog2.pop %v3205
    %v3207 = vmul.f32 %v3206, 0.6931472
    %v3208 = vadd.f32 %v3200, %v3207
    %vm3209 = vcmask 33792
    %3210 = vst.msk [vmem:[#allocation3] sm:$0x3] %vm3209, %v3208
    // Predicated region
    $region58: #{_lambda_.1} parent=1 // pred_check
      _
    $region59: #{_lambda_.1} parent=1 // pred_check_branch
      %3212 = sbr.rel (0) target = $region61
    $region60: #{_lambda_.1} parent=1 // pred_region
      %3214 = vsyncadd [#allocation4], 0
      %s3216 = sshll.u32 [#allocation3], 4
      %s3217 = int_to_ptr.vmem [resolvable:$true] %s3216
      %s3218 = sshll.u32 %s14, 4
      %s3219 = int_to_ptr.hbm [resolvable:$true] %s3218
      %3221 = dma.vmem_to_hbm [thread:$0]  %s3217, 32, %s3219, [#allocation4]
    $region61: #{_lambda_.1} parent=1 // pred_fallthru
      _
    // Predicated region
    $region62: #{_lambda_.1} parent=1 // pred_check
      _
    $region63: #{_lambda_.1} parent=1 // pred_check_branch
      %3223 = sbr.rel (0) target = $region65
    $region64: #{_lambda_.1} parent=1 // pred_region
      _
    $region65: #{_lambda_.1} parent=1 // pred_fallthru
      _
    // Predicated region
    $region66: #{_lambda_.1} parent=1 // pred_check
      _
    $region67: #{_lambda_.1} parent=1 // pred_check_branch
      %3225 = sbr.rel (0) target = $region69
    $region68: #{_lambda_.1} parent=1 // pred_region
      %3227 = dma.done [#allocation4], 32
    $region69: #{_lambda_.1} parent=1 // pred_fallthru
      _
    // Predicated region
    $region70: #{_lambda_.1} parent=1 // pred_check
      _
    $region71: #{_lambda_.1} parent=1 // pred_check_branch
      %3229 = sbr.rel (0) target = $region73
    $region72: #{_lambda_.1} parent=1 // pred_region
      _
    $region73: #{_lambda_.1} parent=1 // pred_fallthru
      _
    %3230 = vsyncpa [#allocation4], 1

</llo_original>
